<compile_context>
chip_gen: v7x
topology: tpu7x:2x2x1
jax: 0.10.0
libtpu: 0.0.40
codegen_flags: <defaults>
</compile_context>

<pallas_src>
import functools

import jax
import jax.numpy as jnp
from jax.experimental import pallas as pl
from jax.experimental.pallas import tpu as pltpu


def _round_up(n, m):
    return ((n + m - 1) // m) * m


def _pad_axis_to(a, axis, target):
    size = a.shape[axis]
    if size == target:
        return a
    widths = [(0, 0)] * a.ndim
    widths[axis] = (0, target - size)
    return jnp.pad(a, widths)


# ------------------------------ Pallas kernel --------------------------------

def _conv_bn_act_kernel(x_ref, w_ref, b_ref, *rest, taps, ho, wo, out_halo,
                        apply_relu, has_ds, ds_tap_index, has_residual):
    """One grid step: full output plane (ho*wo rows) x one channel tile.

    x_ref:   (1, Rq, Wq, Ci)   phase-decomposed, spatially padded input (bf16)
    w_ref:   (KT*Ci, tn)       packed per-tap weights, BN scale folded (bf16)
    b_ref:   (1, tn)           folded BN bias (f32)
    dsw_ref: (Ci, tn)          optional fused 1x1-downsample weight (bf16)
    dsb_ref: (1, tn)           optional downsample BN bias (f32)
    res_ref: (1, ho*wo, tn)    optional residual (bf16)
    o_ref:   (1, ho*wo, tn)              if out_halo == 0
             (1, ho+2h, wo+2h, tn)       if out_halo  > 0 (zero halo written)
    dso_ref: (1, ho*wo, tn)    optional downsample output (bf16)
    """
    idx = 0
    if has_ds:
        dsw_ref = rest[idx]; idx += 1
        dsb_ref = rest[idx]; idx += 1
    if has_residual:
        res_ref = rest[idx]; idx += 1
    o_ref = rest[idx]; idx += 1
    if has_ds:
        dso_ref = rest[idx]; idx += 1

    ci = x_ref.shape[-1]
    tn = o_ref.shape[-1]
    kt = len(taps)
    m = ho * wo

    # Pack every tap into the MXU contraction dim: lane-aligned channel concat
    # (ci is a multiple of 128) + ONE flatten + ONE big-K matmul (f32 acc).
    patches = [x_ref[0, ry:ry + ho, rx:rx + wo, :] for (ry, rx) in taps]
    patch = jnp.concatenate(patches, axis=-1)            # (ho, wo, KT*Ci)
    patch = patch.reshape(m, kt * ci)                    # flatten once per step

    acc = jnp.dot(patch, w_ref[...], preferred_element_type=jnp.float32)
    acc = acc + b_ref[...]                               # (1, tn) broadcast
    if has_residual:
        acc = acc + res_ref[0].astype(jnp.float32)
    if apply_relu:
        acc = jnp.maximum(acc, 0.0)
    out = acc.astype(o_ref.dtype)                        # (m, tn)

    if out_halo == 0:
        o_ref[0] = out                                   # lane-dense store
    else:
        hp = out_halo
        hq, wq = ho + 2 * hp, wo + 2 * hp
        zrow = jnp.zeros((hp, wq, tn), o_ref.dtype)
        zcol = jnp.zeros((ho, hp, tn), o_ref.dtype)
        o_ref[0, 0:hp, :, :] = zrow                      # zero halo (top)
        o_ref[0, hp + ho:hq, :, :] = zrow                # zero halo (bottom)
        o_ref[0, hp:hp + ho, 0:hp, :] = zcol             # zero halo (left)
        o_ref[0, hp:hp + ho, hp + wo:wq, :] = zcol       # zero halo (right)
        o_ref[0, hp:hp + ho, hp:hp + wo, :] = out.reshape(ho, wo, tn)

    if has_ds:
        # Fused 1x1 downsample: reuse the already-resident center-tap columns.
        c0 = ds_tap_index * ci
        center = patch[:, c0:c0 + ci]                    # (m, Ci)
        ds = jnp.dot(center, dsw_ref[...], preferred_element_type=jnp.float32)
        ds = ds + dsb_ref[...]
        dso_ref[0] = ds.astype(dso_ref.dtype)


def conv_bn_act(xph, taps, w_packed, bias, ho, wo, *, out_halo=0, relu=True,
                residual=None, downsample=None, out_dtype=jnp.bfloat16):
    """out = act(concat_taps(x) @ W_packed + bias (+ residual));
    optional fused 1x1-downsample second output; optional zero output halo."""
    n, rq, wq, ci = xph.shape
    kt = len(taps)
    k_packed, cp = w_packed.shape
    assert k_packed == kt * ci and cp % 128 == 0 and ci % 128 == 0
    m = ho * wo

    tn = 256 if cp % 256 == 0 else 128          # lane-dense channel tile
    n_ct = cp // tn
    grid = (n_ct, n)    # channel-tile axis OUTERMOST -> weight block resident

    in_specs = [
        pl.BlockSpec((1, rq, wq, ci), lambda j, i: (i, 0, 0, 0)),
        pl.BlockSpec((k_packed, tn), lambda j, i: (0, j)),
        pl.BlockSpec((1, tn), lambda j, i: (0, j)),
    ]
    args = [xph, w_packed, bias]

    has_ds = downsample is not None
    if has_ds:
        dsw, dsb = downsample
        assert dsw.shape == (ci, cp)
        in_specs += [pl.BlockSpec((ci, tn), lambda j, i: (0, j)),
                     pl.BlockSpec((1, tn), lambda j, i: (0, j))]
        args += [dsw, dsb]

    has_res = residual is not None
    if has_res:
        assert residual.shape == (n, m, cp)
        in_specs.append(pl.BlockSpec((1, m, tn), lambda j, i: (i, 0, j)))
        args.append(residual)

    if out_halo:
        hq, wq_o = ho + 2 * out_halo, wo + 2 * out_halo
        out_shapes = [jax.ShapeDtypeStruct((n, hq, wq_o, cp), out_dtype)]
        out_specs = [pl.BlockSpec((1, hq, wq_o, tn), lambda j, i: (i, 0, 0, j))]
    else:
        out_shapes = [jax.ShapeDtypeStruct((n, m, cp), out_dtype)]
        out_specs = [pl.BlockSpec((1, m, tn), lambda j, i: (i, 0, j))]
    if has_ds:
        out_shapes.append(jax.ShapeDtypeStruct((n, m, cp), jnp.bfloat16))
        out_specs.append(pl.BlockSpec((1, m, tn), lambda j, i: (i, 0, j)))

    kernel = functools.partial(
        _conv_bn_act_kernel, taps=tuple(taps), ho=ho, wo=wo, out_halo=out_halo,
        apply_relu=relu, has_ds=has_ds,
        ds_tap_index=kt // 2 if has_ds else 0, has_residual=has_res)

    # VMEM budget: double-buffered blocks + in-kernel temporaries, with a
    # margin, capped to leave headroom on the running chip's physical VMEM.
    ob = jnp.dtype(out_dtype).itemsize
    blk = rq * wq * ci * 2 + k_packed * tn * 2 + 8 * 128 * 4
    if has_res:
        blk += m * tn * 2
    if has_ds:
        blk += ci * tn * 2 + 8 * 128 * 4 + m * tn * 2
    blk += (hq * wq_o * tn * ob) if out_halo else (m * tn * ob)
    scratch = m * k_packed * 2 + m * tn * 4 + m * tn * 2
    if has_ds:
        scratch += m * tn * 4
    need = 2 * blk + scratch
    phys = 128 * 1024 * 1024
    try:
        info = pltpu.get_tpu_info()
        phys = int(getattr(info, "vmem_capacity_bytes", phys) or phys)
    except Exception:
        pass
    vmem_limit = int(min(max(3 * need, 32 * 1024 * 1024), phys * 3 // 4))

    outs = pl.pallas_call(
        kernel,
        out_shape=tuple(out_shapes),
        grid=grid,
        in_specs=in_specs,
        out_specs=tuple(out_specs),
        compiler_params=pltpu.CompilerParams(
            dimension_semantics=("parallel", "parallel"),
            vmem_limit_bytes=vmem_limit),
    )(*args)
    if not isinstance(outs, (tuple, list)):
        outs = (outs,)
    return outs[0], (outs[1] if has_ds else None)


# -------------------------------- JAX glue -----------------------------------

def _phase_decompose(x_nhwc, kh, kw, stride, padding):
    """Rearrange a spatially padded NHWC tensor so every conv tap (ky,kx) is a
    contiguous (Ho, Wo) window at a static (row, col) offset (size-preserving;
    no im2col blow-up).  Returns (xph, taps, (Ho, Wo))."""
    N, H, W, C = x_nhwc.shape
    s = stride
    Ho = (H + 2 * padding - kh) // s + 1
    Wo = (W + 2 * padding - kw) // s + 1
    Hq = Ho + (kh - 1) // s
    Wq = Wo + (kw - 1) // s
    pad_h = Hq * s - H - padding
    pad_w = Wq * s - W - padding
    assert pad_h >= 0 and pad_w >= 0
    xp = jnp.pad(x_nhwc, ((0, 0), (padding, pad_h), (padding, pad_w), (0, 0)))
    phases = sorted({(ky % s, kx % s) for ky in range(kh) for kx in range(kw)})
    pidx = {ph: i for i, ph in enumerate(phases)}
    xph = jnp.concatenate([xp[:, py::s, px::s, :] for (py, px) in phases],
                          axis=1)                         # (N, T*Hq, Wq, C)
    taps = tuple((pidx[(ky % s, kx % s)] * Hq + ky // s, kx // s)
                 for ky in range(kh) for kx in range(kw))
    return xph, taps, (Ho, Wo)


def _prep_conv_bn(w_oihw, gamma, beta, mean, var, *, cin_pad, cout_pad,
                  eps=1e-5):
    """Fold eval-mode BN scale into the conv weight and pack it as a single
    (KH*KW*Cin_pad, Cout_pad) bf16 matrix (tap-major, channel-minor)."""
    cout, cin, kh, kw = w_oihw.shape
    scale = gamma / jnp.sqrt(var + eps)                   # (Cout,)
    bias = beta - mean * scale                            # (Cout,)
    w = jnp.transpose(w_oihw, (2, 3, 1, 0)) * scale       # (KH, KW, Cin, Cout)
    w = w.reshape(kh * kw, cin, cout)
    w = _pad_axis_to(w, 1, cin_pad)
    w = _pad_axis_to(w, 2, cout_pad)
    w = w.reshape(kh * kw * cin_pad, cout_pad)
    bias = _pad_axis_to(bias.reshape(1, -1), 1, cout_pad)
    return w.astype(jnp.bfloat16), bias.astype(jnp.float32)


def init_basic_block_params(key, in_channels, out_channels, stride):
    ks = jax.random.split(key, 12)

    def n(k, shape, s=0.1):
        return s * jax.random.normal(k, shape, jnp.float32)

    p = {
        'conv1_w': n(ks[0], (out_channels, in_channels, 3, 3)),
        'bn1_gamma': 1.0 + n(ks[1], (out_channels,)),
        'bn1_beta': n(ks[2], (out_channels,)),
        'bn1_mean': n(ks[3], (out_channels,)),
        'bn1_var': 0.5 + jnp.abs(n(ks[4], (out_channels,), 0.5)),
        'conv2_w': n(ks[5], (out_channels, out_channels, 3, 3)),
        'bn2_gamma': 1.0 + n(ks[6], (out_channels,)),
        'bn2_beta': n(ks[7], (out_channels,)),
        'bn2_mean': n(ks[8], (out_channels,)),
        'bn2_var': 0.5 + jnp.abs(n(ks[9], (out_channels,), 0.5)),
    }
    if stride != 1 or in_channels != out_channels:
        kd = jax.random.split(ks[11], 4)
        p['ds_w'] = n(ks[10], (out_channels, in_channels, 1, 1))
        p['ds_gamma'] = 1.0 + n(kd[0], (out_channels,))
        p['ds_beta'] = n(kd[1], (out_channels,))
        p['ds_mean'] = n(kd[2], (out_channels,))
        p['ds_var'] = 0.5 + jnp.abs(n(kd[3], (out_channels,), 0.5))
    return p


def basic_block_forward(x_nchw, params, stride):
    # TODO(synk): BatchNorm uses eval-mode running statistics folded into the
    # weights/bias; PyTorch train-mode batch statistics are not reproduced.
    N, Cin, H, W = x_nchw.shape
    Cout = params['conv1_w'].shape[0]
    Cp = _round_up(Cout, 128)       # lane-dense output channels
    Cinp = _round_up(Cin, 128)      # lane-dense input channels / tap segments
    has_ds = 'ds_w' in params

    # NHWC bf16, channel-padded so every in-kernel tap segment is lane-aligned.
    # TODO(synk): this transpose/pad and the stride-s phase rearrangement below
    # are still host-side XLA passes over x (could be folded into the kernel
    # with strided in-kernel loads).
    x = jnp.transpose(x_nchw, (0, 2, 3, 1)).astype(jnp.bfloat16)
    x = _pad_axis_to(x, 3, Cinp)

    # conv1 + bn1 + relu (+ fused 1x1 downsample + bn as a second output).
    # The main output carries the 1-pixel zero halo conv2 needs.
    x1, taps1, (Ho, Wo) = _phase_decompose(x, 3, 3, stride, 1)
    w1, b1 = _prep_conv_bn(params['conv1_w'], params['bn1_gamma'],
                           params['bn1_beta'], params['bn1_mean'],
                           params['bn1_var'], cin_pad=Cinp, cout_pad=Cp)
    ds = None
    if has_ds:
        ds = _prep_conv_bn(params['ds_w'], params['ds_gamma'],
                           params['ds_beta'], params['ds_mean'],
                           params['ds_var'], cin_pad=Cinp, cout_pad=Cp)
    out1, identity = conv_bn_act(x1, taps1, w1, b1, Ho, Wo, out_halo=1,
                                 relu=True, downsample=ds)
    if not has_ds:
        # Identity path: x itself (stride == 1, Cin == Cout, so Cinp == Cp).
        identity = x.reshape(N, H * W, Cinp)

    # conv2 + bn2 + residual add + relu, reading the halo'd out1 directly.
    taps2 = tuple((ky, kx) for ky in range(3) for kx in range(3))
    w2, b2 = _prep_conv_bn(params['conv2_w'], params['bn2_gamma'],
                           params['bn2_beta'], params['bn2_mean'],
                           params['bn2_var'], cin_pad=Cp, cout_pad=Cp)
    out2, _ = conv_bn_act(out1, taps2, w2, b2, Ho, Wo, out_halo=0,
                          relu=True, residual=identity)  # (N, Ho*Wo, Cp) bf16

    # TODO(synk): no spatial (M) tiling — each grid step covers one full output
    # plane; very large planes with tiny batch would need an extra M grid axis
    # (with tap halo) to fit v7x's 64 MiB VMEM and feed both TensorCores.
    out = out2[:, :, :Cout].reshape(N, Ho, Wo, Cout)
    return jnp.transpose(out, (0, 3, 1, 2)).astype(jnp.float32)


# ---------------------------- pure-JAX reference ------------------------------

def _reference_forward(x, params, stride):
    def conv(x, w, s, pad):
        return jax.lax.conv_general_dilated(
            x, w, (s, s), ((pad, pad), (pad, pad)),
            dimension_numbers=('NCHW', 'OIHW', 'NCHW'))

    def bn(x, g, b, m, v, eps=1e-5):
        g, b, m, v = [a[None, :, None, None] for a in (g, b, m, v)]
        return (x - m) / jnp.sqrt(v + eps) * g + b

    identity = x
    if 'ds_w' in params:
        identity = bn(conv(x, params['ds_w'], stride, 0),
                      params['ds_gamma'], params['ds_beta'],
                      params['ds_mean'], params['ds_var'])
    out = jnp.maximum(bn(conv(x, params['conv1_w'], stride, 1),
                         params['bn1_gamma'], params['bn1_beta'],
                         params['bn1_mean'], params['bn1_var']), 0.)
    out = bn(conv(out, params['conv2_w'], 1, 1),
             params['bn2_gamma'], params['bn2_beta'],
             params['bn2_mean'], params['bn2_var'])
    return jnp.maximum(out + identity, 0.)


# ----------------------------------- main -------------------------------------

if __name__ == "__main__":
    key = jax.random.PRNGKey(0)
    kx, kp = jax.random.split(key)

    N, Cin, H, W = 2, 4, 16, 16
    Cout, stride = 8, 2               # stride!=1 / Cin!=Cout -> downsample path

    x = jax.random.normal(kx, (N, Cin, H, W), jnp.float32)
    params = init_basic_block_params(kp, Cin, Cout, stride)

    fwd = jax.jit(basic_block_forward, static_argnums=2)
    out = jax.block_until_ready(fwd(x, params, stride))

    assert out.shape == (N, Cout, H // stride, W // stride), out.shape
    ref = _reference_forward(x, params, stride)
    # bf16 MXU operands / bf16 intermediates widen the error vs f32 reference.
    err = float(jnp.max(jnp.abs(out - ref)))
    assert jnp.allclose(out, ref, atol=5e-2, rtol=5e-2), err

    print("KERNEL_OK")
</pallas_src>

<mosaic_0001>
module attributes {stable_mosaic.version = 11 : i64} {
  func.func @_conv_bn_act_kernel(%arg0: i32, %arg1: i32, %arg2: memref<1x10x10x128xbf16, #tpu.memory_space<vmem>>, %arg3: memref<1152x128xbf16, #tpu.memory_space<vmem>>, %arg4: memref<1x128xf32, #tpu.memory_space<vmem>>, %arg5: memref<1x64x128xbf16, #tpu.memory_space<vmem>>, %arg6: memref<1x64x128xbf16, #tpu.memory_space<vmem>>) attributes {dimension_semantics = [#tpu.dimension_semantics<parallel>, #tpu.dimension_semantics<parallel>], iteration_bounds = array<i64: 1, 2>, scalar_prefetch = 0 : i64, scratch_operands = 0 : i64, tpu.core_type = #tpu.core_type<tc>, window_params = [{transform_indices = @transform_0, window_bounds = array<i64: 1, 10, 10, 128>}, {transform_indices = @transform_1, window_bounds = array<i64: 1152, 128>}, {transform_indices = @transform_2, window_bounds = array<i64: 1, 128>}, {transform_indices = @transform_3, window_bounds = array<i64: 1, 64, 128>}, {transform_indices = @transform_4, window_bounds = array<i64: 1, 64, 128>}]} {
    %c0 = arith.constant 0 : index
    %c0_0 = arith.constant 0 : index
    %c0_1 = arith.constant 0 : index
    %c0_2 = arith.constant 0 : index
    %0 = vector.load %arg2[%c0, %c0_0, %c0_1, %c0_2] : memref<1x10x10x128xbf16, #tpu.memory_space<vmem>>, vector<1x8x8x128xbf16>
    %1 = vector.shape_cast %0 : vector<1x8x8x128xbf16> to vector<8x8x128xbf16>
    %c0_3 = arith.constant 0 : index
    %c0_4 = arith.constant 0 : index
    %c1 = arith.constant 1 : index
    %c0_5 = arith.constant 0 : index
    %2 = vector.load %arg2[%c0_3, %c0_4, %c1, %c0_5] : memref<1x10x10x128xbf16, #tpu.memory_space<vmem>>, vector<1x8x8x128xbf16>
    %3 = vector.shape_cast %2 : vector<1x8x8x128xbf16> to vector<8x8x128xbf16>
    %c0_6 = arith.constant 0 : index
    %c0_7 = arith.constant 0 : index
    %c2 = arith.constant 2 : index
    %c0_8 = arith.constant 0 : index
    %4 = vector.load %arg2[%c0_6, %c0_7, %c2, %c0_8] : memref<1x10x10x128xbf16, #tpu.memory_space<vmem>>, vector<1x8x8x128xbf16>
    %5 = vector.shape_cast %4 : vector<1x8x8x128xbf16> to vector<8x8x128xbf16>
    %c0_9 = arith.constant 0 : index
    %c1_10 = arith.constant 1 : index
    %c0_11 = arith.constant 0 : index
    %c0_12 = arith.constant 0 : index
    %6 = vector.load %arg2[%c0_9, %c1_10, %c0_11, %c0_12] : memref<1x10x10x128xbf16, #tpu.memory_space<vmem>>, vector<1x8x8x128xbf16>
    %7 = vector.shape_cast %6 : vector<1x8x8x128xbf16> to vector<8x8x128xbf16>
    %c0_13 = arith.constant 0 : index
    %c1_14 = arith.constant 1 : index
    %c1_15 = arith.constant 1 : index
    %c0_16 = arith.constant 0 : index
    %8 = vector.load %arg2[%c0_13, %c1_14, %c1_15, %c0_16] : memref<1x10x10x128xbf16, #tpu.memory_space<vmem>>, vector<1x8x8x128xbf16>
    %9 = vector.shape_cast %8 : vector<1x8x8x128xbf16> to vector<8x8x128xbf16>
    %c0_17 = arith.constant 0 : index
    %c1_18 = arith.constant 1 : index
    %c2_19 = arith.constant 2 : index
    %c0_20 = arith.constant 0 : index
    %10 = vector.load %arg2[%c0_17, %c1_18, %c2_19, %c0_20] : memref<1x10x10x128xbf16, #tpu.memory_space<vmem>>, vector<1x8x8x128xbf16>
    %11 = vector.shape_cast %10 : vector<1x8x8x128xbf16> to vector<8x8x128xbf16>
    %c0_21 = arith.constant 0 : index
    %c2_22 = arith.constant 2 : index
    %c0_23 = arith.constant 0 : index
    %c0_24 = arith.constant 0 : index
    %12 = vector.load %arg2[%c0_21, %c2_22, %c0_23, %c0_24] : memref<1x10x10x128xbf16, #tpu.memory_space<vmem>>, vector<1x8x8x128xbf16>
    %13 = vector.shape_cast %12 : vector<1x8x8x128xbf16> to vector<8x8x128xbf16>
    %c0_25 = arith.constant 0 : index
    %c2_26 = arith.constant 2 : index
    %c1_27 = arith.constant 1 : index
    %c0_28 = arith.constant 0 : index
    %14 = vector.load %arg2[%c0_25, %c2_26, %c1_27, %c0_28] : memref<1x10x10x128xbf16, #tpu.memory_space<vmem>>, vector<1x8x8x128xbf16>
    %15 = vector.shape_cast %14 : vector<1x8x8x128xbf16> to vector<8x8x128xbf16>
    %c0_29 = arith.constant 0 : index
    %c2_30 = arith.constant 2 : index
    %c2_31 = arith.constant 2 : index
    %c0_32 = arith.constant 0 : index
    %16 = vector.load %arg2[%c0_29, %c2_30, %c2_31, %c0_32] : memref<1x10x10x128xbf16, #tpu.memory_space<vmem>>, vector<1x8x8x128xbf16>
    %17 = vector.shape_cast %16 : vector<1x8x8x128xbf16> to vector<8x8x128xbf16>
    %18 = tpu.concatenate %1, %3, %5, %7, %9, %11, %13, %15, %17 in 2 : vector<8x8x128xbf16>, vector<8x8x128xbf16>, vector<8x8x128xbf16>, vector<8x8x128xbf16>, vector<8x8x128xbf16>, vector<8x8x128xbf16>, vector<8x8x128xbf16>, vector<8x8x128xbf16>, vector<8x8x128xbf16> -> vector<8x8x1152xbf16>
    %19 = vector.shape_cast %18 : vector<8x8x1152xbf16> to vector<64x1152xbf16>
    %c0_33 = arith.constant 0 : index
    %c0_34 = arith.constant 0 : index
    %20 = vector.load %arg3[%c0_33, %c0_34] : memref<1152x128xbf16, #tpu.memory_space<vmem>>, vector<1152x128xbf16>
    %cst = arith.constant dense<0.000000e+00> : vector<64x128xf32>
    %21 = tpu.matmul %19, %20, %cst {dimension_numbers = #tpu.dot_dimension_numbers<[1], [0], [0], [1], [0, 0, 1, 1], [], []>} : vector<64x1152xbf16>, vector<1152x128xbf16>, vector<64x128xf32> -> vector<64x128xf32>
    %c0_35 = arith.constant 0 : index
    %c0_36 = arith.constant 0 : index
    %22 = vector.load %arg4[%c0_35, %c0_36] : memref<1x128xf32, #tpu.memory_space<vmem>>, vector<1x128xf32>
    %23 = vector.broadcast %22 : vector<1x128xf32> to vector<64x128xf32>
    %24 = arith.addf %21, %23 : vector<64x128xf32>
    %c0_37 = arith.constant 0 : index
    %c0_38 = arith.constant 0 : index
    %c0_39 = arith.constant 0 : index
    %25 = vector.load %arg5[%c0_37, %c0_38, %c0_39] : memref<1x64x128xbf16, #tpu.memory_space<vmem>>, vector<1x64x128xbf16>
    %26 = vector.shape_cast %25 : vector<1x64x128xbf16> to vector<64x128xbf16>
    %27 = arith.extf %26 : vector<64x128xbf16> to vector<64x128xf32>
    %28 = arith.addf %24, %27 : vector<64x128xf32>
    %cst_40 = arith.constant 0.000000e+00 : f32
    %29 = vector.broadcast %cst_40 : f32 to vector<64x128xf32>
    %30 = arith.maximumf %28, %29 : vector<64x128xf32>
    %31 = arith.truncf %30 : vector<64x128xf32> to vector<64x128xbf16>
    %c0_41 = arith.constant 0 : index
    %c0_42 = arith.constant 0 : index
    %c0_43 = arith.constant 0 : index
    %32 = vector.load %arg6[%c0_41, %c0_42, %c0_43] : memref<1x64x128xbf16, #tpu.memory_space<vmem>>, vector<1x64x128xbf16>
    %33 = vector.shape_cast %32 : vector<1x64x128xbf16> to vector<64x128xbf16>
    %34 = vector.shape_cast %31 : vector<64x128xbf16> to vector<1x64x128xbf16>
    tpu.vector_store %arg6[%c0_41, %c0_42, %c0_43], %34 {strides = array<i32>} : memref<1x64x128xbf16, #tpu.memory_space<vmem>>, vector<1x64x128xbf16>,
    return
  }
  func.func @transform_0(%arg0: i32, %arg1: i32) -> (i32, i32, i32, i32) {
    %c0_i32 = arith.constant 0 : i32
    %c0_i32_0 = arith.constant 0 : i32
    %c0_i32_1 = arith.constant 0 : i32
    %c0_i32_2 = arith.constant 0 : i32
    return %arg1, %c0_i32, %c0_i32_0, %c0_i32_1 : i32, i32, i32, i32
  }
  func.func @transform_1(%arg0: i32, %arg1: i32) -> (i32, i32) {
    %c0_i32 = arith.constant 0 : i32
    %c0_i32_0 = arith.constant 0 : i32
    return %c0_i32, %arg0 : i32, i32
  }
  func.func @transform_2(%arg0: i32, %arg1: i32) -> (i32, i32) {
    %c0_i32 = arith.constant 0 : i32
    %c0_i32_0 = arith.constant 0 : i32
    return %c0_i32, %arg0 : i32, i32
  }
  func.func @transform_3(%arg0: i32, %arg1: i32) -> (i32, i32, i32) {
    %c0_i32 = arith.constant 0 : i32
    %c0_i32_0 = arith.constant 0 : i32
    return %arg1, %c0_i32, %arg0 : i32, i32, i32
  }
  func.func @transform_4(%arg0: i32, %arg1: i32) -> (i32, i32, i32) {
    %c0_i32 = arith.constant 0 : i32
    %c0_i32_0 = arith.constant 0 : i32
    return %arg1, %c0_i32, %arg0 : i32, i32, i32
  }
}

module attributes {stable_mosaic.version = 11 : i64} {
  func.func @_conv_bn_act_kernel(%arg0: i32, %arg1: i32, %arg2: memref<1x36x9x128xbf16, #tpu.memory_space<vmem>>, %arg3: memref<1152x128xbf16, #tpu.memory_space<vmem>>, %arg4: memref<1x128xf32, #tpu.memory_space<vmem>>, %arg5: memref<128x128xbf16, #tpu.memory_space<vmem>>, %arg6: memref<1x128xf32, #tpu.memory_space<vmem>>, %arg7: memref<1x10x10x128xbf16, #tpu.memory_space<vmem>>, %arg8: memref<1x64x128xbf16, #tpu.memory_space<vmem>>) attributes {dimension_semantics = [#tpu.dimension_semantics<parallel>, #tpu.dimension_semantics<parallel>], iteration_bounds = array<i64: 1, 2>, scalar_prefetch = 0 : i64, scratch_operands = 0 : i64, tpu.core_type = #tpu.core_type<tc>, window_params = [{transform_indices = @transform_0, window_bounds = array<i64: 1, 36, 9, 128>}, {transform_indices = @transform_1, window_bounds = array<i64: 1152, 128>}, {transform_indices = @transform_2, window_bounds = array<i64: 1, 128>}, {transform_indices = @transform_3, window_bounds = array<i64: 128, 128>}, {transform_indices = @transform_4, window_bounds = array<i64: 1, 128>}, {transform_indices = @transform_5, window_bounds = array<i64: 1, 10, 10, 128>}, {transform_indices = @transform_6, window_bounds = array<i64: 1, 64, 128>}]} {
    %c0 = arith.constant 0 : index
    %c0_0 = arith.constant 0 : index
    %c0_1 = arith.constant 0 : index
    %c0_2 = arith.constant 0 : index
    %0 = vector.load %arg2[%c0, %c0_0, %c0_1, %c0_2] : memref<1x36x9x128xbf16, #tpu.memory_space<vmem>>, vector<1x8x8x128xbf16>
    %1 = vector.shape_cast %0 : vector<1x8x8x128xbf16> to vector<8x8x128xbf16>
    %c0_3 = arith.constant 0 : index
    %c9 = arith.constant 9 : index
    %c0_4 = arith.constant 0 : index
    %c0_5 = arith.constant 0 : index
    %2 = vector.load %arg2[%c0_3, %c9, %c0_4, %c0_5] : memref<1x36x9x128xbf16, #tpu.memory_space<vmem>>, vector<1x8x8x128xbf16>
    %3 = vector.shape_cast %2 : vector<1x8x8x128xbf16> to vector<8x8x128xbf16>
    %c0_6 = arith.constant 0 : index
    %c0_7 = arith.constant 0 : index
    %c1 = arith.constant 1 : index
    %c0_8 = arith.constant 0 : index
    %4 = vector.load %arg2[%c0_6, %c0_7, %c1, %c0_8] : memref<1x36x9x128xbf16, #tpu.memory_space<vmem>>, vector<1x8x8x128xbf16>
    %5 = vector.shape_cast %4 : vector<1x8x8x128xbf16> to vector<8x8x128xbf16>
    %c0_9 = arith.constant 0 : index
    %c18 = arith.constant 18 : index
    %c0_10 = arith.constant 0 : index
    %c0_11 = arith.constant 0 : index
    %6 = vector.load %arg2[%c0_9, %c18, %c0_10, %c0_11] : memref<1x36x9x128xbf16, #tpu.memory_space<vmem>>, vector<1x8x8x128xbf16>
    %7 = vector.shape_cast %6 : vector<1x8x8x128xbf16> to vector<8x8x128xbf16>
    %c0_12 = arith.constant 0 : index
    %c27 = arith.constant 27 : index
    %c0_13 = arith.constant 0 : index
    %c0_14 = arith.constant 0 : index
    %8 = vector.load %arg2[%c0_12, %c27, %c0_13, %c0_14] : memref<1x36x9x128xbf16, #tpu.memory_space<vmem>>, vector<1x8x8x128xbf16>
    %9 = vector.shape_cast %8 : vector<1x8x8x128xbf16> to vector<8x8x128xbf16>
    %c0_15 = arith.constant 0 : index
    %c18_16 = arith.constant 18 : index
    %c1_17 = arith.constant 1 : index
    %c0_18 = arith.constant 0 : index
    %10 = vector.load %arg2[%c0_15, %c18_16, %c1_17, %c0_18] : memref<1x36x9x128xbf16, #tpu.memory_space<vmem>>, vector<1x8x8x128xbf16>
    %11 = vector.shape_cast %10 : vector<1x8x8x128xbf16> to vector<8x8x128xbf16>
    %c0_19 = arith.constant 0 : index
    %c1_20 = arith.constant 1 : index
    %c0_21 = arith.constant 0 : index
    %c0_22 = arith.constant 0 : index
    %12 = vector.load %arg2[%c0_19, %c1_20, %c0_21, %c0_22] : memref<1x36x9x128xbf16, #tpu.memory_space<vmem>>, vector<1x8x8x128xbf16>
    %13 = vector.shape_cast %12 : vector<1x8x8x128xbf16> to vector<8x8x128xbf16>
    %c0_23 = arith.constant 0 : index
    %c10 = arith.constant 10 : index
    %c0_24 = arith.constant 0 : index
    %c0_25 = arith.constant 0 : index
    %14 = vector.load %arg2[%c0_23, %c10, %c0_24, %c0_25] : memref<1x36x9x128xbf16, #tpu.memory_space<vmem>>, vector<1x8x8x128xbf16>
    %15 = vector.shape_cast %14 : vector<1x8x8x128xbf16> to vector<8x8x128xbf16>
    %c0_26 = arith.constant 0 : index
    %c1_27 = arith.constant 1 : index
    %c1_28 = arith.constant 1 : index
    %c0_29 = arith.constant 0 : index
    %16 = vector.load %arg2[%c0_26, %c1_27, %c1_28, %c0_29] : memref<1x36x9x128xbf16, #tpu.memory_space<vmem>>, vector<1x8x8x128xbf16>
    %17 = vector.shape_cast %16 : vector<1x8x8x128xbf16> to vector<8x8x128xbf16>
    %18 = tpu.concatenate %1, %3, %5, %7, %9, %11, %13, %15, %17 in 2 : vector<8x8x128xbf16>, vector<8x8x128xbf16>, vector<8x8x128xbf16>, vector<8x8x128xbf16>, vector<8x8x128xbf16>, vector<8x8x128xbf16>, vector<8x8x128xbf16>, vector<8x8x128xbf16>, vector<8x8x128xbf16> -> vector<8x8x1152xbf16>
    %19 = vector.shape_cast %18 : vector<8x8x1152xbf16> to vector<64x1152xbf16>
    %c0_30 = arith.constant 0 : index
    %c0_31 = arith.constant 0 : index
    %20 = vector.load %arg3[%c0_30, %c0_31] : memref<1152x128xbf16, #tpu.memory_space<vmem>>, vector<1152x128xbf16>
    %cst = arith.constant dense<0.000000e+00> : vector<64x128xf32>
    %21 = tpu.matmul %19, %20, %cst {dimension_numbers = #tpu.dot_dimension_numbers<[1], [0], [0], [1], [0, 0, 1, 1], [], []>} : vector<64x1152xbf16>, vector<1152x128xbf16>, vector<64x128xf32> -> vector<64x128xf32>
    %c0_32 = arith.constant 0 : index
    %c0_33 = arith.constant 0 : index
    %22 = vector.load %arg4[%c0_32, %c0_33] : memref<1x128xf32, #tpu.memory_space<vmem>>, vector<1x128xf32>
    %23 = vector.broadcast %22 : vector<1x128xf32> to vector<64x128xf32>
    %24 = arith.addf %21, %23 : vector<64x128xf32>
    %cst_34 = arith.constant 0.000000e+00 : f32
    %25 = vector.broadcast %cst_34 : f32 to vector<64x128xf32>
    %26 = arith.maximumf %24, %25 : vector<64x128xf32>
    %27 = arith.truncf %26 : vector<64x128xf32> to vector<64x128xbf16>
    %cst_35 = arith.constant 0.000000e+00 : bf16
    %28 = vector.broadcast %cst_35 : bf16 to vector<1x10x128xbf16>
    %cst_36 = arith.constant 0.000000e+00 : bf16
    %29 = vector.broadcast %cst_36 : bf16 to vector<8x1x128xbf16>
    %c0_37 = arith.constant 0 : index
    %c0_38 = arith.constant 0 : index
    %c0_39 = arith.constant 0 : index
    %c0_40 = arith.constant 0 : index
    %30 = vector.load %arg7[%c0_37, %c0_38, %c0_39, %c0_40] : memref<1x10x10x128xbf16, #tpu.memory_space<vmem>>, vector<1x1x10x128xbf16>
    %31 = vector.shape_cast %30 : vector<1x1x10x128xbf16> to vector<1x10x128xbf16>
    %32 = vector.shape_cast %28 : vector<1x10x128xbf16> to vector<1x1x10x128xbf16>
    tpu.vector_store %arg7[%c0_37, %c0_38, %c0_39, %c0_40], %32 {strides = array<i32>} : memref<1x10x10x128xbf16, #tpu.memory_space<vmem>>, vector<1x1x10x128xbf16>,
    %c0_41 = arith.constant 0 : index
    %c9_42 = arith.constant 9 : index
    %c0_43 = arith.constant 0 : index
    %c0_44 = arith.constant 0 : index
    %33 = vector.load %arg7[%c0_41, %c9_42, %c0_43, %c0_44] : memref<1x10x10x128xbf16, #tpu.memory_space<vmem>>, vector<1x1x10x128xbf16>
    %34 = vector.shape_cast %33 : vector<1x1x10x128xbf16> to vector<1x10x128xbf16>
    %35 = vector.shape_cast %28 : vector<1x10x128xbf16> to vector<1x1x10x128xbf16>
    tpu.vector_store %arg7[%c0_41, %c9_42, %c0_43, %c0_44], %35 {strides = array<i32>} : memref<1x10x10x128xbf16, #tpu.memory_space<vmem>>, vector<1x1x10x128xbf16>,
    %c0_45 = arith.constant 0 : index
    %c1_46 = arith.constant 1 : index
    %c0_47 = arith.constant 0 : index
    %c0_48 = arith.constant 0 : index
    %36 = vector.load %arg7[%c0_45, %c1_46, %c0_47, %c0_48] : memref<1x10x10x128xbf16, #tpu.memory_space<vmem>>, vector<1x8x1x128xbf16>
    %37 = vector.shape_cast %36 : vector<1x8x1x128xbf16> to vector<8x1x128xbf16>
    %38 = vector.shape_cast %29 : vector<8x1x128xbf16> to vector<1x8x1x128xbf16>
    tpu.vector_store %arg7[%c0_45, %c1_46, %c0_47, %c0_48], %38 {strides = array<i32>} : memref<1x10x10x128xbf16, #tpu.memory_space<vmem>>, vector<1x8x1x128xbf16>,
    %c0_49 = arith.constant 0 : index
    %c1_50 = arith.constant 1 : index
    %c9_51 = arith.constant 9 : index
    %c0_52 = arith.constant 0 : index
    %39 = vector.load %arg7[%c0_49, %c1_50, %c9_51, %c0_52] : memref<1x10x10x128xbf16, #tpu.memory_space<vmem>>, vector<1x8x1x128xbf16>
    %40 = vector.shape_cast %39 : vector<1x8x1x128xbf16> to vector<8x1x128xbf16>
    %41 = vector.shape_cast %29 : vector<8x1x128xbf16> to vector<1x8x1x128xbf16>
    tpu.vector_store %arg7[%c0_49, %c1_50, %c9_51, %c0_52], %41 {strides = array<i32>} : memref<1x10x10x128xbf16, #tpu.memory_space<vmem>>, vector<1x8x1x128xbf16>,
    %42 = vector.shape_cast %27 : vector<64x128xbf16> to vector<8x8x128xbf16>
    %c0_53 = arith.constant 0 : index
    %c1_54 = arith.constant 1 : index
    %c1_55 = arith.constant 1 : index
    %c0_56 = arith.constant 0 : index
    %43 = vector.load %arg7[%c0_53, %c1_54, %c1_55, %c0_56] : memref<1x10x10x128xbf16, #tpu.memory_space<vmem>>, vector<1x8x8x128xbf16>
    %44 = vector.shape_cast %43 : vector<1x8x8x128xbf16> to vector<8x8x128xbf16>
    %45 = vector.shape_cast %42 : vector<8x8x128xbf16> to vector<1x8x8x128xbf16>
    tpu.vector_store %arg7[%c0_53, %c1_54, %c1_55, %c0_56], %45 {strides = array<i32>} : memref<1x10x10x128xbf16, #tpu.memory_space<vmem>>, vector<1x8x8x128xbf16>,
    %46 = vector.extract_strided_slice %19 {offsets = [0, 512], sizes = [64, 128], strides = [1, 1]} : vector<64x1152xbf16> to vector<64x128xbf16>
    %c0_57 = arith.constant 0 : index
    %c0_58 = arith.constant 0 : index
    %47 = vector.load %arg5[%c0_57, %c0_58] : memref<128x128xbf16, #tpu.memory_space<vmem>>, vector<128x128xbf16>
    %cst_59 = arith.constant dense<0.000000e+00> : vector<64x128xf32>
    %48 = tpu.matmul %46, %47, %cst_59 {dimension_numbers = #tpu.dot_dimension_numbers<[1], [0], [0], [1], [0, 0, 1, 1], [], []>} : vector<64x128xbf16>, vector<128x128xbf16>, vector<64x128xf32> -> vector<64x128xf32>
    %c0_60 = arith.constant 0 : index
    %c0_61 = arith.constant 0 : index
    %49 = vector.load %arg6[%c0_60, %c0_61] : memref<1x128xf32, #tpu.memory_space<vmem>>, vector<1x128xf32>
    %50 = vector.broadcast %49 : vector<1x128xf32> to vector<64x128xf32>
    %51 = arith.addf %48, %50 : vector<64x128xf32>
    %52 = arith.truncf %51 : vector<64x128xf32> to vector<64x128xbf16>
    %c0_62 = arith.constant 0 : index
    %c0_63 = arith.constant 0 : index
    %c0_64 = arith.constant 0 : index
    %53 = vector.load %arg8[%c0_62, %c0_63, %c0_64] : memref<1x64x128xbf16, #tpu.memory_space<vmem>>, vector<1x64x128xbf16>
    %54 = vector.shape_cast %53 : vector<1x64x128xbf16> to vector<64x128xbf16>
    %55 = vector.shape_cast %52 : vector<64x128xbf16> to vector<1x64x128xbf16>
    tpu.vector_store %arg8[%c0_62, %c0_63, %c0_64], %55 {strides = array<i32>} : memref<1x64x128xbf16, #tpu.memory_space<vmem>>, vector<1x64x128xbf16>,
    return
  }
  func.func @transform_0(%arg0: i32, %arg1: i32) -> (i32, i32, i32, i32) {
    %c0_i32 = arith.constant 0 : i32
    %c0_i32_0 = arith.constant 0 : i32
    %c0_i32_1 = arith.constant 0 : i32
    %c0_i32_2 = arith.constant 0 : i32
    return %arg1, %c0_i32, %c0_i32_0, %c0_i32_1 : i32, i32, i32, i32
  }
  func.func @transform_1(%arg0: i32, %arg1: i32) -> (i32, i32) {
    %c0_i32 = arith.constant 0 : i32
    %c0_i32_0 = arith.constant 0 : i32
    return %c0_i32, %arg0 : i32, i32
  }
  func.func @transform_2(%arg0: i32, %arg1: i32) -> (i32, i32) {
    %c0_i32 = arith.constant 0 : i32
    %c0_i32_0 = arith.constant 0 : i32
    return %c0_i32, %arg0 : i32, i32
  }
  func.func @transform_3(%arg0: i32, %arg1: i32) -> (i32, i32) {
    %c0_i32 = arith.constant 0 : i32
    %c0_i32_0 = arith.constant 0 : i32
    return %c0_i32, %arg0 : i32, i32
  }
  func.func @transform_4(%arg0: i32, %arg1: i32) -> (i32, i32) {
    %c0_i32 = arith.constant 0 : i32
    %c0_i32_0 = arith.constant 0 : i32
    return %c0_i32, %arg0 : i32, i32
  }
  func.func @transform_5(%arg0: i32, %arg1: i32) -> (i32, i32, i32, i32) {
    %c0_i32 = arith.constant 0 : i32
    %c0_i32_0 = arith.constant 0 : i32
    %c0_i32_1 = arith.constant 0 : i32
    return %arg1, %c0_i32, %c0_i32_0, %arg0 : i32, i32, i32, i32
  }
  func.func @transform_6(%arg0: i32, %arg1: i32) -> (i32, i32, i32) {
    %c0_i32 = arith.constant 0 : i32
    %c0_i32_0 = arith.constant 0 : i32
    return %arg1, %c0_i32, %arg0 : i32, i32, i32
  }
}

</mosaic_0001>

<llo_original>
// kernel: basic_block_forward.3
$region0: #{basic_block_forward.3}
  #allocation0 [shape = 'u32[]', space=smem, size = 0x4, offset = 0x4, fixed_abs, tag = 'smem constant byte address 0x4 - core index']
  #allocation1 [shape = 'u32[144,128]{1,0:T(1,128)}', space=vmem, size = 0x12000, scoped, tag = 'internal scratch']
  %s0 = inlined_call_operand.vmem [shape: bf16[2,10,10,128], index: 0, kind: input, shape index: {}]
  %s1 = inlined_call_operand.vmem [shape: bf16[1152,128], index: 1, kind: input, shape index: {}]
  %s2 = inlined_call_operand.vmem [shape: f32[1,128], index: 2, kind: input, shape index: {}]
  %s3 = inlined_call_operand.vmem [shape: bf16[2,64,128], index: 3, kind: input, shape index: {}]
  %s4 = inlined_call_operand.vmem [shape: bf16[2,64,128], index: 4, kind: output, shape index: {}]
  %s5 = sld [smem:[#allocation0]]
  $region49: #{basic_block_forward.3} parent=0
    _
  %s7 = ssub.s32 1, %s5
  %s8 = scalar_select 0, %s7, %s5
  loop: start=0, step=1, limit=4
  $region2: #{basic_block_forward.3} parent=0 // loop_pre_header
    _
  $region3: #{basic_block_forward.3} parent=0 // loop_header
    %s10 = sphi 0, %s14
    %p11 = scmp.ge.s32.totalorder %s10, 4
    %s17 = sphi 0, %s29
    %s18 = sphi 0, %s25
    %s19 = sphi 0, %s17
    %s20 = sphi 0, %s18
    %s21 = sphi 0, %s19
    %s22 = sphi 0, %s20
    %s32 = sphi 0, %s34
    %s35 = sphi 0, %s32
    %s36 = sphi 0, %s35
    %s52 = sphi 0, %s36
    %s58 = sphi 0, %s60
    %s61 = sphi 0, %s58
    %s62 = sphi 0, %s61
    %s78 = sphi 0, %s62
    %s84 = sphi 0, %s86
    %s87 = sphi 0, %s84
    %s88 = sphi 0, %s87
    %s104 = sphi 0, %s88
    %s112 = sphi 0, %s114
    %s115 = sphi 0, %s112
    %s116 = sphi 0, %s115
    %s132 = sphi 0, %s116
    %s140 = sphi 0, %s142
    %s143 = sphi 0, %s140
    %s144 = sphi 0, %s143
    %s160 = sphi 0, %s144
  $region4: #{basic_block_forward.3} parent=0 // loop_header_branch
    %13 = sbr.rel (%p11) target = $region8
  $region5: #{basic_block_forward.3} parent=0 // loop_body
    %s15 = ssub.s32 %s10, 1
    %s16 = ssub.s32 %s10, 2
    %s23 = sadd.s32 1, %s18
    %p24 = scmp.ge.s32.totalorder %s23, 2
    %s25 = scalar_select %p24, 0, %s23
    %s26 = sadd.s32 1, %s17
    %s27 = scalar_select %p24, %s26, %s17
    %p28 = scmp.ge.s32.totalorder %s27, 1
    %s29 = scalar_select %p28, 0, %s27
    %s30 = ssub.s32 %s18, %s25
    %p31 = scmp.eq.s32.totalorder %s30, 0
    %s33 = sadd.s32 %s32, 1
    %s34 = scalar_select %p31, %s32, %s33
    %p37 = pneg %p31
    %p38 = scmp.eq.s32.totalorder %s10, 1
    %p39 = por %p37, %p38
    %p40 = scmp.ne.s32.totalorder %s32, %s35
    %p41 = scmp.eq.s32.totalorder %s10, 0
    %p42 = por %p40, %p41
    %p43 = scmp.ne.s32.totalorder %s32, %s35
    %p44 = scmp.eq.s32.totalorder %s15, 1
    %p45 = por %p43, %p44
    %p46 = scmp.ne.s32.totalorder %s35, %s36
    %p47 = scmp.eq.s32.totalorder %s15, 0
    %p48 = por %p46, %p47
    %p49 = scmp.ne.s32.totalorder %s35, %s36
    %p50 = scmp.eq.s32.totalorder %s16, 1
    %p51 = por %p49, %p50
    %p53 = scmp.ne.s32.totalorder %s36, %s52
    %p54 = scmp.eq.s32.totalorder %s16, 0
    %p55 = por %p53, %p54
    %s56 = ssub.s32 %s17, %s29
    %p57 = scmp.eq.s32.totalorder %s56, 0
    %s59 = sadd.s32 %s58, 1
    %s60 = scalar_select %p57, %s58, %s59
    %p63 = pneg %p57
    %p64 = scmp.eq.s32.totalorder %s10, 1
    %p65 = por %p63, %p64
    %p66 = scmp.ne.s32.totalorder %s58, %s61
    %p67 = scmp.eq.s32.totalorder %s10, 0
    %p68 = por %p66, %p67
    %p69 = scmp.ne.s32.totalorder %s58, %s61
    %p70 = scmp.eq.s32.totalorder %s15, 1
    %p71 = por %p69, %p70
    %p72 = scmp.ne.s32.totalorder %s61, %s62
    %p73 = scmp.eq.s32.totalorder %s15, 0
    %p74 = por %p72, %p73
    %p75 = scmp.ne.s32.totalorder %s61, %s62
    %p76 = scmp.eq.s32.totalorder %s16, 1
    %p77 = por %p75, %p76
    %p79 = scmp.ne.s32.totalorder %s62, %s78
    %p80 = scmp.eq.s32.totalorder %s16, 0
    %p81 = por %p79, %p80
    %s82 = ssub.s32 %s17, %s29
    %p83 = scmp.eq.s32.totalorder %s82, 0
    %s85 = sadd.s32 %s84, 1
    %s86 = scalar_select %p83, %s84, %s85
    %p89 = pneg %p83
    %p90 = scmp.eq.s32.totalorder %s10, 1
    %p91 = por %p89, %p90
    %p92 = scmp.ne.s32.totalorder %s84, %s87
    %p93 = scmp.eq.s32.totalorder %s10, 0
    %p94 = por %p92, %p93
    %p95 = scmp.ne.s32.totalorder %s84, %s87
    %p96 = scmp.eq.s32.totalorder %s15, 1
    %p97 = por %p95, %p96
    %p98 = scmp.ne.s32.totalorder %s87, %s88
    %p99 = scmp.eq.s32.totalorder %s15, 0
    %p100 = por %p98, %p99
    %p101 = scmp.ne.s32.totalorder %s87, %s88
    %p102 = scmp.eq.s32.totalorder %s16, 1
    %p103 = por %p101, %p102
    %p105 = scmp.ne.s32.totalorder %s88, %s104
    %p106 = scmp.eq.s32.totalorder %s16, 0
    %p107 = por %p105, %p106
    %s108 = ssub.s32 %s18, %s25
    %s109 = ssub.s32 %s17, %s29
    %s110 = sor.u32 %s108, %s109
    %p111 = scmp.eq.s32.totalorder %s110, 0
    %s113 = sadd.s32 %s112, 1
    %s114 = scalar_select %p111, %s112, %s113
    %p117 = pneg %p111
    %p118 = scmp.eq.s32.totalorder %s10, 1
    %p119 = por %p117, %p118
    %p120 = scmp.ne.s32.totalorder %s112, %s115
    %p121 = scmp.eq.s32.totalorder %s10, 0
    %p122 = por %p120, %p121
    %p123 = scmp.ne.s32.totalorder %s112, %s115
    %p124 = scmp.eq.s32.totalorder %s15, 1
    %p125 = por %p123, %p124
    %p126 = scmp.ne.s32.totalorder %s115, %s116
    %p127 = scmp.eq.s32.totalorder %s15, 0
    %p128 = por %p126, %p127
    %p129 = scmp.ne.s32.totalorder %s115, %s116
    %p130 = scmp.eq.s32.totalorder %s16, 1
    %p131 = por %p129, %p130
    %p133 = scmp.ne.s32.totalorder %s116, %s132
    %p134 = scmp.eq.s32.totalorder %s16, 0
    %p135 = por %p133, %p134
    %s136 = ssub.s32 %s18, %s25
    %s137 = ssub.s32 %s17, %s29
    %s138 = sor.u32 %s136, %s137
    %p139 = scmp.eq.s32.totalorder %s138, 0
    %s141 = sadd.s32 %s140, 1
    %s142 = scalar_select %p139, %s140, %s141
    %p145 = pneg %p139
    %p146 = scmp.eq.s32.totalorder %s10, 1
    %p147 = por %p145, %p146
    %p148 = scmp.ne.s32.totalorder %s140, %s143
    %p149 = scmp.eq.s32.totalorder %s10, 0
    %p150 = por %p148, %p149
    %p151 = scmp.ne.s32.totalorder %s140, %s143
    %p152 = scmp.eq.s32.totalorder %s15, 1
    %p153 = por %p151, %p152
    %p154 = scmp.ne.s32.totalorder %s143, %s144
    %p155 = scmp.eq.s32.totalorder %s15, 0
    %p156 = por %p154, %p155
    %p157 = scmp.ne.s32.totalorder %s143, %s144
    %p158 = scmp.eq.s32.totalorder %s16, 1
    %p159 = por %p157, %p158
    %p161 = scmp.ne.s32.totalorder %s144, %s160
    %p162 = scmp.eq.s32.totalorder %s16, 0
    %p163 = por %p161, %p162
    %p164 = scmp.le.s32.totalorder 1, %s10
    %p165 = scmp.lt.s32.totalorder %s10, 3
    %p166 = pnand %p164, %p165
    %p167 = pneg %p166
    // Predicated region
    $region9: #{basic_block_forward.3} parent=5 // pred_check
      _
    $region10: #{basic_block_forward.3} parent=5 // pred_check_branch
      %169 = sbr.rel (%p166) target = $region12
    $region11: #{basic_block_forward.3} parent=5 // pred_region
      %s170 = ssub.s32 %s10, 1
      // Predicated region
      $region13: #{basic_block_forward.3} parent=11 // pred_check
        %p171 = pneg %p74
      $region14: #{basic_block_forward.3} parent=11 // pred_check_branch
        %173 = sbr.rel (%p171) target = $region16
      $region15: #{basic_block_forward.3} parent=11 // pred_region
        %p174 = scmp.lt.s32.totalorder %s19, 0
        %s175 = scalar_select %p174, %s19, 0
        %s176 = smul.addr %s175, 4
        %s177 = scalar_lea.vmem %s1, %s176
      $region16: #{basic_block_forward.3} parent=11 // pred_fallthru
        _
      // Predicated region
      $region17: #{basic_block_forward.3} parent=11 // pred_check
        %p178 = pneg %p100
      $region18: #{basic_block_forward.3} parent=11 // pred_check_branch
        %180 = sbr.rel (%p178) target = $region20
      $region19: #{basic_block_forward.3} parent=11 // pred_region
        %p181 = scmp.lt.s32.totalorder %s19, 0
        %s182 = scalar_select %p181, %s19, 0
        %s183 = scalar_lea.vmem %s2, %s182
      $region20: #{basic_block_forward.3} parent=11 // pred_fallthru
        _
    $region12: #{basic_block_forward.3} parent=5 // pred_fallthru
      _
    %p184 = scmp.lt.s32.totalorder %s10, 2
    // Predicated region
    $region21: #{basic_block_forward.3} parent=5 // pred_check
      %p185 = pneg %p184
    $region22: #{basic_block_forward.3} parent=5 // pred_check_branch
      %187 = sbr.rel (%p185) target = $region24
    $region23: #{basic_block_forward.3} parent=5 // pred_region
      // Predicated region
      $region25: #{basic_block_forward.3} parent=23 // pred_check
        %p188 = pneg %p42
      $region26: #{basic_block_forward.3} parent=23 // pred_check_branch
        %190 = sbr.rel (%p188) target = $region28
      $region27: #{basic_block_forward.3} parent=23 // pred_region
        %p191 = scmp.lt.s32.totalorder %s18, 1
        %s192 = scalar_select %p191, %s18, 1
        %s193 = smul.addr %s192, 20
        %s194 = smul.addr %s193, 4
        %s195 = scalar_lea.vmem %s0, %s194
      $region28: #{basic_block_forward.3} parent=23 // pred_fallthru
        _
      // Predicated region
      $region29: #{basic_block_forward.3} parent=23 // pred_check
        %p196 = pneg %p122
      $region30: #{basic_block_forward.3} parent=23 // pred_check_branch
        %198 = sbr.rel (%p196) target = $region32
      $region31: #{basic_block_forward.3} parent=23 // pred_region
        %p199 = scmp.lt.s32.totalorder %s18, 1
        %s200 = scalar_select %p199, %s18, 1
        %p201 = scmp.lt.s32.totalorder %s17, 0
        %s202 = scalar_select %p201, %s17, 0
        %s203 = smul.addr %s200, 8
        %s204 = sadd.s32 %s202, %s203
        %s205 = smul.addr %s204, 4
        %s206 = scalar_lea.vmem %s3, %s205
      $region32: #{basic_block_forward.3} parent=23 // pred_fallthru
        _
    $region24: #{basic_block_forward.3} parent=5 // pred_fallthru
      _
    %p207 = scmp.le.s32.totalorder 1, %s10
    %p208 = scmp.lt.s32.totalorder %s10, 3
    %p209 = pnand %p207, %p208
    %p210 = pneg %p209
    // Predicated region
    $region33: #{basic_block_forward.3} parent=5 // pred_check
      _
    $region34: #{basic_block_forward.3} parent=5 // pred_check_branch
      %212 = sbr.rel (%p209) target = $region36
    $region35: #{basic_block_forward.3} parent=5 // pred_region
      %s213 = ssub.s32 %s10, 1
      %p214 = scmp.lt.s32.totalorder %s20, 1
      %s215 = scalar_select %p214, %s20, 1
      %s216 = smul.addr %s215, 20
      %s217 = smul.addr %s216, 4
      %s218 = scalar_lea.vmem %s0, %s217
      %p219 = pneg %p48
      %p220 = pneg %p45
      %p221 = scmp.lt.s32.totalorder %s19, 0
      %s222 = scalar_select %p221, %s19, 0
      %s223 = smul.addr %s222, 4
      %s224 = scalar_lea.vmem %s1, %s223
      %p225 = pneg %p74
      %p226 = pneg %p71
      %p227 = scmp.lt.s32.totalorder %s19, 0
      %s228 = scalar_select %p227, %s19, 0
      %s229 = scalar_lea.vmem %s2, %s228
      %p230 = pneg %p100
      %p231 = pneg %p97
      %p232 = scmp.lt.s32.totalorder %s20, 1
      %s233 = scalar_select %p232, %s20, 1
      %p234 = scmp.lt.s32.totalorder %s19, 0
      %s235 = scalar_select %p234, %s19, 0
      %s236 = smul.addr %s233, 8
      %s237 = sadd.s32 %s235, %s236
      %s238 = smul.addr %s237, 4
      %s239 = scalar_lea.vmem %s3, %s238
      %p240 = pneg %p128
      %p241 = pneg %p125
      %p242 = pneg %p156
      %p243 = pneg %p153
      %p244 = scmp.lt.s32.totalorder %s20, 1
      %s245 = scalar_select %p244, %s20, 1
      %p246 = scmp.lt.s32.totalorder %s19, 0
      %s247 = scalar_select %p246, %s19, 0
      %s248 = smul.addr %s245, 8
      %s249 = sadd.s32 %s247, %s248
      %s250 = smul.addr %s249, 4
      %s251 = scalar_lea.vmem %s4, %s250
      %p252 = scmp.lt.s32.totalorder %s20, 1
      %s253 = scalar_select %p252, %s20, 1
      %s254 = smul.addr %s253, 20
      %s255 = smul.addr %s254, 4
      %s256 = scalar_lea.vmem %s0, %s255
      %p257 = scmp.lt.s32.totalorder %s19, 0
      %s258 = scalar_select %p257, %s19, 0
      %s259 = smul.addr %s258, 4
      %s260 = scalar_lea.vmem %s1, %s259
      %p261 = scmp.lt.s32.totalorder %s19, 0
      %s262 = scalar_select %p261, %s19, 0
      %s263 = scalar_lea.vmem %s2, %s262
      %p264 = scmp.lt.s32.totalorder %s20, 1
      %s265 = scalar_select %p264, %s20, 1
      %p266 = scmp.lt.s32.totalorder %s19, 0
      %s267 = scalar_select %p266, %s19, 0
      %s268 = smul.addr %s265, 8
      %s269 = sadd.s32 %s267, %s268
      %s270 = smul.addr %s269, 4
      %s271 = scalar_lea.vmem %s3, %s270
      %p272 = scmp.lt.s32.totalorder %s20, 1
      %s273 = scalar_select %p272, %s20, 1
      %p274 = scmp.lt.s32.totalorder %s19, 0
      %s275 = scalar_select %p274, %s19, 0
      %s276 = smul.addr %s273, 8
      %s277 = sadd.s32 %s275, %s276
      %s278 = smul.addr %s277, 4
      %s279 = scalar_lea.vmem %s4, %s278
      %v281 = vld [vmem:[%s256] sm:$0xf]
      %v282 = vld [vmem:[%s256 + $0x8] sm:$0xf]
      %v283 = vld [vmem:[%s256 + $0x10] sm:$0xf]
      %v284 = vld [vmem:[%s256 + $0x18] sm:$0xf]
      %v285 = vld [vmem:[%s256 + $0x20] sm:$0xf]
      %v286 = vld [vmem:[%s256 + $0x28] sm:$0xf]
      %v287 = vld [vmem:[%s256 + $0x30] sm:$0xf]
      %v288 = vld [vmem:[%s256 + $0x38] sm:$0xf]
      %v289 = vld [vmem:[%s256 + $0x4] sm:$0x1]
      %v290 = vld [vmem:[%s256 + $0xc] sm:$0x1]
      %v291 = vld [vmem:[%s256 + $0x14] sm:$0x1]
      %v292 = vld [vmem:[%s256 + $0x1c] sm:$0x1]
      %v293 = vld [vmem:[%s256 + $0x24] sm:$0x1]
      %v294 = vld [vmem:[%s256 + $0x2c] sm:$0x1]
      %v295 = vld [vmem:[%s256 + $0x34] sm:$0x1]
      %v296 = vld [vmem:[%s256 + $0x3c] sm:$0x1]
      %v297 = vld [vmem:[%s256] sm:$0xe]
      %v298 = vld [vmem:[%s256 + $0x8] sm:$0xe]
      %v299 = vld [vmem:[%s256 + $0x10] sm:$0xe]
      %v300 = vld [vmem:[%s256 + $0x18] sm:$0xe]
      %v301 = vld [vmem:[%s256 + $0x20] sm:$0xe]
      %v302 = vld [vmem:[%s256 + $0x28] sm:$0xe]
      %v303 = vld [vmem:[%s256 + $0x30] sm:$0xe]
      %v304 = vld [vmem:[%s256 + $0x38] sm:$0xe]
      %s305 = scalar_lea.vmem %s256, 8
      %v306 = vld [vmem:[%s305] sm:$0xf]
      %v307 = vld [vmem:[%s305 + $0x8] sm:$0xf]
      %v308 = vld [vmem:[%s305 + $0x10] sm:$0xf]
      %v309 = vld [vmem:[%s305 + $0x18] sm:$0xf]
      %v310 = vld [vmem:[%s305 + $0x20] sm:$0xf]
      %v311 = vld [vmem:[%s305 + $0x28] sm:$0xf]
      %v312 = vld [vmem:[%s305 + $0x30] sm:$0xf]
      %v313 = vld [vmem:[%s305 + $0x38] sm:$0xf]
      %v314 = vld [vmem:[%s305 + $0x4] sm:$0x1]
      %v315 = vld [vmem:[%s305 + $0xc] sm:$0x1]
      %v316 = vld [vmem:[%s305 + $0x14] sm:$0x1]
      %v317 = vld [vmem:[%s305 + $0x1c] sm:$0x1]
      %v318 = vld [vmem:[%s305 + $0x24] sm:$0x1]
      %v319 = vld [vmem:[%s305 + $0x2c] sm:$0x1]
      %v320 = vld [vmem:[%s305 + $0x34] sm:$0x1]
      %v321 = vld [vmem:[%s305 + $0x3c] sm:$0x1]
      %v322 = vld [vmem:[%s305] sm:$0xe]
      %v323 = vld [vmem:[%s305 + $0x8] sm:$0xe]
      %v324 = vld [vmem:[%s305 + $0x10] sm:$0xe]
      %v325 = vld [vmem:[%s305 + $0x18] sm:$0xe]
      %v326 = vld [vmem:[%s305 + $0x20] sm:$0xe]
      %v327 = vld [vmem:[%s305 + $0x28] sm:$0xe]
      %v328 = vld [vmem:[%s305 + $0x30] sm:$0xe]
      %v329 = vld [vmem:[%s305 + $0x38] sm:$0xe]
      %s330 = scalar_lea.vmem %s256, 16
      %v331 = vld [vmem:[%s330] sm:$0xf]
      %v332 = vld [vmem:[%s330 + $0x8] sm:$0xf]
      %v333 = vld [vmem:[%s330 + $0x10] sm:$0xf]
      %v334 = vld [vmem:[%s330 + $0x18] sm:$0xf]
      %v335 = vld [vmem:[%s330 + $0x20] sm:$0xf]
      %v336 = vld [vmem:[%s330 + $0x28] sm:$0xf]
      %v337 = vld [vmem:[%s330 + $0x30] sm:$0xf]
      %v338 = vld [vmem:[%s330 + $0x38] sm:$0xf]
      %v339 = vld [vmem:[%s330 + $0x4] sm:$0x1]
      %v340 = vld [vmem:[%s330 + $0xc] sm:$0x1]
      %v341 = vld [vmem:[%s330 + $0x14] sm:$0x1]
      %v342 = vld [vmem:[%s330 + $0x1c] sm:$0x1]
      %v343 = vld [vmem:[%s330 + $0x24] sm:$0x1]
      %v344 = vld [vmem:[%s330 + $0x2c] sm:$0x1]
      %v345 = vld [vmem:[%s330 + $0x34] sm:$0x1]
      %v346 = vld [vmem:[%s330 + $0x3c] sm:$0x1]
      %v347 = vld [vmem:[%s330] sm:$0xe]
      %v348 = vld [vmem:[%s330 + $0x8] sm:$0xe]
      %v349 = vld [vmem:[%s330 + $0x10] sm:$0xe]
      %v350 = vld [vmem:[%s330 + $0x18] sm:$0xe]
      %v351 = vld [vmem:[%s330 + $0x20] sm:$0xe]
      %v352 = vld [vmem:[%s330 + $0x28] sm:$0xe]
      %v353 = vld [vmem:[%s330 + $0x30] sm:$0xe]
      %v354 = vld [vmem:[%s330 + $0x38] sm:$0xe]
      %v371 = vunpack.c.l.b16 %v281
      %v372 = vunpack.c.l.b16 %v289
      %v373 = vunpack.c.l.b16 %v282
      %v374 = vunpack.c.l.b16 %v290
      %v375 = vunpack.c.l.b16 %v283
      %v376 = vunpack.c.l.b16 %v291
      %v377 = vunpack.c.l.b16 %v284
      %v378 = vunpack.c.l.b16 %v292
      %v379 = vunpack.c.l.b16 %v285
      %v380 = vunpack.c.l.b16 %v293
      %v381 = vunpack.c.l.b16 %v286
      %v382 = vunpack.c.l.b16 %v294
      %v383 = vunpack.c.l.b16 %v287
      %v384 = vunpack.c.l.b16 %v295
      %v385 = vunpack.c.l.b16 %v288
      %v386 = vunpack.c.l.b16 %v296
      %v387 = vpack.c.b16 %v372, %v371
      %v388 = vpack.c.b16 %v374, %v373
      %v389 = vpack.c.b16 %v376, %v375
      %v390 = vpack.c.b16 %v378, %v377
      %v391 = vpack.c.b16 %v380, %v379
      %v392 = vpack.c.b16 %v382, %v381
      %v393 = vpack.c.b16 %v384, %v383
      %v394 = vpack.c.b16 %v386, %v385
      %v396 = vshrl.u32 %v387, 16
      %v398 = vshll.u32 %v387, 16
      %v400 = vrot.slane %v398, 1
      %v401 = vor.u32 %v396, %v400
      %v403 = vshrl.u32 %v388, 16
      %v405 = vshll.u32 %v388, 16
      %v407 = vrot.slane %v405, 1
      %v408 = vor.u32 %v403, %v407
      %v410 = vshrl.u32 %v389, 16
      %v412 = vshll.u32 %v389, 16
      %v414 = vrot.slane %v412, 1
      %v415 = vor.u32 %v410, %v414
      %v417 = vshrl.u32 %v390, 16
      %v419 = vshll.u32 %v390, 16
      %v421 = vrot.slane %v419, 1
      %v422 = vor.u32 %v417, %v421
      %v424 = vshrl.u32 %v391, 16
      %v426 = vshll.u32 %v391, 16
      %v428 = vrot.slane %v426, 1
      %v429 = vor.u32 %v424, %v428
      %v431 = vshrl.u32 %v392, 16
      %v433 = vshll.u32 %v392, 16
      %v435 = vrot.slane %v433, 1
      %v436 = vor.u32 %v431, %v435
      %v438 = vshrl.u32 %v393, 16
      %v440 = vshll.u32 %v393, 16
      %v442 = vrot.slane %v440, 1
      %v443 = vor.u32 %v438, %v442
      %v445 = vshrl.u32 %v394, 16
      %v447 = vshll.u32 %v394, 16
      %v449 = vrot.slane %v447, 1
      %v450 = vor.u32 %v445, %v449
      %v459 = vunpack.c.l.b16 %v297
      %v460 = vunpack.c.l.b16 %v298
      %v461 = vunpack.c.l.b16 %v299
      %v462 = vunpack.c.l.b16 %v300
      %v463 = vunpack.c.l.b16 %v301
      %v464 = vunpack.c.l.b16 %v302
      %v465 = vunpack.c.l.b16 %v303
      %v466 = vunpack.c.l.b16 %v304
      %v467 = vpack.c.b16 %v372, %v459
      %v468 = vpack.c.b16 %v374, %v460
      %v469 = vpack.c.b16 %v376, %v461
      %v470 = vpack.c.b16 %v378, %v462
      %v471 = vpack.c.b16 %v380, %v463
      %v472 = vpack.c.b16 %v382, %v464
      %v473 = vpack.c.b16 %v384, %v465
      %v474 = vpack.c.b16 %v386, %v466
      %v475 = vrot.slane %v467, 1
      %v476 = vrot.slane %v468, 1
      %v477 = vrot.slane %v469, 1
      %v478 = vrot.slane %v470, 1
      %v479 = vrot.slane %v471, 1
      %v480 = vrot.slane %v472, 1
      %v481 = vrot.slane %v473, 1
      %v482 = vrot.slane %v474, 1
      %v499 = vunpack.c.l.b16 %v306
      %v500 = vunpack.c.l.b16 %v314
      %v501 = vunpack.c.l.b16 %v307
      %v502 = vunpack.c.l.b16 %v315
      %v503 = vunpack.c.l.b16 %v308
      %v504 = vunpack.c.l.b16 %v316
      %v505 = vunpack.c.l.b16 %v309
      %v506 = vunpack.c.l.b16 %v317
      %v507 = vunpack.c.l.b16 %v310
      %v508 = vunpack.c.l.b16 %v318
      %v509 = vunpack.c.l.b16 %v311
      %v510 = vunpack.c.l.b16 %v319
      %v511 = vunpack.c.l.b16 %v312
      %v512 = vunpack.c.l.b16 %v320
      %v513 = vunpack.c.l.b16 %v313
      %v514 = vunpack.c.l.b16 %v321
      %v515 = vpack.c.b16 %v500, %v499
      %v516 = vpack.c.b16 %v502, %v501
      %v517 = vpack.c.b16 %v504, %v503
      %v518 = vpack.c.b16 %v506, %v505
      %v519 = vpack.c.b16 %v508, %v507
      %v520 = vpack.c.b16 %v510, %v509
      %v521 = vpack.c.b16 %v512, %v511
      %v522 = vpack.c.b16 %v514, %v513
      %v524 = vshrl.u32 %v515, 16
      %v526 = vshll.u32 %v515, 16
      %v528 = vrot.slane %v526, 1
      %v529 = vor.u32 %v524, %v528
      %v531 = vshrl.u32 %v516, 16
      %v533 = vshll.u32 %v516, 16
      %v535 = vrot.slane %v533, 1
      %v536 = vor.u32 %v531, %v535
      %v538 = vshrl.u32 %v517, 16
      %v540 = vshll.u32 %v517, 16
      %v542 = vrot.slane %v540, 1
      %v543 = vor.u32 %v538, %v542
      %v545 = vshrl.u32 %v518, 16
      %v547 = vshll.u32 %v518, 16
      %v549 = vrot.slane %v547, 1
      %v550 = vor.u32 %v545, %v549
      %v552 = vshrl.u32 %v519, 16
      %v554 = vshll.u32 %v519, 16
      %v556 = vrot.slane %v554, 1
      %v557 = vor.u32 %v552, %v556
      %v559 = vshrl.u32 %v520, 16
      %v561 = vshll.u32 %v520, 16
      %v563 = vrot.slane %v561, 1
      %v564 = vor.u32 %v559, %v563
      %v566 = vshrl.u32 %v521, 16
      %v568 = vshll.u32 %v521, 16
      %v570 = vrot.slane %v568, 1
      %v571 = vor.u32 %v566, %v570
      %v573 = vshrl.u32 %v522, 16
      %v575 = vshll.u32 %v522, 16
      %v577 = vrot.slane %v575, 1
      %v578 = vor.u32 %v573, %v577
      %v587 = vunpack.c.l.b16 %v322
      %v588 = vunpack.c.l.b16 %v323
      %v589 = vunpack.c.l.b16 %v324
      %v590 = vunpack.c.l.b16 %v325
      %v591 = vunpack.c.l.b16 %v326
      %v592 = vunpack.c.l.b16 %v327
      %v593 = vunpack.c.l.b16 %v328
      %v594 = vunpack.c.l.b16 %v329
      %v595 = vpack.c.b16 %v500, %v587
      %v596 = vpack.c.b16 %v502, %v588
      %v597 = vpack.c.b16 %v504, %v589
      %v598 = vpack.c.b16 %v506, %v590
      %v599 = vpack.c.b16 %v508, %v591
      %v600 = vpack.c.b16 %v510, %v592
      %v601 = vpack.c.b16 %v512, %v593
      %v602 = vpack.c.b16 %v514, %v594
      %v603 = vrot.slane %v595, 1
      %v604 = vrot.slane %v596, 1
      %v605 = vrot.slane %v597, 1
      %v606 = vrot.slane %v598, 1
      %v607 = vrot.slane %v599, 1
      %v608 = vrot.slane %v600, 1
      %v609 = vrot.slane %v601, 1
      %v610 = vrot.slane %v602, 1
      %v627 = vunpack.c.l.b16 %v331
      %v628 = vunpack.c.l.b16 %v339
      %v629 = vunpack.c.l.b16 %v332
      %v630 = vunpack.c.l.b16 %v340
      %v631 = vunpack.c.l.b16 %v333
      %v632 = vunpack.c.l.b16 %v341
      %v633 = vunpack.c.l.b16 %v334
      %v634 = vunpack.c.l.b16 %v342
      %v635 = vunpack.c.l.b16 %v335
      %v636 = vunpack.c.l.b16 %v343
      %v637 = vunpack.c.l.b16 %v336
      %v638 = vunpack.c.l.b16 %v344
      %v639 = vunpack.c.l.b16 %v337
      %v640 = vunpack.c.l.b16 %v345
      %v641 = vunpack.c.l.b16 %v338
      %v642 = vunpack.c.l.b16 %v346
      %v643 = vpack.c.b16 %v628, %v627
      %v644 = vpack.c.b16 %v630, %v629
      %v645 = vpack.c.b16 %v632, %v631
      %v646 = vpack.c.b16 %v634, %v633
      %v647 = vpack.c.b16 %v636, %v635
      %v648 = vpack.c.b16 %v638, %v637
      %v649 = vpack.c.b16 %v640, %v639
      %v650 = vpack.c.b16 %v642, %v641
      %v652 = vshrl.u32 %v643, 16
      %v654 = vshll.u32 %v643, 16
      %v656 = vrot.slane %v654, 1
      %v657 = vor.u32 %v652, %v656
      %v659 = vshrl.u32 %v644, 16
      %v661 = vshll.u32 %v644, 16
      %v663 = vrot.slane %v661, 1
      %v664 = vor.u32 %v659, %v663
      %v666 = vshrl.u32 %v645, 16
      %v668 = vshll.u32 %v645, 16
      %v670 = vrot.slane %v668, 1
      %v671 = vor.u32 %v666, %v670
      %v673 = vshrl.u32 %v646, 16
      %v675 = vshll.u32 %v646, 16
      %v677 = vrot.slane %v675, 1
      %v678 = vor.u32 %v673, %v677
      %v680 = vshrl.u32 %v647, 16
      %v682 = vshll.u32 %v647, 16
      %v684 = vrot.slane %v682, 1
      %v685 = vor.u32 %v680, %v684
      %v687 = vshrl.u32 %v648, 16
      %v689 = vshll.u32 %v648, 16
      %v691 = vrot.slane %v689, 1
      %v692 = vor.u32 %v687, %v691
      %v694 = vshrl.u32 %v649, 16
      %v696 = vshll.u32 %v649, 16
      %v698 = vrot.slane %v696, 1
      %v699 = vor.u32 %v694, %v698
      %v701 = vshrl.u32 %v650, 16
      %v703 = vshll.u32 %v650, 16
      %v705 = vrot.slane %v703, 1
      %v706 = vor.u32 %v701, %v705
      %v715 = vunpack.c.l.b16 %v347
      %v716 = vunpack.c.l.b16 %v348
      %v717 = vunpack.c.l.b16 %v349
      %v718 = vunpack.c.l.b16 %v350
      %v719 = vunpack.c.l.b16 %v351
      %v720 = vunpack.c.l.b16 %v352
      %v721 = vunpack.c.l.b16 %v353
      %v722 = vunpack.c.l.b16 %v354
      %v723 = vpack.c.b16 %v628, %v715
      %v724 = vpack.c.b16 %v630, %v716
      %v725 = vpack.c.b16 %v632, %v717
      %v726 = vpack.c.b16 %v634, %v718
      %v727 = vpack.c.b16 %v636, %v719
      %v728 = vpack.c.b16 %v638, %v720
      %v729 = vpack.c.b16 %v640, %v721
      %v730 = vpack.c.b16 %v642, %v722
      %v731 = vrot.slane %v723, 1
      %v732 = vrot.slane %v724, 1
      %v733 = vrot.slane %v725, 1
      %v734 = vrot.slane %v726, 1
      %v735 = vrot.slane %v727, 1
      %v736 = vrot.slane %v728, 1
      %v737 = vrot.slane %v729, 1
      %v738 = vrot.slane %v730, 1
      %v739 = vunpack.c.l.b16 %v401
      %v740 = vunpack.c.l.b16 %v475
      %v741 = vunpack.c.l.b16 %v529
      %v742 = vunpack.c.l.b16 %v603
      %v743 = vunpack.c.l.b16 %v657
      %v744 = vunpack.c.l.b16 %v731
      %v745 = vunpack.c.l.b16 %v408
      %v746 = vunpack.c.l.b16 %v476
      %v747 = vunpack.c.l.b16 %v536
      %v748 = vunpack.c.l.b16 %v604
      %v749 = vunpack.c.l.b16 %v664
      %v750 = vunpack.c.l.b16 %v732
      %v751 = vunpack.c.l.b16 %v415
      %v752 = vunpack.c.l.b16 %v477
      %v753 = vunpack.c.l.b16 %v543
      %v754 = vunpack.c.l.b16 %v605
      %v755 = vunpack.c.l.b16 %v671
      %v756 = vunpack.c.l.b16 %v733
      %v757 = vunpack.c.l.b16 %v422
      %v758 = vunpack.c.l.b16 %v478
      %v759 = vunpack.c.l.b16 %v550
      %v760 = vunpack.c.l.b16 %v606
      %v761 = vunpack.c.l.b16 %v678
      %v762 = vunpack.c.l.b16 %v734
      %v763 = vunpack.c.l.b16 %v429
      %v764 = vunpack.c.l.b16 %v479
      %v765 = vunpack.c.l.b16 %v557
      %v766 = vunpack.c.l.b16 %v607
      %v767 = vunpack.c.l.b16 %v685
      %v768 = vunpack.c.l.b16 %v735
      %v769 = vunpack.c.l.b16 %v436
      %v770 = vunpack.c.l.b16 %v480
      %v771 = vunpack.c.l.b16 %v564
      %v772 = vunpack.c.l.b16 %v608
      %v773 = vunpack.c.l.b16 %v692
      %v774 = vunpack.c.l.b16 %v736
      %v775 = vunpack.c.l.b16 %v443
      %v776 = vunpack.c.l.b16 %v481
      %v777 = vunpack.c.l.b16 %v571
      %v778 = vunpack.c.l.b16 %v609
      %v779 = vunpack.c.l.b16 %v699
      %v780 = vunpack.c.l.b16 %v737
      %v781 = vunpack.c.l.b16 %v450
      %v782 = vunpack.c.l.b16 %v482
      %v783 = vunpack.c.l.b16 %v578
      %v784 = vunpack.c.l.b16 %v610
      %v785 = vunpack.c.l.b16 %v706
      %v786 = vunpack.c.l.b16 %v738
      %v787 = vld [vmem:[%s260] sm:$0xf]
      %v788 = vld [vmem:[%s260 + $0x4] sm:$0xf]
      %v789 = vld [vmem:[%s260 + $0x8] sm:$0xf]
      %v790 = vld [vmem:[%s260 + $0xc] sm:$0xf]
      %v791 = vld [vmem:[%s260 + $0x10] sm:$0xf]
      %v792 = vld [vmem:[%s260 + $0x14] sm:$0xf]
      %v793 = vld [vmem:[%s260 + $0x18] sm:$0xf]
      %v794 = vld [vmem:[%s260 + $0x1c] sm:$0xf]
      %v795 = vld [vmem:[%s260 + $0x20] sm:$0xf]
      %v796 = vld [vmem:[%s260 + $0x24] sm:$0xf]
      %v797 = vld [vmem:[%s260 + $0x28] sm:$0xf]
      %v798 = vld [vmem:[%s260 + $0x2c] sm:$0xf]
      %v799 = vld [vmem:[%s260 + $0x30] sm:$0xf]
      %v800 = vld [vmem:[%s260 + $0x34] sm:$0xf]
      %v801 = vld [vmem:[%s260 + $0x38] sm:$0xf]
      %v802 = vld [vmem:[%s260 + $0x3c] sm:$0xf]
      %v803 = vld [vmem:[%s260 + $0x40] sm:$0xf]
      %v804 = vld [vmem:[%s260 + $0x44] sm:$0xf]
      %v805 = vld [vmem:[%s260 + $0x48] sm:$0xf]
      %v806 = vld [vmem:[%s260 + $0x4c] sm:$0xf]
      %v807 = vld [vmem:[%s260 + $0x50] sm:$0xf]
      %v808 = vld [vmem:[%s260 + $0x54] sm:$0xf]
      %v809 = vld [vmem:[%s260 + $0x58] sm:$0xf]
      %v810 = vld [vmem:[%s260 + $0x5c] sm:$0xf]
      %v811 = vld [vmem:[%s260 + $0x60] sm:$0xf]
      %v812 = vld [vmem:[%s260 + $0x64] sm:$0xf]
      %v813 = vld [vmem:[%s260 + $0x68] sm:$0xf]
      %v814 = vld [vmem:[%s260 + $0x6c] sm:$0xf]
      %v815 = vld [vmem:[%s260 + $0x70] sm:$0xf]
      %v816 = vld [vmem:[%s260 + $0x74] sm:$0xf]
      %v817 = vld [vmem:[%s260 + $0x78] sm:$0xf]
      %v818 = vld [vmem:[%s260 + $0x7c] sm:$0xf]
      %v819 = vld [vmem:[%s260 + $0x80] sm:$0xf]
      %v820 = vld [vmem:[%s260 + $0x84] sm:$0xf]
      %v821 = vld [vmem:[%s260 + $0x88] sm:$0xf]
      %v822 = vld [vmem:[%s260 + $0x8c] sm:$0xf]
      %v823 = vld [vmem:[%s260 + $0x90] sm:$0xf]
      %v824 = vld [vmem:[%s260 + $0x94] sm:$0xf]
      %v825 = vld [vmem:[%s260 + $0x98] sm:$0xf]
      %v826 = vld [vmem:[%s260 + $0x9c] sm:$0xf]
      %v827 = vld [vmem:[%s260 + $0xa0] sm:$0xf]
      %v828 = vld [vmem:[%s260 + $0xa4] sm:$0xf]
      %v829 = vld [vmem:[%s260 + $0xa8] sm:$0xf]
      %v830 = vld [vmem:[%s260 + $0xac] sm:$0xf]
      %v831 = vld [vmem:[%s260 + $0xb0] sm:$0xf]
      %v832 = vld [vmem:[%s260 + $0xb4] sm:$0xf]
      %v833 = vld [vmem:[%s260 + $0xb8] sm:$0xf]
      %v834 = vld [vmem:[%s260 + $0xbc] sm:$0xf]
      %v835 = vld [vmem:[%s260 + $0xc0] sm:$0xf]
      %v836 = vld [vmem:[%s260 + $0xc4] sm:$0xf]
      %v837 = vld [vmem:[%s260 + $0xc8] sm:$0xf]
      %v838 = vld [vmem:[%s260 + $0xcc] sm:$0xf]
      %v839 = vld [vmem:[%s260 + $0xd0] sm:$0xf]
      %v840 = vld [vmem:[%s260 + $0xd4] sm:$0xf]
      %v841 = vld [vmem:[%s260 + $0xd8] sm:$0xf]
      %v842 = vld [vmem:[%s260 + $0xdc] sm:$0xf]
      %v843 = vld [vmem:[%s260 + $0xe0] sm:$0xf]
      %v844 = vld [vmem:[%s260 + $0xe4] sm:$0xf]
      %v845 = vld [vmem:[%s260 + $0xe8] sm:$0xf]
      %v846 = vld [vmem:[%s260 + $0xec] sm:$0xf]
      %v847 = vld [vmem:[%s260 + $0xf0] sm:$0xf]
      %v848 = vld [vmem:[%s260 + $0xf4] sm:$0xf]
      %v849 = vld [vmem:[%s260 + $0xf8] sm:$0xf]
      %v850 = vld [vmem:[%s260 + $0xfc] sm:$0xf]
      %v851 = vld [vmem:[%s260 + $0x100] sm:$0xf]
      %v852 = vld [vmem:[%s260 + $0x104] sm:$0xf]
      %v853 = vld [vmem:[%s260 + $0x108] sm:$0xf]
      %v854 = vld [vmem:[%s260 + $0x10c] sm:$0xf]
      %v855 = vld [vmem:[%s260 + $0x110] sm:$0xf]
      %v856 = vld [vmem:[%s260 + $0x114] sm:$0xf]
      %v857 = vld [vmem:[%s260 + $0x118] sm:$0xf]
      %v858 = vld [vmem:[%s260 + $0x11c] sm:$0xf]
      %v859 = vld [vmem:[%s260 + $0x120] sm:$0xf]
      %v860 = vld [vmem:[%s260 + $0x124] sm:$0xf]
      %v861 = vld [vmem:[%s260 + $0x128] sm:$0xf]
      %v862 = vld [vmem:[%s260 + $0x12c] sm:$0xf]
      %v863 = vld [vmem:[%s260 + $0x130] sm:$0xf]
      %v864 = vld [vmem:[%s260 + $0x134] sm:$0xf]
      %v865 = vld [vmem:[%s260 + $0x138] sm:$0xf]
      %v866 = vld [vmem:[%s260 + $0x13c] sm:$0xf]
      %v867 = vld [vmem:[%s260 + $0x140] sm:$0xf]
      %v868 = vld [vmem:[%s260 + $0x144] sm:$0xf]
      %v869 = vld [vmem:[%s260 + $0x148] sm:$0xf]
      %v870 = vld [vmem:[%s260 + $0x14c] sm:$0xf]
      %v871 = vld [vmem:[%s260 + $0x150] sm:$0xf]
      %v872 = vld [vmem:[%s260 + $0x154] sm:$0xf]
      %v873 = vld [vmem:[%s260 + $0x158] sm:$0xf]
      %v874 = vld [vmem:[%s260 + $0x15c] sm:$0xf]
      %v875 = vld [vmem:[%s260 + $0x160] sm:$0xf]
      %v876 = vld [vmem:[%s260 + $0x164] sm:$0xf]
      %v877 = vld [vmem:[%s260 + $0x168] sm:$0xf]
      %v878 = vld [vmem:[%s260 + $0x16c] sm:$0xf]
      %v879 = vld [vmem:[%s260 + $0x170] sm:$0xf]
      %v880 = vld [vmem:[%s260 + $0x174] sm:$0xf]
      %v881 = vld [vmem:[%s260 + $0x178] sm:$0xf]
      %v882 = vld [vmem:[%s260 + $0x17c] sm:$0xf]
      %v883 = vld [vmem:[%s260 + $0x180] sm:$0xf]
      %v884 = vld [vmem:[%s260 + $0x184] sm:$0xf]
      %v885 = vld [vmem:[%s260 + $0x188] sm:$0xf]
      %v886 = vld [vmem:[%s260 + $0x18c] sm:$0xf]
      %v887 = vld [vmem:[%s260 + $0x190] sm:$0xf]
      %v888 = vld [vmem:[%s260 + $0x194] sm:$0xf]
      %v889 = vld [vmem:[%s260 + $0x198] sm:$0xf]
      %v890 = vld [vmem:[%s260 + $0x19c] sm:$0xf]
      %v891 = vld [vmem:[%s260 + $0x1a0] sm:$0xf]
      %v892 = vld [vmem:[%s260 + $0x1a4] sm:$0xf]
      %v893 = vld [vmem:[%s260 + $0x1a8] sm:$0xf]
      %v894 = vld [vmem:[%s260 + $0x1ac] sm:$0xf]
      %v895 = vld [vmem:[%s260 + $0x1b0] sm:$0xf]
      %v896 = vld [vmem:[%s260 + $0x1b4] sm:$0xf]
      %v897 = vld [vmem:[%s260 + $0x1b8] sm:$0xf]
      %v898 = vld [vmem:[%s260 + $0x1bc] sm:$0xf]
      %v899 = vld [vmem:[%s260 + $0x1c0] sm:$0xf]
      %v900 = vld [vmem:[%s260 + $0x1c4] sm:$0xf]
      %v901 = vld [vmem:[%s260 + $0x1c8] sm:$0xf]
      %v902 = vld [vmem:[%s260 + $0x1cc] sm:$0xf]
      %v903 = vld [vmem:[%s260 + $0x1d0] sm:$0xf]
      %v904 = vld [vmem:[%s260 + $0x1d4] sm:$0xf]
      %v905 = vld [vmem:[%s260 + $0x1d8] sm:$0xf]
      %v906 = vld [vmem:[%s260 + $0x1dc] sm:$0xf]
      %v907 = vld [vmem:[%s260 + $0x1e0] sm:$0xf]
      %v908 = vld [vmem:[%s260 + $0x1e4] sm:$0xf]
      %v909 = vld [vmem:[%s260 + $0x1e8] sm:$0xf]
      %v910 = vld [vmem:[%s260 + $0x1ec] sm:$0xf]
      %v911 = vld [vmem:[%s260 + $0x1f0] sm:$0xf]
      %v912 = vld [vmem:[%s260 + $0x1f4] sm:$0xf]
      %v913 = vld [vmem:[%s260 + $0x1f8] sm:$0xf]
      %v914 = vld [vmem:[%s260 + $0x1fc] sm:$0xf]
      %v915 = vld [vmem:[%s260 + $0x200] sm:$0xf]
      %v916 = vld [vmem:[%s260 + $0x204] sm:$0xf]
      %v917 = vld [vmem:[%s260 + $0x208] sm:$0xf]
      %v918 = vld [vmem:[%s260 + $0x20c] sm:$0xf]
      %v919 = vld [vmem:[%s260 + $0x210] sm:$0xf]
      %v920 = vld [vmem:[%s260 + $0x214] sm:$0xf]
      %v921 = vld [vmem:[%s260 + $0x218] sm:$0xf]
      %v922 = vld [vmem:[%s260 + $0x21c] sm:$0xf]
      %v923 = vld [vmem:[%s260 + $0x220] sm:$0xf]
      %v924 = vld [vmem:[%s260 + $0x224] sm:$0xf]
      %v925 = vld [vmem:[%s260 + $0x228] sm:$0xf]
      %v926 = vld [vmem:[%s260 + $0x22c] sm:$0xf]
      %v927 = vld [vmem:[%s260 + $0x230] sm:$0xf]
      %v928 = vld [vmem:[%s260 + $0x234] sm:$0xf]
      %v929 = vld [vmem:[%s260 + $0x238] sm:$0xf]
      %v930 = vld [vmem:[%s260 + $0x23c] sm:$0xf]
      %v931 = vld [vmem:[%s263] sm:$0x1]
      %v933 = vlaneseq
      %v934 = vshrl.u32 %v933, 7
      %v935 = vsub.s32 0, %v934
      %v936 = vrot.slane %v931, %v935
      %v938 = vpack.c.b16 %v373, %v371
      %v939 = vpack.c.b16 %v745, %v739
      %v940 = vpack.c.b16 %v746, %v740
      %v941 = vpack.c.b16 %v501, %v499
      %v942 = vpack.c.b16 %v747, %v741
      %v943 = vpack.c.b16 %v748, %v742
      %v944 = vpack.c.b16 %v629, %v627
      %v945 = vpack.c.b16 %v749, %v743
      %v946 = vpack.c.b16 %v750, %v744
      %v947 = vpack.c.b16 %v377, %v375
      %v948 = vpack.c.b16 %v757, %v751
      %v949 = vpack.c.b16 %v758, %v752
      %v950 = vpack.c.b16 %v505, %v503
      %v951 = vpack.c.b16 %v759, %v753
      %v952 = vpack.c.b16 %v760, %v754
      %v953 = vpack.c.b16 %v633, %v631
      %v954 = vpack.c.b16 %v761, %v755
      %v955 = vpack.c.b16 %v762, %v756
      %v956 = vpack.c.b16 %v381, %v379
      %v957 = vpack.c.b16 %v769, %v763
      %v958 = vpack.c.b16 %v770, %v764
      %v959 = vpack.c.b16 %v509, %v507
      %v960 = vpack.c.b16 %v771, %v765
      %v961 = vpack.c.b16 %v772, %v766
      %v962 = vpack.c.b16 %v637, %v635
      %v963 = vpack.c.b16 %v773, %v767
      %v964 = vpack.c.b16 %v774, %v768
      %v965 = vpack.c.b16 %v385, %v383
      %v966 = vpack.c.b16 %v781, %v775
      %v967 = vpack.c.b16 %v782, %v776
      %v968 = vpack.c.b16 %v513, %v511
      %v969 = vpack.c.b16 %v783, %v777
      %v970 = vpack.c.b16 %v784, %v778
      %v971 = vpack.c.b16 %v641, %v639
      %v972 = vpack.c.b16 %v785, %v779
      %v973 = vpack.c.b16 %v786, %v780
      %v1154 = vunpack.c.l.b16 %v787
      %v1155 = vunpack.c.l.b16 %v788
      %v1156 = vunpack.c.l.b16 %v789
      %v1157 = vunpack.c.l.b16 %v790
      %v1158 = vunpack.c.l.b16 %v791
      %v1159 = vunpack.c.l.b16 %v792
      %v1160 = vunpack.c.l.b16 %v793
      %v1161 = vunpack.c.l.b16 %v794
      %v1162 = vunpack.c.l.b16 %v795
      %v1163 = vunpack.c.l.b16 %v796
      %v1164 = vunpack.c.l.b16 %v797
      %v1165 = vunpack.c.l.b16 %v798
      %v1166 = vunpack.c.l.b16 %v799
      %v1167 = vunpack.c.l.b16 %v800
      %v1168 = vunpack.c.l.b16 %v801
      %v1169 = vunpack.c.l.b16 %v802
      %v1170 = vunpack.c.l.b16 %v803
      %v1171 = vunpack.c.l.b16 %v804
      %v1172 = vunpack.c.l.b16 %v805
      %v1173 = vunpack.c.l.b16 %v806
      %v1174 = vunpack.c.l.b16 %v807
      %v1175 = vunpack.c.l.b16 %v808
      %v1176 = vunpack.c.l.b16 %v809
      %v1177 = vunpack.c.l.b16 %v810
      %v1178 = vunpack.c.l.b16 %v811
      %v1179 = vunpack.c.l.b16 %v812
      %v1180 = vunpack.c.l.b16 %v813
      %v1181 = vunpack.c.l.b16 %v814
      %v1182 = vunpack.c.l.b16 %v815
      %v1183 = vunpack.c.l.b16 %v816
      %v1184 = vunpack.c.l.b16 %v817
      %v1185 = vunpack.c.l.b16 %v818
      %v1186 = vunpack.c.l.b16 %v819
      %v1187 = vunpack.c.l.b16 %v820
      %v1188 = vunpack.c.l.b16 %v821
      %v1189 = vunpack.c.l.b16 %v822
      %v1190 = vunpack.c.l.b16 %v823
      %v1191 = vunpack.c.l.b16 %v824
      %v1192 = vunpack.c.l.b16 %v825
      %v1193 = vunpack.c.l.b16 %v826
      %v1194 = vunpack.c.l.b16 %v827
      %v1195 = vunpack.c.l.b16 %v828
      %v1196 = vunpack.c.l.b16 %v829
      %v1197 = vunpack.c.l.b16 %v830
      %v1198 = vunpack.c.l.b16 %v831
      %v1199 = vunpack.c.l.b16 %v832
      %v1200 = vunpack.c.l.b16 %v833
      %v1201 = vunpack.c.l.b16 %v834
      %v1202 = vunpack.c.l.b16 %v835
      %v1203 = vunpack.c.l.b16 %v836
      %v1204 = vunpack.c.l.b16 %v837
      %v1205 = vunpack.c.l.b16 %v838
      %v1206 = vunpack.c.l.b16 %v839
      %v1207 = vunpack.c.l.b16 %v840
      %v1208 = vunpack.c.l.b16 %v841
      %v1209 = vunpack.c.l.b16 %v842
      %v1210 = vunpack.c.l.b16 %v843
      %v1211 = vunpack.c.l.b16 %v844
      %v1212 = vunpack.c.l.b16 %v845
      %v1213 = vunpack.c.l.b16 %v846
      %v1214 = vunpack.c.l.b16 %v847
      %v1215 = vunpack.c.l.b16 %v848
      %v1216 = vunpack.c.l.b16 %v849
      %v1217 = vunpack.c.l.b16 %v850
      %v1218 = vunpack.c.l.b16 %v851
      %v1219 = vunpack.c.l.b16 %v852
      %v1220 = vunpack.c.l.b16 %v853
      %v1221 = vunpack.c.l.b16 %v854
      %v1222 = vunpack.c.l.b16 %v855
      %v1223 = vunpack.c.l.b16 %v856
      %v1224 = vunpack.c.l.b16 %v857
      %v1225 = vunpack.c.l.b16 %v858
      %v1226 = vunpack.c.l.b16 %v859
      %v1227 = vunpack.c.l.b16 %v860
      %v1228 = vunpack.c.l.b16 %v861
      %v1229 = vunpack.c.l.b16 %v862
      %v1230 = vunpack.c.l.b16 %v863
      %v1231 = vunpack.c.l.b16 %v864
      %v1232 = vunpack.c.l.b16 %v865
      %v1233 = vunpack.c.l.b16 %v866
      %v1234 = vunpack.c.l.b16 %v867
      %v1235 = vunpack.c.l.b16 %v868
      %v1236 = vunpack.c.l.b16 %v869
      %v1237 = vunpack.c.l.b16 %v870
      %v1238 = vunpack.c.l.b16 %v871
      %v1239 = vunpack.c.l.b16 %v872
      %v1240 = vunpack.c.l.b16 %v873
      %v1241 = vunpack.c.l.b16 %v874
      %v1242 = vunpack.c.l.b16 %v875
      %v1243 = vunpack.c.l.b16 %v876
      %v1244 = vunpack.c.l.b16 %v877
      %v1245 = vunpack.c.l.b16 %v878
      %v1246 = vunpack.c.l.b16 %v879
      %v1247 = vunpack.c.l.b16 %v880
      %v1248 = vunpack.c.l.b16 %v881
      %v1249 = vunpack.c.l.b16 %v882
      %v1250 = vunpack.c.l.b16 %v883
      %v1251 = vunpack.c.l.b16 %v884
      %v1252 = vunpack.c.l.b16 %v885
      %v1253 = vunpack.c.l.b16 %v886
      %v1254 = vunpack.c.l.b16 %v887
      %v1255 = vunpack.c.l.b16 %v888
      %v1256 = vunpack.c.l.b16 %v889
      %v1257 = vunpack.c.l.b16 %v890
      %v1258 = vunpack.c.l.b16 %v891
      %v1259 = vunpack.c.l.b16 %v892
      %v1260 = vunpack.c.l.b16 %v893
      %v1261 = vunpack.c.l.b16 %v894
      %v1262 = vunpack.c.l.b16 %v895
      %v1263 = vunpack.c.l.b16 %v896
      %v1264 = vunpack.c.l.b16 %v897
      %v1265 = vunpack.c.l.b16 %v898
      %v1266 = vunpack.c.l.b16 %v899
      %v1267 = vunpack.c.l.b16 %v900
      %v1268 = vunpack.c.l.b16 %v901
      %v1269 = vunpack.c.l.b16 %v902
      %v1270 = vunpack.c.l.b16 %v903
      %v1271 = vunpack.c.l.b16 %v904
      %v1272 = vunpack.c.l.b16 %v905
      %v1273 = vunpack.c.l.b16 %v906
      %v1274 = vunpack.c.l.b16 %v907
      %v1275 = vunpack.c.l.b16 %v908
      %v1276 = vunpack.c.l.b16 %v909
      %v1277 = vunpack.c.l.b16 %v910
      %v1278 = vunpack.c.l.b16 %v911
      %v1279 = vunpack.c.l.b16 %v912
      %v1280 = vunpack.c.l.b16 %v913
      %v1281 = vunpack.c.l.b16 %v914
      %v1282 = vunpack.c.l.b16 %v915
      %v1283 = vunpack.c.l.b16 %v916
      %v1284 = vunpack.c.l.b16 %v917
      %v1285 = vunpack.c.l.b16 %v918
      %v1286 = vunpack.c.l.b16 %v919
      %v1287 = vunpack.c.l.b16 %v920
      %v1288 = vunpack.c.l.b16 %v921
      %v1289 = vunpack.c.l.b16 %v922
      %v1290 = vunpack.c.l.b16 %v923
      %v1291 = vunpack.c.l.b16 %v924
      %v1292 = vunpack.c.l.b16 %v925
      %v1293 = vunpack.c.l.b16 %v926
      %v1294 = vunpack.c.l.b16 %v927
      %v1295 = vunpack.c.l.b16 %v928
      %v1296 = vunpack.c.l.b16 %v929
      %v1297 = vunpack.c.l.b16 %v930
      %v1298 = vpack.c.b16 %v1155, %v1154
      %v1299 = vpack.c.b16 %v1157, %v1156
      %v1300 = vpack.c.b16 %v1159, %v1158
      %v1301 = vpack.c.b16 %v1161, %v1160
      %v1302 = vpack.c.b16 %v1163, %v1162
      %v1303 = vpack.c.b16 %v1165, %v1164
      %v1304 = vpack.c.b16 %v1167, %v1166
      %v1305 = vpack.c.b16 %v1169, %v1168
      %v1306 = vpack.c.b16 %v1171, %v1170
      %v1307 = vpack.c.b16 %v1173, %v1172
      %v1308 = vpack.c.b16 %v1175, %v1174
      %v1309 = vpack.c.b16 %v1177, %v1176
      %v1310 = vpack.c.b16 %v1179, %v1178
      %v1311 = vpack.c.b16 %v1181, %v1180
      %v1312 = vpack.c.b16 %v1183, %v1182
      %v1313 = vpack.c.b16 %v1185, %v1184
      %v1314 = vpack.c.b16 %v1187, %v1186
      %v1315 = vpack.c.b16 %v1189, %v1188
      %v1316 = vpack.c.b16 %v1191, %v1190
      %v1317 = vpack.c.b16 %v1193, %v1192
      %v1318 = vpack.c.b16 %v1195, %v1194
      %v1319 = vpack.c.b16 %v1197, %v1196
      %v1320 = vpack.c.b16 %v1199, %v1198
      %v1321 = vpack.c.b16 %v1201, %v1200
      %v1322 = vpack.c.b16 %v1203, %v1202
      %v1323 = vpack.c.b16 %v1205, %v1204
      %v1324 = vpack.c.b16 %v1207, %v1206
      %v1325 = vpack.c.b16 %v1209, %v1208
      %v1326 = vpack.c.b16 %v1211, %v1210
      %v1327 = vpack.c.b16 %v1213, %v1212
      %v1328 = vpack.c.b16 %v1215, %v1214
      %v1329 = vpack.c.b16 %v1217, %v1216
      %v1330 = vpack.c.b16 %v1219, %v1218
      %v1331 = vpack.c.b16 %v1221, %v1220
      %v1332 = vpack.c.b16 %v1223, %v1222
      %v1333 = vpack.c.b16 %v1225, %v1224
      %v1334 = vpack.c.b16 %v1227, %v1226
      %v1335 = vpack.c.b16 %v1229, %v1228
      %v1336 = vpack.c.b16 %v1231, %v1230
      %v1337 = vpack.c.b16 %v1233, %v1232
      %v1338 = vpack.c.b16 %v1235, %v1234
      %v1339 = vpack.c.b16 %v1237, %v1236
      %v1340 = vpack.c.b16 %v1239, %v1238
      %v1341 = vpack.c.b16 %v1241, %v1240
      %v1342 = vpack.c.b16 %v1243, %v1242
      %v1343 = vpack.c.b16 %v1245, %v1244
      %v1344 = vpack.c.b16 %v1247, %v1246
      %v1345 = vpack.c.b16 %v1249, %v1248
      %v1346 = vpack.c.b16 %v1251, %v1250
      %v1347 = vpack.c.b16 %v1253, %v1252
      %v1348 = vpack.c.b16 %v1255, %v1254
      %v1349 = vpack.c.b16 %v1257, %v1256
      %v1350 = vpack.c.b16 %v1259, %v1258
      %v1351 = vpack.c.b16 %v1261, %v1260
      %v1352 = vpack.c.b16 %v1263, %v1262
      %v1353 = vpack.c.b16 %v1265, %v1264
      %v1354 = vpack.c.b16 %v1267, %v1266
      %v1355 = vpack.c.b16 %v1269, %v1268
      %v1356 = vpack.c.b16 %v1271, %v1270
      %v1357 = vpack.c.b16 %v1273, %v1272
      %v1358 = vpack.c.b16 %v1275, %v1274
      %v1359 = vpack.c.b16 %v1277, %v1276
      %v1360 = vpack.c.b16 %v1279, %v1278
      %v1361 = vpack.c.b16 %v1281, %v1280
      %v1362 = vpack.c.b16 %v1283, %v1282
      %v1363 = vpack.c.b16 %v1285, %v1284
      %v1364 = vpack.c.b16 %v1287, %v1286
      %v1365 = vpack.c.b16 %v1289, %v1288
      %v1366 = vpack.c.b16 %v1291, %v1290
      %v1367 = vpack.c.b16 %v1293, %v1292
      %v1368 = vpack.c.b16 %v1295, %v1294
      %v1369 = vpack.c.b16 %v1297, %v1296
      %1442 = vmatprep.subr.bf16.mxu0 0
      %1443 = vmatpush1.bf16.msra.mxu0 %v1298
      %1444 = vmatprep.subr.bf16.mxu0 0
      %1445 = vmatpush1.bf16.msra.mxu0 %v1299
      %1446 = vmatprep.subr.bf16.mxu0 0
      %1447 = vmatpush1.bf16.msra.mxu0 %v1300
      %1448 = vmatprep.subr.bf16.mxu0 0
      %1449 = vmatpush1.bf16.msra.mxu0 %v1301
      %1450 = vmatprep.subr.bf16.mxu0 0
      %1451 = vmatpush1.bf16.msra.mxu0 %v1302
      %1452 = vmatprep.subr.bf16.mxu0 0
      %1453 = vmatpush1.bf16.msra.mxu0 %v1303
      %1454 = vmatprep.subr.bf16.mxu0 0
      %1455 = vmatpush1.bf16.msra.mxu0 %v1304
      %1456 = vmatprep.subr.bf16.mxu0 0
      %1457 = vmatpush1.bf16.msra.mxu0 %v1305
      %1458 = vmatprep.subr.bf16.mxu0 0
      %1459 = vmatpush1.bf16.msra.mxu0 %v1306
      %1460 = vmatprep.subr.bf16.mxu0 0
      %1461 = vmatpush1.bf16.msra.mxu0 %v1307
      %1462 = vmatprep.subr.bf16.mxu0 0
      %1463 = vmatpush1.bf16.msra.mxu0 %v1308
      %1464 = vmatprep.subr.bf16.mxu0 0
      %1465 = vmatpush1.bf16.msra.mxu0 %v1309
      %1466 = vmatprep.subr.bf16.mxu0 0
      %1467 = vmatpush1.bf16.msra.mxu0 %v1310
      %1468 = vmatprep.subr.bf16.mxu0 0
      %1469 = vmatpush1.bf16.msra.mxu0 %v1311
      %1470 = vmatprep.subr.bf16.mxu0 0
      %1471 = vmatpush1.bf16.msra.mxu0 %v1312
      %1472 = vmatprep.subr.bf16.mxu0 0
      %1473 = vmatpush1.bf16.msra.mxu0 %v1313
      %1474 = vmatprep.mubr.bf16.mxu0 %v939
      %1475 = vmatmul.mubr.bf16.gmra.mrb[0].mxu0 %v938
      %v1476 = vpop.f32.mrb[0].mxu0
      %v1477 = vadd.f32 %v936, %v1476
      %v1478 = vpop.f32.mrb[0].mxu0
      %v1479 = vpop.f32.mrb[0].mxu0
      %v1480 = vadd.f32 %v936, %v1479
      %v1481 = vpop.f32.mrb[0].mxu0
      %1482 = vmatprep.mubr.bf16.mxu0 %v948
      %1483 = vmatmul.mubr.bf16.gmra.mrb[0].mxu0 %v947
      %v1484 = vpop.f32.mrb[0].mxu0
      %v1485 = vadd.f32 %v936, %v1484
      %v1486 = vpop.f32.mrb[0].mxu0
      %v1487 = vpop.f32.mrb[0].mxu0
      %v1488 = vadd.f32 %v936, %v1487
      %v1489 = vpop.f32.mrb[0].mxu0
      %1490 = vmatprep.mubr.bf16.mxu0 %v957
      %1491 = vmatmul.mubr.bf16.gmra.mrb[0].mxu0 %v956
      %v1492 = vpop.f32.mrb[0].mxu0
      %v1493 = vadd.f32 %v936, %v1492
      %v1494 = vpop.f32.mrb[0].mxu0
      %v1495 = vpop.f32.mrb[0].mxu0
      %v1496 = vadd.f32 %v936, %v1495
      %v1497 = vpop.f32.mrb[0].mxu0
      %1498 = vmatprep.mubr.bf16.mxu0 %v966
      %1499 = vmatmul.mubr.bf16.gmra.mrb[0].mxu0 %v965
      %v1500 = vpop.f32.mrb[0].mxu0
      %v1501 = vadd.f32 %v936, %v1500
      %v1502 = vpop.f32.mrb[0].mxu0
      %v1503 = vpop.f32.mrb[0].mxu0
      %v1504 = vadd.f32 %v936, %v1503
      %v1505 = vpop.f32.mrb[0].mxu0
      %1506 = vdwg.mxu0
      %1507 = vmatprep.subr.bf16.mxu0 0
      %1508 = vmatpush1.bf16.msra.mxu0 %v1314
      %1509 = vmatprep.subr.bf16.mxu0 0
      %1510 = vmatpush1.bf16.msra.mxu0 %v1315
      %1511 = vmatprep.subr.bf16.mxu0 0
      %1512 = vmatpush1.bf16.msra.mxu0 %v1316
      %1513 = vmatprep.subr.bf16.mxu0 0
      %1514 = vmatpush1.bf16.msra.mxu0 %v1317
      %1515 = vmatprep.subr.bf16.mxu0 0
      %1516 = vmatpush1.bf16.msra.mxu0 %v1318
      %1517 = vmatprep.subr.bf16.mxu0 0
      %1518 = vmatpush1.bf16.msra.mxu0 %v1319
      %1519 = vmatprep.subr.bf16.mxu0 0
      %1520 = vmatpush1.bf16.msra.mxu0 %v1320
      %1521 = vmatprep.subr.bf16.mxu0 0
      %1522 = vmatpush1.bf16.msra.mxu0 %v1321
      %1523 = vmatprep.subr.bf16.mxu0 0
      %1524 = vmatpush1.bf16.msra.mxu0 %v1322
      %1525 = vmatprep.subr.bf16.mxu0 0
      %1526 = vmatpush1.bf16.msra.mxu0 %v1323
      %1527 = vmatprep.subr.bf16.mxu0 0
      %1528 = vmatpush1.bf16.msra.mxu0 %v1324
      %1529 = vmatprep.subr.bf16.mxu0 0
      %1530 = vmatpush1.bf16.msra.mxu0 %v1325
      %1531 = vmatprep.subr.bf16.mxu0 0
      %1532 = vmatpush1.bf16.msra.mxu0 %v1326
      %1533 = vmatprep.subr.bf16.mxu0 0
      %1534 = vmatpush1.bf16.msra.mxu0 %v1327
      %1535 = vmatprep.subr.bf16.mxu0 0
      %1536 = vmatpush1.bf16.msra.mxu0 %v1328
      %1537 = vmatprep.subr.bf16.mxu0 0
      %1538 = vmatpush1.bf16.msra.mxu0 %v1329
      %1539 = vmatprep.mubr.bf16.mxu0 %v941
      %1540 = vmatmul.mubr.bf16.gmra.mrb[0].mxu0 %v940
      %v1541 = vpop.f32.mrb[0].mxu0
      %v1542 = vadd.f32 %v1477, %v1541
      %v1543 = vpop.f32.mrb[0].mxu0
      %v1544 = vpop.f32.mrb[0].mxu0
      %v1545 = vadd.f32 %v1480, %v1544
      %v1546 = vpop.f32.mrb[0].mxu0
      %1547 = vmatprep.mubr.bf16.mxu0 %v950
      %1548 = vmatmul.mubr.bf16.gmra.mrb[0].mxu0 %v949
      %v1549 = vpop.f32.mrb[0].mxu0
      %v1550 = vadd.f32 %v1485, %v1549
      %v1551 = vpop.f32.mrb[0].mxu0
      %v1552 = vpop.f32.mrb[0].mxu0
      %v1553 = vadd.f32 %v1488, %v1552
      %v1554 = vpop.f32.mrb[0].mxu0
      %1555 = vmatprep.mubr.bf16.mxu0 %v959
      %1556 = vmatmul.mubr.bf16.gmra.mrb[0].mxu0 %v958
      %v1557 = vpop.f32.mrb[0].mxu0
      %v1558 = vadd.f32 %v1493, %v1557
      %v1559 = vpop.f32.mrb[0].mxu0
      %v1560 = vpop.f32.mrb[0].mxu0
      %v1561 = vadd.f32 %v1496, %v1560
      %v1562 = vpop.f32.mrb[0].mxu0
      %1563 = vmatprep.mubr.bf16.mxu0 %v968
      %1564 = vmatmul.mubr.bf16.gmra.mrb[0].mxu0 %v967
      %v1565 = vpop.f32.mrb[0].mxu0
      %v1566 = vadd.f32 %v1501, %v1565
      %v1567 = vpop.f32.mrb[0].mxu0
      %v1568 = vpop.f32.mrb[0].mxu0
      %v1569 = vadd.f32 %v1504, %v1568
      %v1570 = vpop.f32.mrb[0].mxu0
      %1571 = vdwg.mxu0
      %1572 = vmatprep.subr.bf16.mxu0 0
      %1573 = vmatpush1.bf16.msra.mxu0 %v1330
      %1574 = vmatprep.subr.bf16.mxu0 0
      %1575 = vmatpush1.bf16.msra.mxu0 %v1331
      %1576 = vmatprep.subr.bf16.mxu0 0
      %1577 = vmatpush1.bf16.msra.mxu0 %v1332
      %1578 = vmatprep.subr.bf16.mxu0 0
      %1579 = vmatpush1.bf16.msra.mxu0 %v1333
      %1580 = vmatprep.subr.bf16.mxu0 0
      %1581 = vmatpush1.bf16.msra.mxu0 %v1334
      %1582 = vmatprep.subr.bf16.mxu0 0
      %1583 = vmatpush1.bf16.msra.mxu0 %v1335
      %1584 = vmatprep.subr.bf16.mxu0 0
      %1585 = vmatpush1.bf16.msra.mxu0 %v1336
      %1586 = vmatprep.subr.bf16.mxu0 0
      %1587 = vmatpush1.bf16.msra.mxu0 %v1337
      %1588 = vmatprep.subr.bf16.mxu0 0
      %1589 = vmatpush1.bf16.msra.mxu0 %v1338
      %1590 = vmatprep.subr.bf16.mxu0 0
      %1591 = vmatpush1.bf16.msra.mxu0 %v1339
      %1592 = vmatprep.subr.bf16.mxu0 0
      %1593 = vmatpush1.bf16.msra.mxu0 %v1340
      %1594 = vmatprep.subr.bf16.mxu0 0
      %1595 = vmatpush1.bf16.msra.mxu0 %v1341
      %1596 = vmatprep.subr.bf16.mxu0 0
      %1597 = vmatpush1.bf16.msra.mxu0 %v1342
      %1598 = vmatprep.subr.bf16.mxu0 0
      %1599 = vmatpush1.bf16.msra.mxu0 %v1343
      %1600 = vmatprep.subr.bf16.mxu0 0
      %1601 = vmatpush1.bf16.msra.mxu0 %v1344
      %1602 = vmatprep.subr.bf16.mxu0 0
      %1603 = vmatpush1.bf16.msra.mxu0 %v1345
      %1604 = vmatprep.mubr.bf16.mxu0 %v943
      %1605 = vmatmul.mubr.bf16.gmra.mrb[0].mxu0 %v942
      %v1606 = vpop.f32.mrb[0].mxu0
      %v1607 = vadd.f32 %v1542, %v1606
      %v1608 = vpop.f32.mrb[0].mxu0
      %v1609 = vpop.f32.mrb[0].mxu0
      %v1610 = vadd.f32 %v1545, %v1609
      %v1611 = vpop.f32.mrb[0].mxu0
      %1612 = vmatprep.mubr.bf16.mxu0 %v952
      %1613 = vmatmul.mubr.bf16.gmra.mrb[0].mxu0 %v951
      %v1614 = vpop.f32.mrb[0].mxu0
      %v1615 = vadd.f32 %v1550, %v1614
      %v1616 = vpop.f32.mrb[0].mxu0
      %v1617 = vpop.f32.mrb[0].mxu0
      %v1618 = vadd.f32 %v1553, %v1617
      %v1619 = vpop.f32.mrb[0].mxu0
      %1620 = vmatprep.mubr.bf16.mxu0 %v961
      %1621 = vmatmul.mubr.bf16.gmra.mrb[0].mxu0 %v960
      %v1622 = vpop.f32.mrb[0].mxu0
      %v1623 = vadd.f32 %v1558, %v1622
      %v1624 = vpop.f32.mrb[0].mxu0
      %v1625 = vpop.f32.mrb[0].mxu0
      %v1626 = vadd.f32 %v1561, %v1625
      %v1627 = vpop.f32.mrb[0].mxu0
      %1628 = vmatprep.mubr.bf16.mxu0 %v970
      %1629 = vmatmul.mubr.bf16.gmra.mrb[0].mxu0 %v969
      %v1630 = vpop.f32.mrb[0].mxu0
      %v1631 = vadd.f32 %v1566, %v1630
      %v1632 = vpop.f32.mrb[0].mxu0
      %v1633 = vpop.f32.mrb[0].mxu0
      %v1634 = vadd.f32 %v1569, %v1633
      %v1635 = vpop.f32.mrb[0].mxu0
      %1636 = vdwg.mxu0
      %1637 = vmatprep.subr.bf16.mxu0 0
      %1638 = vmatpush1.bf16.msra.mxu0 %v1346
      %1639 = vmatprep.subr.bf16.mxu0 0
      %1640 = vmatpush1.bf16.msra.mxu0 %v1347
      %1641 = vmatprep.subr.bf16.mxu0 0
      %1642 = vmatpush1.bf16.msra.mxu0 %v1348
      %1643 = vmatprep.subr.bf16.mxu0 0
      %1644 = vmatpush1.bf16.msra.mxu0 %v1349
      %1645 = vmatprep.subr.bf16.mxu0 0
      %1646 = vmatpush1.bf16.msra.mxu0 %v1350
      %1647 = vmatprep.subr.bf16.mxu0 0
      %1648 = vmatpush1.bf16.msra.mxu0 %v1351
      %1649 = vmatprep.subr.bf16.mxu0 0
      %1650 = vmatpush1.bf16.msra.mxu0 %v1352
      %1651 = vmatprep.subr.bf16.mxu0 0
      %1652 = vmatpush1.bf16.msra.mxu0 %v1353
      %1653 = vmatprep.subr.bf16.mxu0 0
      %1654 = vmatpush1.bf16.msra.mxu0 %v1354
      %1655 = vmatprep.subr.bf16.mxu0 0
      %1656 = vmatpush1.bf16.msra.mxu0 %v1355
      %1657 = vmatprep.subr.bf16.mxu0 0
      %1658 = vmatpush1.bf16.msra.mxu0 %v1356
      %1659 = vmatprep.subr.bf16.mxu0 0
      %1660 = vmatpush1.bf16.msra.mxu0 %v1357
      %1661 = vmatprep.subr.bf16.mxu0 0
      %1662 = vmatpush1.bf16.msra.mxu0 %v1358
      %1663 = vmatprep.subr.bf16.mxu0 0
      %1664 = vmatpush1.bf16.msra.mxu0 %v1359
      %1665 = vmatprep.subr.bf16.mxu0 0
      %1666 = vmatpush1.bf16.msra.mxu0 %v1360
      %1667 = vmatprep.subr.bf16.mxu0 0
      %1668 = vmatpush1.bf16.msra.mxu0 %v1361
      %1669 = vmatprep.mubr.bf16.mxu0 %v945
      %1670 = vmatmul.mubr.bf16.gmra.mrb[0].mxu0 %v944
      %v1671 = vpop.f32.mrb[0].mxu0
      %v1672 = vadd.f32 %v1607, %v1671
      %v1673 = vpop.f32.mrb[0].mxu0
      %v1674 = vpop.f32.mrb[0].mxu0
      %v1675 = vadd.f32 %v1610, %v1674
      %v1676 = vpop.f32.mrb[0].mxu0
      %1677 = vmatprep.mubr.bf16.mxu0 %v954
      %1678 = vmatmul.mubr.bf16.gmra.mrb[0].mxu0 %v953
      %v1679 = vpop.f32.mrb[0].mxu0
      %v1680 = vadd.f32 %v1615, %v1679
      %v1681 = vpop.f32.mrb[0].mxu0
      %v1682 = vpop.f32.mrb[0].mxu0
      %v1683 = vadd.f32 %v1618, %v1682
      %v1684 = vpop.f32.mrb[0].mxu0
      %1685 = vmatprep.mubr.bf16.mxu0 %v963
      %1686 = vmatmul.mubr.bf16.gmra.mrb[0].mxu0 %v962
      %v1687 = vpop.f32.mrb[0].mxu0
      %v1688 = vadd.f32 %v1623, %v1687
      %v1689 = vpop.f32.mrb[0].mxu0
      %v1690 = vpop.f32.mrb[0].mxu0
      %v1691 = vadd.f32 %v1626, %v1690
      %v1692 = vpop.f32.mrb[0].mxu0
      %1693 = vmatprep.mubr.bf16.mxu0 %v972
      %1694 = vmatmul.mubr.bf16.gmra.mrb[0].mxu0 %v971
      %v1695 = vpop.f32.mrb[0].mxu0
      %v1696 = vadd.f32 %v1631, %v1695
      %v1697 = vpop.f32.mrb[0].mxu0
      %v1698 = vpop.f32.mrb[0].mxu0
      %v1699 = vadd.f32 %v1634, %v1698
      %v1700 = vpop.f32.mrb[0].mxu0
      %1701 = vdwg.mxu0
      %1702 = vmatprep.subr.bf16.mxu0 0
      %1703 = vmatpush1.bf16.msra.mxu0 %v1362
      %1704 = vmatprep.subr.bf16.mxu0 0
      %1705 = vmatpush1.bf16.msra.mxu0 %v1363
      %1706 = vmatprep.subr.bf16.mxu0 0
      %1707 = vmatpush1.bf16.msra.mxu0 %v1364
      %1708 = vmatprep.subr.bf16.mxu0 0
      %1709 = vmatpush1.bf16.msra.mxu0 %v1365
      %1710 = vmatprep.subr.bf16.mxu0 0
      %1711 = vmatpush1.bf16.msra.mxu0 %v1366
      %1712 = vmatprep.subr.bf16.mxu0 0
      %1713 = vmatpush1.bf16.msra.mxu0 %v1367
      %1714 = vmatprep.subr.bf16.mxu0 0
      %1715 = vmatpush1.bf16.msra.mxu0 %v1368
      %1716 = vmatprep.subr.bf16.mxu0 0
      %1717 = vmatpush1.bf16.msra.mxu0 %v1369
      %1718 = vmatprep.subr.bf16.mxu0 0
      %1719 = vmatpush1.bf16.msra.mxu0 0
      %1720 = vmatprep.subr.bf16.mxu0 0
      %1721 = vmatpush1.bf16.msra.mxu0 0
      %1722 = vmatprep.subr.bf16.mxu0 0
      %1723 = vmatpush1.bf16.msra.mxu0 0
      %1724 = vmatprep.subr.bf16.mxu0 0
      %1725 = vmatpush1.bf16.msra.mxu0 0
      %1726 = vmatprep.subr.bf16.mxu0 0
      %1727 = vmatpush1.bf16.msra.mxu0 0
      %1728 = vmatprep.subr.bf16.mxu0 0
      %1729 = vmatpush1.bf16.msra.mxu0 0
      %1730 = vmatprep.subr.bf16.mxu0 0
      %1731 = vmatpush1.bf16.msra.mxu0 0
      %1732 = vmatprep.subr.bf16.mxu0 0
      %1733 = vmatpush1.bf16.msra.mxu0 0
      %1734 = vmatprep.mubr.bf16.mxu0 0
      %1735 = vmatmul.mubr.bf16.gmra.mrb[0].mxu0 %v946
      %v1736 = vpop.f32.mrb[0].mxu0
      %v1737 = vadd.f32 %v1672, %v1736
      %v1738 = vpop.f32.mrb[0].mxu0
      %v1739 = vpop.f32.mrb[0].mxu0
      %v1740 = vadd.f32 %v1675, %v1739
      %v1741 = vpop.f32.mrb[0].mxu0
      %1742 = vmatprep.mubr.bf16.mxu0 0
      %1743 = vmatmul.mubr.bf16.gmra.mrb[0].mxu0 %v955
      %v1744 = vpop.f32.mrb[0].mxu0
      %v1745 = vadd.f32 %v1680, %v1744
      %v1746 = vpop.f32.mrb[0].mxu0
      %v1747 = vpop.f32.mrb[0].mxu0
      %v1748 = vadd.f32 %v1683, %v1747
      %v1749 = vpop.f32.mrb[0].mxu0
      %1750 = vmatprep.mubr.bf16.mxu0 0
      %1751 = vmatmul.mubr.bf16.gmra.mrb[0].mxu0 %v964
      %v1752 = vpop.f32.mrb[0].mxu0
      %v1753 = vadd.f32 %v1688, %v1752
      %v1754 = vpop.f32.mrb[0].mxu0
      %v1755 = vpop.f32.mrb[0].mxu0
      %v1756 = vadd.f32 %v1691, %v1755
      %v1757 = vpop.f32.mrb[0].mxu0
      %1758 = vmatprep.mubr.bf16.mxu0 0
      %1759 = vmatmul.mubr.bf16.gmra.mrb[0].mxu0 %v973
      %v1760 = vpop.f32.mrb[0].mxu0
      %v1761 = vadd.f32 %v1696, %v1760
      %v1762 = vpop.f32.mrb[0].mxu0
      %v1763 = vpop.f32.mrb[0].mxu0
      %v1764 = vadd.f32 %v1699, %v1763
      %v1765 = vpop.f32.mrb[0].mxu0
      %1766 = vdwg.mxu0
      %v1767 = vld [vmem:[%s271] sm:$0xf]
      %v1768 = vld [vmem:[%s271 + $0x4] sm:$0xf]
      %v1769 = vld [vmem:[%s271 + $0x8] sm:$0xf]
      %v1770 = vld [vmem:[%s271 + $0xc] sm:$0xf]
      %v1771 = vld [vmem:[%s271 + $0x10] sm:$0xf]
      %v1772 = vld [vmem:[%s271 + $0x14] sm:$0xf]
      %v1773 = vld [vmem:[%s271 + $0x18] sm:$0xf]
      %v1774 = vld [vmem:[%s271 + $0x1c] sm:$0xf]
      %v1775 = vunpack.c.l.bf16 %v1767
      %v1776 = vunpack.c.l.bf16 %v1768
      %v1777 = vunpack.c.l.bf16 %v1769
      %v1778 = vunpack.c.l.bf16 %v1770
      %v1779 = vunpack.c.l.bf16 %v1771
      %v1780 = vunpack.c.l.bf16 %v1772
      %v1781 = vunpack.c.l.bf16 %v1773
      %v1782 = vunpack.c.l.bf16 %v1774
      %v1783 = vadd.f32 %v1737, %v1775
      %v1784 = vadd.f32 %v1740, %v1776
      %v1785 = vadd.f32 %v1745, %v1777
      %v1786 = vadd.f32 %v1748, %v1778
      %v1787 = vadd.f32 %v1753, %v1779
      %v1788 = vadd.f32 %v1756, %v1780
      %v1789 = vadd.f32 %v1761, %v1781
      %v1790 = vadd.f32 %v1764, %v1782
      %v1791 = vmax.f32 %v1783, 0.0
      %v1792 = vmax.f32 %v1784, 0.0
      %v1793 = vmax.f32 %v1785, 0.0
      %v1794 = vmax.f32 %v1786, 0.0
      %v1795 = vmax.f32 %v1787, 0.0
      %v1796 = vmax.f32 %v1788, 0.0
      %v1797 = vmax.f32 %v1789, 0.0
      %v1798 = vmax.f32 %v1790, 0.0
      %v1799 = vpack.c.bf16 %v1792, %v1791
      %v1800 = vpack.c.bf16 %v1794, %v1793
      %v1801 = vpack.c.bf16 %v1796, %v1795
      %v1802 = vpack.c.bf16 %v1798, %v1797
      %v1807 = vunpack.c.l.b16 %v1799
      %v1808 = vunpack.c.h.b16 %v1799
      %v1809 = vunpack.c.l.b16 %v1800
      %v1810 = vunpack.c.h.b16 %v1800
      %v1811 = vunpack.c.l.b16 %v1801
      %v1812 = vunpack.c.h.b16 %v1801
      %v1813 = vunpack.c.l.b16 %v1802
      %v1814 = vunpack.c.h.b16 %v1802
      %v1815 = vpack.c.b16 %v1807, %v1807
      %v1816 = vpack.c.b16 %v1808, %v1808
      %v1817 = vpack.c.b16 %v1809, %v1809
      %v1818 = vpack.c.b16 %v1810, %v1810
      %v1819 = vpack.c.b16 %v1811, %v1811
      %v1820 = vpack.c.b16 %v1812, %v1812
      %v1821 = vpack.c.b16 %v1813, %v1813
      %v1822 = vpack.c.b16 %v1814, %v1814
      %1831 = vst [vmem:[%s279] sm:$0xf] %v1815
      %1832 = vst [vmem:[%s279 + $0x4] sm:$0xf] %v1816
      %1833 = vst [vmem:[%s279 + $0x8] sm:$0xf] %v1817
      %1834 = vst [vmem:[%s279 + $0xc] sm:$0xf] %v1818
      %1835 = vst [vmem:[%s279 + $0x10] sm:$0xf] %v1819
      %1836 = vst [vmem:[%s279 + $0x14] sm:$0xf] %v1820
      %1837 = vst [vmem:[%s279 + $0x18] sm:$0xf] %v1821
      %1838 = vst [vmem:[%s279 + $0x1c] sm:$0xf] %v1822
      %p1839 = scmp.lt.s32.totalorder %s20, 1
      %s1840 = scalar_select %p1839, %s20, 1
      %p1841 = scmp.lt.s32.totalorder %s19, 0
      %s1842 = scalar_select %p1841, %s19, 0
      %s1843 = smul.addr %s1840, 8
      %s1844 = sadd.s32 %s1842, %s1843
      %s1845 = smul.addr %s1844, 4
      %s1846 = scalar_lea.vmem %s4, %s1845
      // Predicated region
      $region37: #{basic_block_forward.3} parent=35 // pred_check
        %p1847 = pneg %p153
      $region38: #{basic_block_forward.3} parent=35 // pred_check_branch
        %1849 = sbr.rel (%p1847) target = $region40
      $region39: #{basic_block_forward.3} parent=35 // pred_region
        _
      $region40: #{basic_block_forward.3} parent=35 // pred_fallthru
        _
    $region36: #{basic_block_forward.3} parent=5 // pred_fallthru
      _
    %p1850 = scmp.le.s32.totalorder 2, %s10
    // Predicated region
    $region41: #{basic_block_forward.3} parent=5 // pred_check
      %p1851 = pneg %p1850
    $region42: #{basic_block_forward.3} parent=5 // pred_check_branch
      %1853 = sbr.rel (%p1851) target = $region44
    $region43: #{basic_block_forward.3} parent=5 // pred_region
      %s1854 = ssub.s32 %s10, 2
      // Predicated region
      $region45: #{basic_block_forward.3} parent=43 // pred_check
        %p1855 = pneg %p159
      $region46: #{basic_block_forward.3} parent=43 // pred_check_branch
        %1857 = sbr.rel (%p1855) target = $region48
      $region47: #{basic_block_forward.3} parent=43 // pred_region
        %p1858 = scmp.lt.s32.totalorder %s22, 1
        %s1859 = scalar_select %p1858, %s22, 1
        %p1860 = scmp.lt.s32.totalorder %s21, 0
        %s1861 = scalar_select %p1860, %s21, 0
        %s1862 = smul.addr %s1859, 8
        %s1863 = sadd.s32 %s1861, %s1862
        %s1864 = smul.addr %s1863, 4
        %s1865 = scalar_lea.vmem %s4, %s1864
      $region48: #{basic_block_forward.3} parent=43 // pred_fallthru
        _
    $region44: #{basic_block_forward.3} parent=5 // pred_fallthru
      _
  $region6: #{basic_block_forward.3} parent=0 // loop_footer
    %s14 = sadd.s32 1, %s10
  $region7: #{basic_block_forward.3} parent=0 // loop_footer_branch
    %9 = sbr.rel target = $region3
  $region8: #{basic_block_forward.3} parent=0 // loop_exit
    _

// kernel: basic_block_forward.2
$region0: #{basic_block_forward.2}
  #allocation0 [shape = 'u32[]', space=smem, size = 0x4, offset = 0x4, fixed_abs, tag = 'smem constant byte address 0x4 - core index']
  #allocation1 [shape = 'u32[144,128]{1,0:T(1,128)}', space=vmem, size = 0x12000, scoped, tag = 'internal scratch']
  %s0 = inlined_call_operand.vmem [shape: bf16[2,36,9,128], index: 0, kind: input, shape index: {}]
  %s1 = inlined_call_operand.vmem [shape: bf16[1152,128], index: 1, kind: input, shape index: {}]
  %s2 = inlined_call_operand.vmem [shape: f32[1,128], index: 2, kind: input, shape index: {}]
  %s3 = inlined_call_operand.vmem [shape: bf16[128,128], index: 3, kind: input, shape index: {}]
  %s4 = inlined_call_operand.vmem [shape: f32[1,128], index: 4, kind: input, shape index: {}]
  %s5 = inlined_call_operand.vmem [shape: bf16[2,10,10,128], index: 5, kind: output, shape index: {0}]
  %s6 = inlined_call_operand.vmem [shape: bf16[2,64,128], index: 6, kind: output, shape index: {1}]
  %7 = xla_tuple %s5, %s6
  %s8 = sld [smem:[#allocation0]]
  $region61: #{basic_block_forward.2} parent=0
    _
  %s10 = ssub.s32 1, %s8
  %s11 = scalar_select 0, %s10, %s8
  loop: start=0, step=1, limit=4
  $region2: #{basic_block_forward.2} parent=0 // loop_pre_header
    _
  $region3: #{basic_block_forward.2} parent=0 // loop_header
    %s13 = sphi 0, %s17
    %p14 = scmp.ge.s32.totalorder %s13, 4
    %s20 = sphi 0, %s32
    %s21 = sphi 0, %s28
    %s22 = sphi 0, %s20
    %s23 = sphi 0, %s21
    %s24 = sphi 0, %s22
    %s25 = sphi 0, %s23
    %s35 = sphi 0, %s37
    %s38 = sphi 0, %s35
    %s39 = sphi 0, %s38
    %s55 = sphi 0, %s39
    %s61 = sphi 0, %s63
    %s64 = sphi 0, %s61
    %s65 = sphi 0, %s64
    %s81 = sphi 0, %s65
    %s87 = sphi 0, %s89
    %s90 = sphi 0, %s87
    %s91 = sphi 0, %s90
    %s107 = sphi 0, %s91
    %s113 = sphi 0, %s115
    %s116 = sphi 0, %s113
    %s117 = sphi 0, %s116
    %s133 = sphi 0, %s117
    %s139 = sphi 0, %s141
    %s142 = sphi 0, %s139
    %s143 = sphi 0, %s142
    %s159 = sphi 0, %s143
    %s167 = sphi 0, %s169
    %s170 = sphi 0, %s167
    %s171 = sphi 0, %s170
    %s187 = sphi 0, %s171
    %s195 = sphi 0, %s197
    %s198 = sphi 0, %s195
    %s199 = sphi 0, %s198
    %s215 = sphi 0, %s199
  $region4: #{basic_block_forward.2} parent=0 // loop_header_branch
    %16 = sbr.rel (%p14) target = $region8
  $region5: #{basic_block_forward.2} parent=0 // loop_body
    %s18 = ssub.s32 %s13, 1
    %s19 = ssub.s32 %s13, 2
    %s26 = sadd.s32 1, %s21
    %p27 = scmp.ge.s32.totalorder %s26, 2
    %s28 = scalar_select %p27, 0, %s26
    %s29 = sadd.s32 1, %s20
    %s30 = scalar_select %p27, %s29, %s20
    %p31 = scmp.ge.s32.totalorder %s30, 1
    %s32 = scalar_select %p31, 0, %s30
    %s33 = ssub.s32 %s21, %s28
    %p34 = scmp.eq.s32.totalorder %s33, 0
    %s36 = sadd.s32 %s35, 1
    %s37 = scalar_select %p34, %s35, %s36
    %p40 = pneg %p34
    %p41 = scmp.eq.s32.totalorder %s13, 1
    %p42 = por %p40, %p41
    %p43 = scmp.ne.s32.totalorder %s35, %s38
    %p44 = scmp.eq.s32.totalorder %s13, 0
    %p45 = por %p43, %p44
    %p46 = scmp.ne.s32.totalorder %s35, %s38
    %p47 = scmp.eq.s32.totalorder %s18, 1
    %p48 = por %p46, %p47
    %p49 = scmp.ne.s32.totalorder %s38, %s39
    %p50 = scmp.eq.s32.totalorder %s18, 0
    %p51 = por %p49, %p50
    %p52 = scmp.ne.s32.totalorder %s38, %s39
    %p53 = scmp.eq.s32.totalorder %s19, 1
    %p54 = por %p52, %p53
    %p56 = scmp.ne.s32.totalorder %s39, %s55
    %p57 = scmp.eq.s32.totalorder %s19, 0
    %p58 = por %p56, %p57
    %s59 = ssub.s32 %s20, %s32
    %p60 = scmp.eq.s32.totalorder %s59, 0
    %s62 = sadd.s32 %s61, 1
    %s63 = scalar_select %p60, %s61, %s62
    %p66 = pneg %p60
    %p67 = scmp.eq.s32.totalorder %s13, 1
    %p68 = por %p66, %p67
    %p69 = scmp.ne.s32.totalorder %s61, %s64
    %p70 = scmp.eq.s32.totalorder %s13, 0
    %p71 = por %p69, %p70
    %p72 = scmp.ne.s32.totalorder %s61, %s64
    %p73 = scmp.eq.s32.totalorder %s18, 1
    %p74 = por %p72, %p73
    %p75 = scmp.ne.s32.totalorder %s64, %s65
    %p76 = scmp.eq.s32.totalorder %s18, 0
    %p77 = por %p75, %p76
    %p78 = scmp.ne.s32.totalorder %s64, %s65
    %p79 = scmp.eq.s32.totalorder %s19, 1
    %p80 = por %p78, %p79
    %p82 = scmp.ne.s32.totalorder %s65, %s81
    %p83 = scmp.eq.s32.totalorder %s19, 0
    %p84 = por %p82, %p83
    %s85 = ssub.s32 %s20, %s32
    %p86 = scmp.eq.s32.totalorder %s85, 0
    %s88 = sadd.s32 %s87, 1
    %s89 = scalar_select %p86, %s87, %s88
    %p92 = pneg %p86
    %p93 = scmp.eq.s32.totalorder %s13, 1
    %p94 = por %p92, %p93
    %p95 = scmp.ne.s32.totalorder %s87, %s90
    %p96 = scmp.eq.s32.totalorder %s13, 0
    %p97 = por %p95, %p96
    %p98 = scmp.ne.s32.totalorder %s87, %s90
    %p99 = scmp.eq.s32.totalorder %s18, 1
    %p100 = por %p98, %p99
    %p101 = scmp.ne.s32.totalorder %s90, %s91
    %p102 = scmp.eq.s32.totalorder %s18, 0
    %p103 = por %p101, %p102
    %p104 = scmp.ne.s32.totalorder %s90, %s91
    %p105 = scmp.eq.s32.totalorder %s19, 1
    %p106 = por %p104, %p105
    %p108 = scmp.ne.s32.totalorder %s91, %s107
    %p109 = scmp.eq.s32.totalorder %s19, 0
    %p110 = por %p108, %p109
    %s111 = ssub.s32 %s20, %s32
    %p112 = scmp.eq.s32.totalorder %s111, 0
    %s114 = sadd.s32 %s113, 1
    %s115 = scalar_select %p112, %s113, %s114
    %p118 = pneg %p112
    %p119 = scmp.eq.s32.totalorder %s13, 1
    %p120 = por %p118, %p119
    %p121 = scmp.ne.s32.totalorder %s113, %s116
    %p122 = scmp.eq.s32.totalorder %s13, 0
    %p123 = por %p121, %p122
    %p124 = scmp.ne.s32.totalorder %s113, %s116
    %p125 = scmp.eq.s32.totalorder %s18, 1
    %p126 = por %p124, %p125
    %p127 = scmp.ne.s32.totalorder %s116, %s117
    %p128 = scmp.eq.s32.totalorder %s18, 0
    %p129 = por %p127, %p128
    %p130 = scmp.ne.s32.totalorder %s116, %s117
    %p131 = scmp.eq.s32.totalorder %s19, 1
    %p132 = por %p130, %p131
    %p134 = scmp.ne.s32.totalorder %s117, %s133
    %p135 = scmp.eq.s32.totalorder %s19, 0
    %p136 = por %p134, %p135
    %s137 = ssub.s32 %s20, %s32
    %p138 = scmp.eq.s32.totalorder %s137, 0
    %s140 = sadd.s32 %s139, 1
    %s141 = scalar_select %p138, %s139, %s140
    %p144 = pneg %p138
    %p145 = scmp.eq.s32.totalorder %s13, 1
    %p146 = por %p144, %p145
    %p147 = scmp.ne.s32.totalorder %s139, %s142
    %p148 = scmp.eq.s32.totalorder %s13, 0
    %p149 = por %p147, %p148
    %p150 = scmp.ne.s32.totalorder %s139, %s142
    %p151 = scmp.eq.s32.totalorder %s18, 1
    %p152 = por %p150, %p151
    %p153 = scmp.ne.s32.totalorder %s142, %s143
    %p154 = scmp.eq.s32.totalorder %s18, 0
    %p155 = por %p153, %p154
    %p156 = scmp.ne.s32.totalorder %s142, %s143
    %p157 = scmp.eq.s32.totalorder %s19, 1
    %p158 = por %p156, %p157
    %p160 = scmp.ne.s32.totalorder %s143, %s159
    %p161 = scmp.eq.s32.totalorder %s19, 0
    %p162 = por %p160, %p161
    %s163 = ssub.s32 %s21, %s28
    %s164 = ssub.s32 %s20, %s32
    %s165 = sor.u32 %s163, %s164
    %p166 = scmp.eq.s32.totalorder %s165, 0
    %s168 = sadd.s32 %s167, 1
    %s169 = scalar_select %p166, %s167, %s168
    %p172 = pneg %p166
    %p173 = scmp.eq.s32.totalorder %s13, 1
    %p174 = por %p172, %p173
    %p175 = scmp.ne.s32.totalorder %s167, %s170
    %p176 = scmp.eq.s32.totalorder %s13, 0
    %p177 = por %p175, %p176
    %p178 = scmp.ne.s32.totalorder %s167, %s170
    %p179 = scmp.eq.s32.totalorder %s18, 1
    %p180 = por %p178, %p179
    %p181 = scmp.ne.s32.totalorder %s170, %s171
    %p182 = scmp.eq.s32.totalorder %s18, 0
    %p183 = por %p181, %p182
    %p184 = scmp.ne.s32.totalorder %s170, %s171
    %p185 = scmp.eq.s32.totalorder %s19, 1
    %p186 = por %p184, %p185
    %p188 = scmp.ne.s32.totalorder %s171, %s187
    %p189 = scmp.eq.s32.totalorder %s19, 0
    %p190 = por %p188, %p189
    %s191 = ssub.s32 %s21, %s28
    %s192 = ssub.s32 %s20, %s32
    %s193 = sor.u32 %s191, %s192
    %p194 = scmp.eq.s32.totalorder %s193, 0
    %s196 = sadd.s32 %s195, 1
    %s197 = scalar_select %p194, %s195, %s196
    %p200 = pneg %p194
    %p201 = scmp.eq.s32.totalorder %s13, 1
    %p202 = por %p200, %p201
    %p203 = scmp.ne.s32.totalorder %s195, %s198
    %p204 = scmp.eq.s32.totalorder %s13, 0
    %p205 = por %p203, %p204
    %p206 = scmp.ne.s32.totalorder %s195, %s198
    %p207 = scmp.eq.s32.totalorder %s18, 1
    %p208 = por %p206, %p207
    %p209 = scmp.ne.s32.totalorder %s198, %s199
    %p210 = scmp.eq.s32.totalorder %s18, 0
    %p211 = por %p209, %p210
    %p212 = scmp.ne.s32.totalorder %s198, %s199
    %p213 = scmp.eq.s32.totalorder %s19, 1
    %p214 = por %p212, %p213
    %p216 = scmp.ne.s32.totalorder %s199, %s215
    %p217 = scmp.eq.s32.totalorder %s19, 0
    %p218 = por %p216, %p217
    %p219 = scmp.le.s32.totalorder 1, %s13
    %p220 = scmp.lt.s32.totalorder %s13, 3
    %p221 = pnand %p219, %p220
    %p222 = pneg %p221
    // Predicated region
    $region9: #{basic_block_forward.2} parent=5 // pred_check
      _
    $region10: #{basic_block_forward.2} parent=5 // pred_check_branch
      %224 = sbr.rel (%p221) target = $region12
    $region11: #{basic_block_forward.2} parent=5 // pred_region
      %s225 = ssub.s32 %s13, 1
      // Predicated region
      $region13: #{basic_block_forward.2} parent=11 // pred_check
        %p226 = pneg %p77
      $region14: #{basic_block_forward.2} parent=11 // pred_check_branch
        %228 = sbr.rel (%p226) target = $region16
      $region15: #{basic_block_forward.2} parent=11 // pred_region
        %p229 = scmp.lt.s32.totalorder %s22, 0
        %s230 = scalar_select %p229, %s22, 0
        %s231 = smul.addr %s230, 4
        %s232 = scalar_lea.vmem %s1, %s231
      $region16: #{basic_block_forward.2} parent=11 // pred_fallthru
        _
      // Predicated region
      $region17: #{basic_block_forward.2} parent=11 // pred_check
        %p233 = pneg %p103
      $region18: #{basic_block_forward.2} parent=11 // pred_check_branch
        %235 = sbr.rel (%p233) target = $region20
      $region19: #{basic_block_forward.2} parent=11 // pred_region
        %p236 = scmp.lt.s32.totalorder %s22, 0
        %s237 = scalar_select %p236, %s22, 0
        %s238 = scalar_lea.vmem %s2, %s237
      $region20: #{basic_block_forward.2} parent=11 // pred_fallthru
        _
      // Predicated region
      $region21: #{basic_block_forward.2} parent=11 // pred_check
        %p239 = pneg %p129
      $region22: #{basic_block_forward.2} parent=11 // pred_check_branch
        %241 = sbr.rel (%p239) target = $region24
      $region23: #{basic_block_forward.2} parent=11 // pred_region
        %p242 = scmp.lt.s32.totalorder %s22, 0
        %s243 = scalar_select %p242, %s22, 0
        %s244 = smul.addr %s243, 4
        %s245 = scalar_lea.vmem %s3, %s244
      $region24: #{basic_block_forward.2} parent=11 // pred_fallthru
        _
      // Predicated region
      $region25: #{basic_block_forward.2} parent=11 // pred_check
        %p246 = pneg %p155
      $region26: #{basic_block_forward.2} parent=11 // pred_check_branch
        %248 = sbr.rel (%p246) target = $region28
      $region27: #{basic_block_forward.2} parent=11 // pred_region
        %p249 = scmp.lt.s32.totalorder %s22, 0
        %s250 = scalar_select %p249, %s22, 0
        %s251 = scalar_lea.vmem %s4, %s250
      $region28: #{basic_block_forward.2} parent=11 // pred_fallthru
        _
    $region12: #{basic_block_forward.2} parent=5 // pred_fallthru
      _
    %p252 = scmp.lt.s32.totalorder %s13, 2
    // Predicated region
    $region29: #{basic_block_forward.2} parent=5 // pred_check
      %p253 = pneg %p252
    $region30: #{basic_block_forward.2} parent=5 // pred_check_branch
      %255 = sbr.rel (%p253) target = $region32
    $region31: #{basic_block_forward.2} parent=5 // pred_region
      // Predicated region
      $region33: #{basic_block_forward.2} parent=31 // pred_check
        %p256 = pneg %p45
      $region34: #{basic_block_forward.2} parent=31 // pred_check_branch
        %258 = sbr.rel (%p256) target = $region36
      $region35: #{basic_block_forward.2} parent=31 // pred_region
        %p259 = scmp.lt.s32.totalorder %s21, 1
        %s260 = scalar_select %p259, %s21, 1
        %s261 = smul.addr %s260, 72
        %s262 = smul.addr %s261, 4
        %s263 = scalar_lea.vmem %s0, %s262
      $region36: #{basic_block_forward.2} parent=31 // pred_fallthru
        _
    $region32: #{basic_block_forward.2} parent=5 // pred_fallthru
      _
    %p264 = scmp.le.s32.totalorder 1, %s13
    %p265 = scmp.lt.s32.totalorder %s13, 3
    %p266 = pnand %p264, %p265
    %p267 = pneg %p266
    // Predicated region
    $region37: #{basic_block_forward.2} parent=5 // pred_check
      _
    $region38: #{basic_block_forward.2} parent=5 // pred_check_branch
      %269 = sbr.rel (%p266) target = $region40
    $region39: #{basic_block_forward.2} parent=5 // pred_region
      %s270 = ssub.s32 %s13, 1
      %p271 = scmp.lt.s32.totalorder %s23, 1
      %s272 = scalar_select %p271, %s23, 1
      %s273 = smul.addr %s272, 72
      %s274 = smul.addr %s273, 4
      %s275 = scalar_lea.vmem %s0, %s274
      %p276 = pneg %p51
      %p277 = pneg %p48
      %p278 = scmp.lt.s32.totalorder %s22, 0
      %s279 = scalar_select %p278, %s22, 0
      %s280 = smul.addr %s279, 4
      %s281 = scalar_lea.vmem %s1, %s280
      %p282 = pneg %p77
      %p283 = pneg %p74
      %p284 = scmp.lt.s32.totalorder %s22, 0
      %s285 = scalar_select %p284, %s22, 0
      %s286 = scalar_lea.vmem %s2, %s285
      %p287 = pneg %p103
      %p288 = pneg %p100
      %p289 = scmp.lt.s32.totalorder %s22, 0
      %s290 = scalar_select %p289, %s22, 0
      %s291 = smul.addr %s290, 4
      %s292 = scalar_lea.vmem %s3, %s291
      %p293 = pneg %p129
      %p294 = pneg %p126
      %p295 = scmp.lt.s32.totalorder %s22, 0
      %s296 = scalar_select %p295, %s22, 0
      %s297 = scalar_lea.vmem %s4, %s296
      %p298 = pneg %p155
      %p299 = pneg %p152
      %p300 = pneg %p183
      %p301 = pneg %p180
      %p302 = scmp.lt.s32.totalorder %s23, 1
      %s303 = scalar_select %p302, %s23, 1
      %p304 = scmp.lt.s32.totalorder %s22, 0
      %s305 = scalar_select %p304, %s22, 0
      %s306 = smul.addr %s303, 20
      %s307 = sadd.s32 %s305, %s306
      %s308 = smul.addr %s307, 4
      %s309 = scalar_lea.vmem %s5, %s308
      %p310 = pneg %p211
      %p311 = pneg %p208
      %p312 = scmp.lt.s32.totalorder %s23, 1
      %s313 = scalar_select %p312, %s23, 1
      %p314 = scmp.lt.s32.totalorder %s22, 0
      %s315 = scalar_select %p314, %s22, 0
      %s316 = smul.addr %s313, 8
      %s317 = sadd.s32 %s315, %s316
      %s318 = smul.addr %s317, 4
      %s319 = scalar_lea.vmem %s6, %s318
      %p320 = scmp.lt.s32.totalorder %s23, 1
      %s321 = scalar_select %p320, %s23, 1
      %s322 = smul.addr %s321, 72
      %s323 = smul.addr %s322, 4
      %s324 = scalar_lea.vmem %s0, %s323
      %p325 = scmp.lt.s32.totalorder %s22, 0
      %s326 = scalar_select %p325, %s22, 0
      %s327 = smul.addr %s326, 4
      %s328 = scalar_lea.vmem %s1, %s327
      %p329 = scmp.lt.s32.totalorder %s22, 0
      %s330 = scalar_select %p329, %s22, 0
      %s331 = scalar_lea.vmem %s2, %s330
      %p332 = scmp.lt.s32.totalorder %s22, 0
      %s333 = scalar_select %p332, %s22, 0
      %s334 = smul.addr %s333, 4
      %s335 = scalar_lea.vmem %s3, %s334
      %p336 = scmp.lt.s32.totalorder %s22, 0
      %s337 = scalar_select %p336, %s22, 0
      %s338 = scalar_lea.vmem %s4, %s337
      %p339 = scmp.lt.s32.totalorder %s23, 1
      %s340 = scalar_select %p339, %s23, 1
      %p341 = scmp.lt.s32.totalorder %s22, 0
      %s342 = scalar_select %p341, %s22, 0
      %s343 = smul.addr %s340, 20
      %s344 = sadd.s32 %s342, %s343
      %s345 = smul.addr %s344, 4
      %s346 = scalar_lea.vmem %s5, %s345
      %p347 = scmp.lt.s32.totalorder %s23, 1
      %s348 = scalar_select %p347, %s23, 1
      %p349 = scmp.lt.s32.totalorder %s22, 0
      %s350 = scalar_select %p349, %s22, 0
      %s351 = smul.addr %s348, 8
      %s352 = sadd.s32 %s350, %s351
      %s353 = smul.addr %s352, 4
      %s354 = scalar_lea.vmem %s6, %s353
      %v356 = vld [vmem:[%s324] sm:$0xf]
      %v357 = vld [vmem:[%s324 + $0x8] sm:$0xf]
      %v358 = vld [vmem:[%s324 + $0x10] sm:$0xf]
      %v359 = vld [vmem:[%s324 + $0x18] sm:$0xf]
      %v360 = vld [vmem:[%s324 + $0x20] sm:$0xf]
      %v361 = vld [vmem:[%s324 + $0x28] sm:$0xf]
      %v362 = vld [vmem:[%s324 + $0x30] sm:$0xf]
      %v363 = vld [vmem:[%s324 + $0x38] sm:$0xf]
      %s364 = scalar_lea.vmem %s324, 72
      %v365 = vld [vmem:[%s364] sm:$0xf]
      %v366 = vld [vmem:[%s364 + $0x8] sm:$0xf]
      %v367 = vld [vmem:[%s364 + $0x10] sm:$0xf]
      %v368 = vld [vmem:[%s364 + $0x18] sm:$0xf]
      %v369 = vld [vmem:[%s364 + $0x20] sm:$0xf]
      %v370 = vld [vmem:[%s364 + $0x28] sm:$0xf]
      %v371 = vld [vmem:[%s364 + $0x30] sm:$0xf]
      %v372 = vld [vmem:[%s364 + $0x38] sm:$0xf]
      %v373 = vld [vmem:[%s324 + $0x4] sm:$0x1]
      %v374 = vld [vmem:[%s324 + $0xc] sm:$0x1]
      %v375 = vld [vmem:[%s324 + $0x14] sm:$0x1]
      %v376 = vld [vmem:[%s324 + $0x1c] sm:$0x1]
      %v377 = vld [vmem:[%s324 + $0x24] sm:$0x1]
      %v378 = vld [vmem:[%s324 + $0x2c] sm:$0x1]
      %v379 = vld [vmem:[%s324 + $0x34] sm:$0x1]
      %v380 = vld [vmem:[%s324 + $0x3c] sm:$0x1]
      %s381 = scalar_lea.vmem %s324, 144
      %v382 = vld [vmem:[%s381] sm:$0xf]
      %v383 = vld [vmem:[%s381 + $0x8] sm:$0xf]
      %v384 = vld [vmem:[%s381 + $0x10] sm:$0xf]
      %v385 = vld [vmem:[%s381 + $0x18] sm:$0xf]
      %v386 = vld [vmem:[%s381 + $0x20] sm:$0xf]
      %v387 = vld [vmem:[%s381 + $0x28] sm:$0xf]
      %v388 = vld [vmem:[%s381 + $0x30] sm:$0xf]
      %v389 = vld [vmem:[%s381 + $0x38] sm:$0xf]
      %s390 = scalar_lea.vmem %s324, 216
      %v391 = vld [vmem:[%s390] sm:$0xf]
      %v392 = vld [vmem:[%s390 + $0x8] sm:$0xf]
      %v393 = vld [vmem:[%s390 + $0x10] sm:$0xf]
      %v394 = vld [vmem:[%s390 + $0x18] sm:$0xf]
      %v395 = vld [vmem:[%s390 + $0x20] sm:$0xf]
      %v396 = vld [vmem:[%s390 + $0x28] sm:$0xf]
      %v397 = vld [vmem:[%s390 + $0x30] sm:$0xf]
      %v398 = vld [vmem:[%s390 + $0x38] sm:$0xf]
      %v399 = vld [vmem:[%s381 + $0x4] sm:$0x1]
      %v400 = vld [vmem:[%s381 + $0xc] sm:$0x1]
      %v401 = vld [vmem:[%s381 + $0x14] sm:$0x1]
      %v402 = vld [vmem:[%s381 + $0x1c] sm:$0x1]
      %v403 = vld [vmem:[%s381 + $0x24] sm:$0x1]
      %v404 = vld [vmem:[%s381 + $0x2c] sm:$0x1]
      %v405 = vld [vmem:[%s381 + $0x34] sm:$0x1]
      %v406 = vld [vmem:[%s381 + $0x3c] sm:$0x1]
      %s407 = scalar_lea.vmem %s324, 8
      %v408 = vld [vmem:[%s407] sm:$0xf]
      %v409 = vld [vmem:[%s407 + $0x8] sm:$0xf]
      %v410 = vld [vmem:[%s407 + $0x10] sm:$0xf]
      %v411 = vld [vmem:[%s407 + $0x18] sm:$0xf]
      %v412 = vld [vmem:[%s407 + $0x20] sm:$0xf]
      %v413 = vld [vmem:[%s407 + $0x28] sm:$0xf]
      %v414 = vld [vmem:[%s407 + $0x30] sm:$0xf]
      %v415 = vld [vmem:[%s407 + $0x38] sm:$0xf]
      %s416 = scalar_lea.vmem %s324, 80
      %v417 = vld [vmem:[%s416] sm:$0xf]
      %v418 = vld [vmem:[%s416 + $0x8] sm:$0xf]
      %v419 = vld [vmem:[%s416 + $0x10] sm:$0xf]
      %v420 = vld [vmem:[%s416 + $0x18] sm:$0xf]
      %v421 = vld [vmem:[%s416 + $0x20] sm:$0xf]
      %v422 = vld [vmem:[%s416 + $0x28] sm:$0xf]
      %v423 = vld [vmem:[%s416 + $0x30] sm:$0xf]
      %v424 = vld [vmem:[%s416 + $0x38] sm:$0xf]
      %v425 = vld [vmem:[%s407 + $0x4] sm:$0x1]
      %v426 = vld [vmem:[%s407 + $0xc] sm:$0x1]
      %v427 = vld [vmem:[%s407 + $0x14] sm:$0x1]
      %v428 = vld [vmem:[%s407 + $0x1c] sm:$0x1]
      %v429 = vld [vmem:[%s407 + $0x24] sm:$0x1]
      %v430 = vld [vmem:[%s407 + $0x2c] sm:$0x1]
      %v431 = vld [vmem:[%s407 + $0x34] sm:$0x1]
      %v432 = vld [vmem:[%s407 + $0x3c] sm:$0x1]
      %v449 = vunpack.c.l.b16 %v356
      %v450 = vunpack.c.l.b16 %v373
      %v451 = vunpack.c.l.b16 %v357
      %v452 = vunpack.c.l.b16 %v374
      %v453 = vunpack.c.l.b16 %v358
      %v454 = vunpack.c.l.b16 %v375
      %v455 = vunpack.c.l.b16 %v359
      %v456 = vunpack.c.l.b16 %v376
      %v457 = vunpack.c.l.b16 %v360
      %v458 = vunpack.c.l.b16 %v377
      %v459 = vunpack.c.l.b16 %v361
      %v460 = vunpack.c.l.b16 %v378
      %v461 = vunpack.c.l.b16 %v362
      %v462 = vunpack.c.l.b16 %v379
      %v463 = vunpack.c.l.b16 %v363
      %v464 = vunpack.c.l.b16 %v380
      %v465 = vpack.c.b16 %v450, %v449
      %v466 = vpack.c.b16 %v452, %v451
      %v467 = vpack.c.b16 %v454, %v453
      %v468 = vpack.c.b16 %v456, %v455
      %v469 = vpack.c.b16 %v458, %v457
      %v470 = vpack.c.b16 %v460, %v459
      %v471 = vpack.c.b16 %v462, %v461
      %v472 = vpack.c.b16 %v464, %v463
      %v474 = vshrl.u32 %v465, 16
      %v476 = vshll.u32 %v465, 16
      %v478 = vrot.slane %v476, 1
      %v479 = vor.u32 %v474, %v478
      %v481 = vshrl.u32 %v466, 16
      %v483 = vshll.u32 %v466, 16
      %v485 = vrot.slane %v483, 1
      %v486 = vor.u32 %v481, %v485
      %v488 = vshrl.u32 %v467, 16
      %v490 = vshll.u32 %v467, 16
      %v492 = vrot.slane %v490, 1
      %v493 = vor.u32 %v488, %v492
      %v495 = vshrl.u32 %v468, 16
      %v497 = vshll.u32 %v468, 16
      %v499 = vrot.slane %v497, 1
      %v500 = vor.u32 %v495, %v499
      %v502 = vshrl.u32 %v469, 16
      %v504 = vshll.u32 %v469, 16
      %v506 = vrot.slane %v504, 1
      %v507 = vor.u32 %v502, %v506
      %v509 = vshrl.u32 %v470, 16
      %v511 = vshll.u32 %v470, 16
      %v513 = vrot.slane %v511, 1
      %v514 = vor.u32 %v509, %v513
      %v516 = vshrl.u32 %v471, 16
      %v518 = vshll.u32 %v471, 16
      %v520 = vrot.slane %v518, 1
      %v521 = vor.u32 %v516, %v520
      %v523 = vshrl.u32 %v472, 16
      %v525 = vshll.u32 %v472, 16
      %v527 = vrot.slane %v525, 1
      %v528 = vor.u32 %v523, %v527
      %v545 = vunpack.c.l.b16 %v382
      %v546 = vunpack.c.l.b16 %v399
      %v547 = vunpack.c.l.b16 %v383
      %v548 = vunpack.c.l.b16 %v400
      %v549 = vunpack.c.l.b16 %v384
      %v550 = vunpack.c.l.b16 %v401
      %v551 = vunpack.c.l.b16 %v385
      %v552 = vunpack.c.l.b16 %v402
      %v553 = vunpack.c.l.b16 %v386
      %v554 = vunpack.c.l.b16 %v403
      %v555 = vunpack.c.l.b16 %v387
      %v556 = vunpack.c.l.b16 %v404
      %v557 = vunpack.c.l.b16 %v388
      %v558 = vunpack.c.l.b16 %v405
      %v559 = vunpack.c.l.b16 %v389
      %v560 = vunpack.c.l.b16 %v406
      %v561 = vpack.c.b16 %v546, %v545
      %v562 = vpack.c.b16 %v548, %v547
      %v563 = vpack.c.b16 %v550, %v549
      %v564 = vpack.c.b16 %v552, %v551
      %v565 = vpack.c.b16 %v554, %v553
      %v566 = vpack.c.b16 %v556, %v555
      %v567 = vpack.c.b16 %v558, %v557
      %v568 = vpack.c.b16 %v560, %v559
      %v570 = vshrl.u32 %v561, 16
      %v572 = vshll.u32 %v561, 16
      %v574 = vrot.slane %v572, 1
      %v575 = vor.u32 %v570, %v574
      %v577 = vshrl.u32 %v562, 16
      %v579 = vshll.u32 %v562, 16
      %v581 = vrot.slane %v579, 1
      %v582 = vor.u32 %v577, %v581
      %v584 = vshrl.u32 %v563, 16
      %v586 = vshll.u32 %v563, 16
      %v588 = vrot.slane %v586, 1
      %v589 = vor.u32 %v584, %v588
      %v591 = vshrl.u32 %v564, 16
      %v593 = vshll.u32 %v564, 16
      %v595 = vrot.slane %v593, 1
      %v596 = vor.u32 %v591, %v595
      %v598 = vshrl.u32 %v565, 16
      %v600 = vshll.u32 %v565, 16
      %v602 = vrot.slane %v600, 1
      %v603 = vor.u32 %v598, %v602
      %v605 = vshrl.u32 %v566, 16
      %v607 = vshll.u32 %v566, 16
      %v609 = vrot.slane %v607, 1
      %v610 = vor.u32 %v605, %v609
      %v612 = vshrl.u32 %v567, 16
      %v614 = vshll.u32 %v567, 16
      %v616 = vrot.slane %v614, 1
      %v617 = vor.u32 %v612, %v616
      %v619 = vshrl.u32 %v568, 16
      %v621 = vshll.u32 %v568, 16
      %v623 = vrot.slane %v621, 1
      %v624 = vor.u32 %v619, %v623
      %v641 = vunpack.c.l.b16 %v408
      %v642 = vunpack.c.l.b16 %v425
      %v643 = vunpack.c.l.b16 %v409
      %v644 = vunpack.c.l.b16 %v426
      %v645 = vunpack.c.l.b16 %v410
      %v646 = vunpack.c.l.b16 %v427
      %v647 = vunpack.c.l.b16 %v411
      %v648 = vunpack.c.l.b16 %v428
      %v649 = vunpack.c.l.b16 %v412
      %v650 = vunpack.c.l.b16 %v429
      %v651 = vunpack.c.l.b16 %v413
      %v652 = vunpack.c.l.b16 %v430
      %v653 = vunpack.c.l.b16 %v414
      %v654 = vunpack.c.l.b16 %v431
      %v655 = vunpack.c.l.b16 %v415
      %v656 = vunpack.c.l.b16 %v432
      %v657 = vpack.c.b16 %v642, %v641
      %v658 = vpack.c.b16 %v644, %v643
      %v659 = vpack.c.b16 %v646, %v645
      %v660 = vpack.c.b16 %v648, %v647
      %v661 = vpack.c.b16 %v650, %v649
      %v662 = vpack.c.b16 %v652, %v651
      %v663 = vpack.c.b16 %v654, %v653
      %v664 = vpack.c.b16 %v656, %v655
      %v666 = vshrl.u32 %v657, 16
      %v668 = vshll.u32 %v657, 16
      %v670 = vrot.slane %v668, 1
      %v671 = vor.u32 %v666, %v670
      %v673 = vshrl.u32 %v658, 16
      %v675 = vshll.u32 %v658, 16
      %v677 = vrot.slane %v675, 1
      %v678 = vor.u32 %v673, %v677
      %v680 = vshrl.u32 %v659, 16
      %v682 = vshll.u32 %v659, 16
      %v684 = vrot.slane %v682, 1
      %v685 = vor.u32 %v680, %v684
      %v687 = vshrl.u32 %v660, 16
      %v689 = vshll.u32 %v660, 16
      %v691 = vrot.slane %v689, 1
      %v692 = vor.u32 %v687, %v691
      %v694 = vshrl.u32 %v661, 16
      %v696 = vshll.u32 %v661, 16
      %v698 = vrot.slane %v696, 1
      %v699 = vor.u32 %v694, %v698
      %v701 = vshrl.u32 %v662, 16
      %v703 = vshll.u32 %v662, 16
      %v705 = vrot.slane %v703, 1
      %v706 = vor.u32 %v701, %v705
      %v708 = vshrl.u32 %v663, 16
      %v710 = vshll.u32 %v663, 16
      %v712 = vrot.slane %v710, 1
      %v713 = vor.u32 %v708, %v712
      %v715 = vshrl.u32 %v664, 16
      %v717 = vshll.u32 %v664, 16
      %v719 = vrot.slane %v717, 1
      %v720 = vor.u32 %v715, %v719
      %v745 = vunpack.c.l.b16 %v365
      %v746 = vunpack.c.l.b16 %v479
      %v747 = vunpack.c.l.b16 %v391
      %v748 = vunpack.c.l.b16 %v575
      %v749 = vunpack.c.l.b16 %v417
      %v750 = vunpack.c.l.b16 %v671
      %v751 = vunpack.c.l.b16 %v366
      %v752 = vunpack.c.l.b16 %v486
      %v753 = vunpack.c.l.b16 %v392
      %v754 = vunpack.c.l.b16 %v582
      %v755 = vunpack.c.l.b16 %v418
      %v756 = vunpack.c.l.b16 %v678
      %v757 = vunpack.c.l.b16 %v367
      %v758 = vunpack.c.l.b16 %v493
      %v759 = vunpack.c.l.b16 %v393
      %v760 = vunpack.c.l.b16 %v589
      %v761 = vunpack.c.l.b16 %v419
      %v762 = vunpack.c.l.b16 %v685
      %v763 = vunpack.c.l.b16 %v368
      %v764 = vunpack.c.l.b16 %v500
      %v765 = vunpack.c.l.b16 %v394
      %v766 = vunpack.c.l.b16 %v596
      %v767 = vunpack.c.l.b16 %v420
      %v768 = vunpack.c.l.b16 %v692
      %v769 = vunpack.c.l.b16 %v369
      %v770 = vunpack.c.l.b16 %v507
      %v771 = vunpack.c.l.b16 %v395
      %v772 = vunpack.c.l.b16 %v603
      %v773 = vunpack.c.l.b16 %v421
      %v774 = vunpack.c.l.b16 %v699
      %v775 = vunpack.c.l.b16 %v370
      %v776 = vunpack.c.l.b16 %v514
      %v777 = vunpack.c.l.b16 %v396
      %v778 = vunpack.c.l.b16 %v610
      %v779 = vunpack.c.l.b16 %v422
      %v780 = vunpack.c.l.b16 %v706
      %v781 = vunpack.c.l.b16 %v371
      %v782 = vunpack.c.l.b16 %v521
      %v783 = vunpack.c.l.b16 %v397
      %v784 = vunpack.c.l.b16 %v617
      %v785 = vunpack.c.l.b16 %v423
      %v786 = vunpack.c.l.b16 %v713
      %v787 = vunpack.c.l.b16 %v372
      %v788 = vunpack.c.l.b16 %v528
      %v789 = vunpack.c.l.b16 %v398
      %v790 = vunpack.c.l.b16 %v624
      %v791 = vunpack.c.l.b16 %v424
      %v792 = vunpack.c.l.b16 %v720
      %v793 = vld [vmem:[%s328] sm:$0xf]
      %v794 = vld [vmem:[%s328 + $0x4] sm:$0xf]
      %v795 = vld [vmem:[%s328 + $0x8] sm:$0xf]
      %v796 = vld [vmem:[%s328 + $0xc] sm:$0xf]
      %v797 = vld [vmem:[%s328 + $0x10] sm:$0xf]
      %v798 = vld [vmem:[%s328 + $0x14] sm:$0xf]
      %v799 = vld [vmem:[%s328 + $0x18] sm:$0xf]
      %v800 = vld [vmem:[%s328 + $0x1c] sm:$0xf]
      %v801 = vld [vmem:[%s328 + $0x20] sm:$0xf]
      %v802 = vld [vmem:[%s328 + $0x24] sm:$0xf]
      %v803 = vld [vmem:[%s328 + $0x28] sm:$0xf]
      %v804 = vld [vmem:[%s328 + $0x2c] sm:$0xf]
      %v805 = vld [vmem:[%s328 + $0x30] sm:$0xf]
      %v806 = vld [vmem:[%s328 + $0x34] sm:$0xf]
      %v807 = vld [vmem:[%s328 + $0x38] sm:$0xf]
      %v808 = vld [vmem:[%s328 + $0x3c] sm:$0xf]
      %v809 = vld [vmem:[%s328 + $0x40] sm:$0xf]
      %v810 = vld [vmem:[%s328 + $0x44] sm:$0xf]
      %v811 = vld [vmem:[%s328 + $0x48] sm:$0xf]
      %v812 = vld [vmem:[%s328 + $0x4c] sm:$0xf]
      %v813 = vld [vmem:[%s328 + $0x50] sm:$0xf]
      %v814 = vld [vmem:[%s328 + $0x54] sm:$0xf]
      %v815 = vld [vmem:[%s328 + $0x58] sm:$0xf]
      %v816 = vld [vmem:[%s328 + $0x5c] sm:$0xf]
      %v817 = vld [vmem:[%s328 + $0x60] sm:$0xf]
      %v818 = vld [vmem:[%s328 + $0x64] sm:$0xf]
      %v819 = vld [vmem:[%s328 + $0x68] sm:$0xf]
      %v820 = vld [vmem:[%s328 + $0x6c] sm:$0xf]
      %v821 = vld [vmem:[%s328 + $0x70] sm:$0xf]
      %v822 = vld [vmem:[%s328 + $0x74] sm:$0xf]
      %v823 = vld [vmem:[%s328 + $0x78] sm:$0xf]
      %v824 = vld [vmem:[%s328 + $0x7c] sm:$0xf]
      %v825 = vld [vmem:[%s328 + $0x80] sm:$0xf]
      %v826 = vld [vmem:[%s328 + $0x84] sm:$0xf]
      %v827 = vld [vmem:[%s328 + $0x88] sm:$0xf]
      %v828 = vld [vmem:[%s328 + $0x8c] sm:$0xf]
      %v829 = vld [vmem:[%s328 + $0x90] sm:$0xf]
      %v830 = vld [vmem:[%s328 + $0x94] sm:$0xf]
      %v831 = vld [vmem:[%s328 + $0x98] sm:$0xf]
      %v832 = vld [vmem:[%s328 + $0x9c] sm:$0xf]
      %v833 = vld [vmem:[%s328 + $0xa0] sm:$0xf]
      %v834 = vld [vmem:[%s328 + $0xa4] sm:$0xf]
      %v835 = vld [vmem:[%s328 + $0xa8] sm:$0xf]
      %v836 = vld [vmem:[%s328 + $0xac] sm:$0xf]
      %v837 = vld [vmem:[%s328 + $0xb0] sm:$0xf]
      %v838 = vld [vmem:[%s328 + $0xb4] sm:$0xf]
      %v839 = vld [vmem:[%s328 + $0xb8] sm:$0xf]
      %v840 = vld [vmem:[%s328 + $0xbc] sm:$0xf]
      %v841 = vld [vmem:[%s328 + $0xc0] sm:$0xf]
      %v842 = vld [vmem:[%s328 + $0xc4] sm:$0xf]
      %v843 = vld [vmem:[%s328 + $0xc8] sm:$0xf]
      %v844 = vld [vmem:[%s328 + $0xcc] sm:$0xf]
      %v845 = vld [vmem:[%s328 + $0xd0] sm:$0xf]
      %v846 = vld [vmem:[%s328 + $0xd4] sm:$0xf]
      %v847 = vld [vmem:[%s328 + $0xd8] sm:$0xf]
      %v848 = vld [vmem:[%s328 + $0xdc] sm:$0xf]
      %v849 = vld [vmem:[%s328 + $0xe0] sm:$0xf]
      %v850 = vld [vmem:[%s328 + $0xe4] sm:$0xf]
      %v851 = vld [vmem:[%s328 + $0xe8] sm:$0xf]
      %v852 = vld [vmem:[%s328 + $0xec] sm:$0xf]
      %v853 = vld [vmem:[%s328 + $0xf0] sm:$0xf]
      %v854 = vld [vmem:[%s328 + $0xf4] sm:$0xf]
      %v855 = vld [vmem:[%s328 + $0xf8] sm:$0xf]
      %v856 = vld [vmem:[%s328 + $0xfc] sm:$0xf]
      %v857 = vld [vmem:[%s328 + $0x100] sm:$0xf]
      %v858 = vld [vmem:[%s328 + $0x104] sm:$0xf]
      %v859 = vld [vmem:[%s328 + $0x108] sm:$0xf]
      %v860 = vld [vmem:[%s328 + $0x10c] sm:$0xf]
      %v861 = vld [vmem:[%s328 + $0x110] sm:$0xf]
      %v862 = vld [vmem:[%s328 + $0x114] sm:$0xf]
      %v863 = vld [vmem:[%s328 + $0x118] sm:$0xf]
      %v864 = vld [vmem:[%s328 + $0x11c] sm:$0xf]
      %v865 = vld [vmem:[%s328 + $0x120] sm:$0xf]
      %v866 = vld [vmem:[%s328 + $0x124] sm:$0xf]
      %v867 = vld [vmem:[%s328 + $0x128] sm:$0xf]
      %v868 = vld [vmem:[%s328 + $0x12c] sm:$0xf]
      %v869 = vld [vmem:[%s328 + $0x130] sm:$0xf]
      %v870 = vld [vmem:[%s328 + $0x134] sm:$0xf]
      %v871 = vld [vmem:[%s328 + $0x138] sm:$0xf]
      %v872 = vld [vmem:[%s328 + $0x13c] sm:$0xf]
      %v873 = vld [vmem:[%s328 + $0x140] sm:$0xf]
      %v874 = vld [vmem:[%s328 + $0x144] sm:$0xf]
      %v875 = vld [vmem:[%s328 + $0x148] sm:$0xf]
      %v876 = vld [vmem:[%s328 + $0x14c] sm:$0xf]
      %v877 = vld [vmem:[%s328 + $0x150] sm:$0xf]
      %v878 = vld [vmem:[%s328 + $0x154] sm:$0xf]
      %v879 = vld [vmem:[%s328 + $0x158] sm:$0xf]
      %v880 = vld [vmem:[%s328 + $0x15c] sm:$0xf]
      %v881 = vld [vmem:[%s328 + $0x160] sm:$0xf]
      %v882 = vld [vmem:[%s328 + $0x164] sm:$0xf]
      %v883 = vld [vmem:[%s328 + $0x168] sm:$0xf]
      %v884 = vld [vmem:[%s328 + $0x16c] sm:$0xf]
      %v885 = vld [vmem:[%s328 + $0x170] sm:$0xf]
      %v886 = vld [vmem:[%s328 + $0x174] sm:$0xf]
      %v887 = vld [vmem:[%s328 + $0x178] sm:$0xf]
      %v888 = vld [vmem:[%s328 + $0x17c] sm:$0xf]
      %v889 = vld [vmem:[%s328 + $0x180] sm:$0xf]
      %v890 = vld [vmem:[%s328 + $0x184] sm:$0xf]
      %v891 = vld [vmem:[%s328 + $0x188] sm:$0xf]
      %v892 = vld [vmem:[%s328 + $0x18c] sm:$0xf]
      %v893 = vld [vmem:[%s328 + $0x190] sm:$0xf]
      %v894 = vld [vmem:[%s328 + $0x194] sm:$0xf]
      %v895 = vld [vmem:[%s328 + $0x198] sm:$0xf]
      %v896 = vld [vmem:[%s328 + $0x19c] sm:$0xf]
      %v897 = vld [vmem:[%s328 + $0x1a0] sm:$0xf]
      %v898 = vld [vmem:[%s328 + $0x1a4] sm:$0xf]
      %v899 = vld [vmem:[%s328 + $0x1a8] sm:$0xf]
      %v900 = vld [vmem:[%s328 + $0x1ac] sm:$0xf]
      %v901 = vld [vmem:[%s328 + $0x1b0] sm:$0xf]
      %v902 = vld [vmem:[%s328 + $0x1b4] sm:$0xf]
      %v903 = vld [vmem:[%s328 + $0x1b8] sm:$0xf]
      %v904 = vld [vmem:[%s328 + $0x1bc] sm:$0xf]
      %v905 = vld [vmem:[%s328 + $0x1c0] sm:$0xf]
      %v906 = vld [vmem:[%s328 + $0x1c4] sm:$0xf]
      %v907 = vld [vmem:[%s328 + $0x1c8] sm:$0xf]
      %v908 = vld [vmem:[%s328 + $0x1cc] sm:$0xf]
      %v909 = vld [vmem:[%s328 + $0x1d0] sm:$0xf]
      %v910 = vld [vmem:[%s328 + $0x1d4] sm:$0xf]
      %v911 = vld [vmem:[%s328 + $0x1d8] sm:$0xf]
      %v912 = vld [vmem:[%s328 + $0x1dc] sm:$0xf]
      %v913 = vld [vmem:[%s328 + $0x1e0] sm:$0xf]
      %v914 = vld [vmem:[%s328 + $0x1e4] sm:$0xf]
      %v915 = vld [vmem:[%s328 + $0x1e8] sm:$0xf]
      %v916 = vld [vmem:[%s328 + $0x1ec] sm:$0xf]
      %v917 = vld [vmem:[%s328 + $0x1f0] sm:$0xf]
      %v918 = vld [vmem:[%s328 + $0x1f4] sm:$0xf]
      %v919 = vld [vmem:[%s328 + $0x1f8] sm:$0xf]
      %v920 = vld [vmem:[%s328 + $0x1fc] sm:$0xf]
      %v921 = vld [vmem:[%s328 + $0x200] sm:$0xf]
      %v922 = vld [vmem:[%s328 + $0x204] sm:$0xf]
      %v923 = vld [vmem:[%s328 + $0x208] sm:$0xf]
      %v924 = vld [vmem:[%s328 + $0x20c] sm:$0xf]
      %v925 = vld [vmem:[%s328 + $0x210] sm:$0xf]
      %v926 = vld [vmem:[%s328 + $0x214] sm:$0xf]
      %v927 = vld [vmem:[%s328 + $0x218] sm:$0xf]
      %v928 = vld [vmem:[%s328 + $0x21c] sm:$0xf]
      %v929 = vld [vmem:[%s328 + $0x220] sm:$0xf]
      %v930 = vld [vmem:[%s328 + $0x224] sm:$0xf]
      %v931 = vld [vmem:[%s328 + $0x228] sm:$0xf]
      %v932 = vld [vmem:[%s328 + $0x22c] sm:$0xf]
      %v933 = vld [vmem:[%s328 + $0x230] sm:$0xf]
      %v934 = vld [vmem:[%s328 + $0x234] sm:$0xf]
      %v935 = vld [vmem:[%s328 + $0x238] sm:$0xf]
      %v936 = vld [vmem:[%s328 + $0x23c] sm:$0xf]
      %v937 = vld [vmem:[%s331] sm:$0x1]
      %v939 = vlaneseq
      %v940 = vshrl.u32 %v939, 7
      %v941 = vsub.s32 0, %v940
      %v942 = vrot.slane %v937, %v941
      %v944 = vpack.c.b16 %v451, %v449
      %v945 = vpack.c.b16 %v751, %v745
      %v946 = vpack.c.b16 %v752, %v746
      %v947 = vpack.c.b16 %v547, %v545
      %v948 = vpack.c.b16 %v753, %v747
      %v949 = vpack.c.b16 %v754, %v748
      %v950 = vpack.c.b16 %v643, %v641
      %v951 = vpack.c.b16 %v755, %v749
      %v952 = vpack.c.b16 %v756, %v750
      %v953 = vpack.c.b16 %v455, %v453
      %v954 = vpack.c.b16 %v763, %v757
      %v955 = vpack.c.b16 %v764, %v758
      %v956 = vpack.c.b16 %v551, %v549
      %v957 = vpack.c.b16 %v765, %v759
      %v958 = vpack.c.b16 %v766, %v760
      %v959 = vpack.c.b16 %v647, %v645
      %v960 = vpack.c.b16 %v767, %v761
      %v961 = vpack.c.b16 %v768, %v762
      %v962 = vpack.c.b16 %v459, %v457
      %v963 = vpack.c.b16 %v775, %v769
      %v964 = vpack.c.b16 %v776, %v770
      %v965 = vpack.c.b16 %v555, %v553
      %v966 = vpack.c.b16 %v777, %v771
      %v967 = vpack.c.b16 %v778, %v772
      %v968 = vpack.c.b16 %v651, %v649
      %v969 = vpack.c.b16 %v779, %v773
      %v970 = vpack.c.b16 %v780, %v774
      %v971 = vpack.c.b16 %v463, %v461
      %v972 = vpack.c.b16 %v787, %v781
      %v973 = vpack.c.b16 %v788, %v782
      %v974 = vpack.c.b16 %v559, %v557
      %v975 = vpack.c.b16 %v789, %v783
      %v976 = vpack.c.b16 %v790, %v784
      %v977 = vpack.c.b16 %v655, %v653
      %v978 = vpack.c.b16 %v791, %v785
      %v979 = vpack.c.b16 %v792, %v786
      %v1160 = vunpack.c.l.b16 %v793
      %v1161 = vunpack.c.l.b16 %v794
      %v1162 = vunpack.c.l.b16 %v795
      %v1163 = vunpack.c.l.b16 %v796
      %v1164 = vunpack.c.l.b16 %v797
      %v1165 = vunpack.c.l.b16 %v798
      %v1166 = vunpack.c.l.b16 %v799
      %v1167 = vunpack.c.l.b16 %v800
      %v1168 = vunpack.c.l.b16 %v801
      %v1169 = vunpack.c.l.b16 %v802
      %v1170 = vunpack.c.l.b16 %v803
      %v1171 = vunpack.c.l.b16 %v804
      %v1172 = vunpack.c.l.b16 %v805
      %v1173 = vunpack.c.l.b16 %v806
      %v1174 = vunpack.c.l.b16 %v807
      %v1175 = vunpack.c.l.b16 %v808
      %v1176 = vunpack.c.l.b16 %v809
      %v1177 = vunpack.c.l.b16 %v810
      %v1178 = vunpack.c.l.b16 %v811
      %v1179 = vunpack.c.l.b16 %v812
      %v1180 = vunpack.c.l.b16 %v813
      %v1181 = vunpack.c.l.b16 %v814
      %v1182 = vunpack.c.l.b16 %v815
      %v1183 = vunpack.c.l.b16 %v816
      %v1184 = vunpack.c.l.b16 %v817
      %v1185 = vunpack.c.l.b16 %v818
      %v1186 = vunpack.c.l.b16 %v819
      %v1187 = vunpack.c.l.b16 %v820
      %v1188 = vunpack.c.l.b16 %v821
      %v1189 = vunpack.c.l.b16 %v822
      %v1190 = vunpack.c.l.b16 %v823
      %v1191 = vunpack.c.l.b16 %v824
      %v1192 = vunpack.c.l.b16 %v825
      %v1193 = vunpack.c.l.b16 %v826
      %v1194 = vunpack.c.l.b16 %v827
      %v1195 = vunpack.c.l.b16 %v828
      %v1196 = vunpack.c.l.b16 %v829
      %v1197 = vunpack.c.l.b16 %v830
      %v1198 = vunpack.c.l.b16 %v831
      %v1199 = vunpack.c.l.b16 %v832
      %v1200 = vunpack.c.l.b16 %v833
      %v1201 = vunpack.c.l.b16 %v834
      %v1202 = vunpack.c.l.b16 %v835
      %v1203 = vunpack.c.l.b16 %v836
      %v1204 = vunpack.c.l.b16 %v837
      %v1205 = vunpack.c.l.b16 %v838
      %v1206 = vunpack.c.l.b16 %v839
      %v1207 = vunpack.c.l.b16 %v840
      %v1208 = vunpack.c.l.b16 %v841
      %v1209 = vunpack.c.l.b16 %v842
      %v1210 = vunpack.c.l.b16 %v843
      %v1211 = vunpack.c.l.b16 %v844
      %v1212 = vunpack.c.l.b16 %v845
      %v1213 = vunpack.c.l.b16 %v846
      %v1214 = vunpack.c.l.b16 %v847
      %v1215 = vunpack.c.l.b16 %v848
      %v1216 = vunpack.c.l.b16 %v849
      %v1217 = vunpack.c.l.b16 %v850
      %v1218 = vunpack.c.l.b16 %v851
      %v1219 = vunpack.c.l.b16 %v852
      %v1220 = vunpack.c.l.b16 %v853
      %v1221 = vunpack.c.l.b16 %v854
      %v1222 = vunpack.c.l.b16 %v855
      %v1223 = vunpack.c.l.b16 %v856
      %v1224 = vunpack.c.l.b16 %v857
      %v1225 = vunpack.c.l.b16 %v858
      %v1226 = vunpack.c.l.b16 %v859
      %v1227 = vunpack.c.l.b16 %v860
      %v1228 = vunpack.c.l.b16 %v861
      %v1229 = vunpack.c.l.b16 %v862
      %v1230 = vunpack.c.l.b16 %v863
      %v1231 = vunpack.c.l.b16 %v864
      %v1232 = vunpack.c.l.b16 %v865
      %v1233 = vunpack.c.l.b16 %v866
      %v1234 = vunpack.c.l.b16 %v867
      %v1235 = vunpack.c.l.b16 %v868
      %v1236 = vunpack.c.l.b16 %v869
      %v1237 = vunpack.c.l.b16 %v870
      %v1238 = vunpack.c.l.b16 %v871
      %v1239 = vunpack.c.l.b16 %v872
      %v1240 = vunpack.c.l.b16 %v873
      %v1241 = vunpack.c.l.b16 %v874
      %v1242 = vunpack.c.l.b16 %v875
      %v1243 = vunpack.c.l.b16 %v876
      %v1244 = vunpack.c.l.b16 %v877
      %v1245 = vunpack.c.l.b16 %v878
      %v1246 = vunpack.c.l.b16 %v879
      %v1247 = vunpack.c.l.b16 %v880
      %v1248 = vunpack.c.l.b16 %v881
      %v1249 = vunpack.c.l.b16 %v882
      %v1250 = vunpack.c.l.b16 %v883
      %v1251 = vunpack.c.l.b16 %v884
      %v1252 = vunpack.c.l.b16 %v885
      %v1253 = vunpack.c.l.b16 %v886
      %v1254 = vunpack.c.l.b16 %v887
      %v1255 = vunpack.c.l.b16 %v888
      %v1256 = vunpack.c.l.b16 %v889
      %v1257 = vunpack.c.l.b16 %v890
      %v1258 = vunpack.c.l.b16 %v891
      %v1259 = vunpack.c.l.b16 %v892
      %v1260 = vunpack.c.l.b16 %v893
      %v1261 = vunpack.c.l.b16 %v894
      %v1262 = vunpack.c.l.b16 %v895
      %v1263 = vunpack.c.l.b16 %v896
      %v1264 = vunpack.c.l.b16 %v897
      %v1265 = vunpack.c.l.b16 %v898
      %v1266 = vunpack.c.l.b16 %v899
      %v1267 = vunpack.c.l.b16 %v900
      %v1268 = vunpack.c.l.b16 %v901
      %v1269 = vunpack.c.l.b16 %v902
      %v1270 = vunpack.c.l.b16 %v903
      %v1271 = vunpack.c.l.b16 %v904
      %v1272 = vunpack.c.l.b16 %v905
      %v1273 = vunpack.c.l.b16 %v906
      %v1274 = vunpack.c.l.b16 %v907
      %v1275 = vunpack.c.l.b16 %v908
      %v1276 = vunpack.c.l.b16 %v909
      %v1277 = vunpack.c.l.b16 %v910
      %v1278 = vunpack.c.l.b16 %v911
      %v1279 = vunpack.c.l.b16 %v912
      %v1280 = vunpack.c.l.b16 %v913
      %v1281 = vunpack.c.l.b16 %v914
      %v1282 = vunpack.c.l.b16 %v915
      %v1283 = vunpack.c.l.b16 %v916
      %v1284 = vunpack.c.l.b16 %v917
      %v1285 = vunpack.c.l.b16 %v918
      %v1286 = vunpack.c.l.b16 %v919
      %v1287 = vunpack.c.l.b16 %v920
      %v1288 = vunpack.c.l.b16 %v921
      %v1289 = vunpack.c.l.b16 %v922
      %v1290 = vunpack.c.l.b16 %v923
      %v1291 = vunpack.c.l.b16 %v924
      %v1292 = vunpack.c.l.b16 %v925
      %v1293 = vunpack.c.l.b16 %v926
      %v1294 = vunpack.c.l.b16 %v927
      %v1295 = vunpack.c.l.b16 %v928
      %v1296 = vunpack.c.l.b16 %v929
      %v1297 = vunpack.c.l.b16 %v930
      %v1298 = vunpack.c.l.b16 %v931
      %v1299 = vunpack.c.l.b16 %v932
      %v1300 = vunpack.c.l.b16 %v933
      %v1301 = vunpack.c.l.b16 %v934
      %v1302 = vunpack.c.l.b16 %v935
      %v1303 = vunpack.c.l.b16 %v936
      %v1304 = vpack.c.b16 %v1161, %v1160
      %v1305 = vpack.c.b16 %v1163, %v1162
      %v1306 = vpack.c.b16 %v1165, %v1164
      %v1307 = vpack.c.b16 %v1167, %v1166
      %v1308 = vpack.c.b16 %v1169, %v1168
      %v1309 = vpack.c.b16 %v1171, %v1170
      %v1310 = vpack.c.b16 %v1173, %v1172
      %v1311 = vpack.c.b16 %v1175, %v1174
      %v1312 = vpack.c.b16 %v1177, %v1176
      %v1313 = vpack.c.b16 %v1179, %v1178
      %v1314 = vpack.c.b16 %v1181, %v1180
      %v1315 = vpack.c.b16 %v1183, %v1182
      %v1316 = vpack.c.b16 %v1185, %v1184
      %v1317 = vpack.c.b16 %v1187, %v1186
      %v1318 = vpack.c.b16 %v1189, %v1188
      %v1319 = vpack.c.b16 %v1191, %v1190
      %v1320 = vpack.c.b16 %v1193, %v1192
      %v1321 = vpack.c.b16 %v1195, %v1194
      %v1322 = vpack.c.b16 %v1197, %v1196
      %v1323 = vpack.c.b16 %v1199, %v1198
      %v1324 = vpack.c.b16 %v1201, %v1200
      %v1325 = vpack.c.b16 %v1203, %v1202
      %v1326 = vpack.c.b16 %v1205, %v1204
      %v1327 = vpack.c.b16 %v1207, %v1206
      %v1328 = vpack.c.b16 %v1209, %v1208
      %v1329 = vpack.c.b16 %v1211, %v1210
      %v1330 = vpack.c.b16 %v1213, %v1212
      %v1331 = vpack.c.b16 %v1215, %v1214
      %v1332 = vpack.c.b16 %v1217, %v1216
      %v1333 = vpack.c.b16 %v1219, %v1218
      %v1334 = vpack.c.b16 %v1221, %v1220
      %v1335 = vpack.c.b16 %v1223, %v1222
      %v1336 = vpack.c.b16 %v1225, %v1224
      %v1337 = vpack.c.b16 %v1227, %v1226
      %v1338 = vpack.c.b16 %v1229, %v1228
      %v1339 = vpack.c.b16 %v1231, %v1230
      %v1340 = vpack.c.b16 %v1233, %v1232
      %v1341 = vpack.c.b16 %v1235, %v1234
      %v1342 = vpack.c.b16 %v1237, %v1236
      %v1343 = vpack.c.b16 %v1239, %v1238
      %v1344 = vpack.c.b16 %v1241, %v1240
      %v1345 = vpack.c.b16 %v1243, %v1242
      %v1346 = vpack.c.b16 %v1245, %v1244
      %v1347 = vpack.c.b16 %v1247, %v1246
      %v1348 = vpack.c.b16 %v1249, %v1248
      %v1349 = vpack.c.b16 %v1251, %v1250
      %v1350 = vpack.c.b16 %v1253, %v1252
      %v1351 = vpack.c.b16 %v1255, %v1254
      %v1352 = vpack.c.b16 %v1257, %v1256
      %v1353 = vpack.c.b16 %v1259, %v1258
      %v1354 = vpack.c.b16 %v1261, %v1260
      %v1355 = vpack.c.b16 %v1263, %v1262
      %v1356 = vpack.c.b16 %v1265, %v1264
      %v1357 = vpack.c.b16 %v1267, %v1266
      %v1358 = vpack.c.b16 %v1269, %v1268
      %v1359 = vpack.c.b16 %v1271, %v1270
      %v1360 = vpack.c.b16 %v1273, %v1272
      %v1361 = vpack.c.b16 %v1275, %v1274
      %v1362 = vpack.c.b16 %v1277, %v1276
      %v1363 = vpack.c.b16 %v1279, %v1278
      %v1364 = vpack.c.b16 %v1281, %v1280
      %v1365 = vpack.c.b16 %v1283, %v1282
      %v1366 = vpack.c.b16 %v1285, %v1284
      %v1367 = vpack.c.b16 %v1287, %v1286
      %v1368 = vpack.c.b16 %v1289, %v1288
      %v1369 = vpack.c.b16 %v1291, %v1290
      %v1370 = vpack.c.b16 %v1293, %v1292
      %v1371 = vpack.c.b16 %v1295, %v1294
      %v1372 = vpack.c.b16 %v1297, %v1296
      %v1373 = vpack.c.b16 %v1299, %v1298
      %v1374 = vpack.c.b16 %v1301, %v1300
      %v1375 = vpack.c.b16 %v1303, %v1302
      %1448 = vmatprep.subr.bf16.mxu0 0
      %1449 = vmatpush1.bf16.msra.mxu0 %v1304
      %1450 = vmatprep.subr.bf16.mxu0 0
      %1451 = vmatpush1.bf16.msra.mxu0 %v1305
      %1452 = vmatprep.subr.bf16.mxu0 0
      %1453 = vmatpush1.bf16.msra.mxu0 %v1306
      %1454 = vmatprep.subr.bf16.mxu0 0
      %1455 = vmatpush1.bf16.msra.mxu0 %v1307
      %1456 = vmatprep.subr.bf16.mxu0 0
      %1457 = vmatpush1.bf16.msra.mxu0 %v1308
      %1458 = vmatprep.subr.bf16.mxu0 0
      %1459 = vmatpush1.bf16.msra.mxu0 %v1309
      %1460 = vmatprep.subr.bf16.mxu0 0
      %1461 = vmatpush1.bf16.msra.mxu0 %v1310
      %1462 = vmatprep.subr.bf16.mxu0 0
      %1463 = vmatpush1.bf16.msra.mxu0 %v1311
      %1464 = vmatprep.subr.bf16.mxu0 0
      %1465 = vmatpush1.bf16.msra.mxu0 %v1312
      %1466 = vmatprep.subr.bf16.mxu0 0
      %1467 = vmatpush1.bf16.msra.mxu0 %v1313
      %1468 = vmatprep.subr.bf16.mxu0 0
      %1469 = vmatpush1.bf16.msra.mxu0 %v1314
      %1470 = vmatprep.subr.bf16.mxu0 0
      %1471 = vmatpush1.bf16.msra.mxu0 %v1315
      %1472 = vmatprep.subr.bf16.mxu0 0
      %1473 = vmatpush1.bf16.msra.mxu0 %v1316
      %1474 = vmatprep.subr.bf16.mxu0 0
      %1475 = vmatpush1.bf16.msra.mxu0 %v1317
      %1476 = vmatprep.subr.bf16.mxu0 0
      %1477 = vmatpush1.bf16.msra.mxu0 %v1318
      %1478 = vmatprep.subr.bf16.mxu0 0
      %1479 = vmatpush1.bf16.msra.mxu0 %v1319
      %1480 = vmatprep.mubr.bf16.mxu0 %v945
      %1481 = vmatmul.mubr.bf16.gmra.mrb[0].mxu0 %v944
      %v1482 = vpop.f32.mrb[0].mxu0
      %v1483 = vadd.f32 %v942, %v1482
      %v1484 = vpop.f32.mrb[0].mxu0
      %v1485 = vpop.f32.mrb[0].mxu0
      %v1486 = vadd.f32 %v942, %v1485
      %v1487 = vpop.f32.mrb[0].mxu0
      %1488 = vmatprep.mubr.bf16.mxu0 %v954
      %1489 = vmatmul.mubr.bf16.gmra.mrb[0].mxu0 %v953
      %v1490 = vpop.f32.mrb[0].mxu0
      %v1491 = vadd.f32 %v942, %v1490
      %v1492 = vpop.f32.mrb[0].mxu0
      %v1493 = vpop.f32.mrb[0].mxu0
      %v1494 = vadd.f32 %v942, %v1493
      %v1495 = vpop.f32.mrb[0].mxu0
      %1496 = vmatprep.mubr.bf16.mxu0 %v963
      %1497 = vmatmul.mubr.bf16.gmra.mrb[0].mxu0 %v962
      %v1498 = vpop.f32.mrb[0].mxu0
      %v1499 = vadd.f32 %v942, %v1498
      %v1500 = vpop.f32.mrb[0].mxu0
      %v1501 = vpop.f32.mrb[0].mxu0
      %v1502 = vadd.f32 %v942, %v1501
      %v1503 = vpop.f32.mrb[0].mxu0
      %1504 = vmatprep.mubr.bf16.mxu0 %v972
      %1505 = vmatmul.mubr.bf16.gmra.mrb[0].mxu0 %v971
      %v1506 = vpop.f32.mrb[0].mxu0
      %v1507 = vadd.f32 %v942, %v1506
      %v1508 = vpop.f32.mrb[0].mxu0
      %v1509 = vpop.f32.mrb[0].mxu0
      %v1510 = vadd.f32 %v942, %v1509
      %v1511 = vpop.f32.mrb[0].mxu0
      %1512 = vdwg.mxu0
      %1513 = vmatprep.subr.bf16.mxu0 0
      %1514 = vmatpush1.bf16.msra.mxu0 %v1320
      %1515 = vmatprep.subr.bf16.mxu0 0
      %1516 = vmatpush1.bf16.msra.mxu0 %v1321
      %1517 = vmatprep.subr.bf16.mxu0 0
      %1518 = vmatpush1.bf16.msra.mxu0 %v1322
      %1519 = vmatprep.subr.bf16.mxu0 0
      %1520 = vmatpush1.bf16.msra.mxu0 %v1323
      %1521 = vmatprep.subr.bf16.mxu0 0
      %1522 = vmatpush1.bf16.msra.mxu0 %v1324
      %1523 = vmatprep.subr.bf16.mxu0 0
      %1524 = vmatpush1.bf16.msra.mxu0 %v1325
      %1525 = vmatprep.subr.bf16.mxu0 0
      %1526 = vmatpush1.bf16.msra.mxu0 %v1326
      %1527 = vmatprep.subr.bf16.mxu0 0
      %1528 = vmatpush1.bf16.msra.mxu0 %v1327
      %1529 = vmatprep.subr.bf16.mxu0 0
      %1530 = vmatpush1.bf16.msra.mxu0 %v1328
      %1531 = vmatprep.subr.bf16.mxu0 0
      %1532 = vmatpush1.bf16.msra.mxu0 %v1329
      %1533 = vmatprep.subr.bf16.mxu0 0
      %1534 = vmatpush1.bf16.msra.mxu0 %v1330
      %1535 = vmatprep.subr.bf16.mxu0 0
      %1536 = vmatpush1.bf16.msra.mxu0 %v1331
      %1537 = vmatprep.subr.bf16.mxu0 0
      %1538 = vmatpush1.bf16.msra.mxu0 %v1332
      %1539 = vmatprep.subr.bf16.mxu0 0
      %1540 = vmatpush1.bf16.msra.mxu0 %v1333
      %1541 = vmatprep.subr.bf16.mxu0 0
      %1542 = vmatpush1.bf16.msra.mxu0 %v1334
      %1543 = vmatprep.subr.bf16.mxu0 0
      %1544 = vmatpush1.bf16.msra.mxu0 %v1335
      %1545 = vmatprep.mubr.bf16.mxu0 %v947
      %1546 = vmatmul.mubr.bf16.gmra.mrb[0].mxu0 %v946
      %v1547 = vpop.f32.mrb[0].mxu0
      %v1548 = vadd.f32 %v1483, %v1547
      %v1549 = vpop.f32.mrb[0].mxu0
      %v1550 = vpop.f32.mrb[0].mxu0
      %v1551 = vadd.f32 %v1486, %v1550
      %v1552 = vpop.f32.mrb[0].mxu0
      %1553 = vmatprep.mubr.bf16.mxu0 %v956
      %1554 = vmatmul.mubr.bf16.gmra.mrb[0].mxu0 %v955
      %v1555 = vpop.f32.mrb[0].mxu0
      %v1556 = vadd.f32 %v1491, %v1555
      %v1557 = vpop.f32.mrb[0].mxu0
      %v1558 = vpop.f32.mrb[0].mxu0
      %v1559 = vadd.f32 %v1494, %v1558
      %v1560 = vpop.f32.mrb[0].mxu0
      %1561 = vmatprep.mubr.bf16.mxu0 %v965
      %1562 = vmatmul.mubr.bf16.gmra.mrb[0].mxu0 %v964
      %v1563 = vpop.f32.mrb[0].mxu0
      %v1564 = vadd.f32 %v1499, %v1563
      %v1565 = vpop.f32.mrb[0].mxu0
      %v1566 = vpop.f32.mrb[0].mxu0
      %v1567 = vadd.f32 %v1502, %v1566
      %v1568 = vpop.f32.mrb[0].mxu0
      %1569 = vmatprep.mubr.bf16.mxu0 %v974
      %1570 = vmatmul.mubr.bf16.gmra.mrb[0].mxu0 %v973
      %v1571 = vpop.f32.mrb[0].mxu0
      %v1572 = vadd.f32 %v1507, %v1571
      %v1573 = vpop.f32.mrb[0].mxu0
      %v1574 = vpop.f32.mrb[0].mxu0
      %v1575 = vadd.f32 %v1510, %v1574
      %v1576 = vpop.f32.mrb[0].mxu0
      %1577 = vdwg.mxu0
      %1578 = vmatprep.subr.bf16.mxu0 0
      %1579 = vmatpush1.bf16.msra.mxu0 %v1336
      %1580 = vmatprep.subr.bf16.mxu0 0
      %1581 = vmatpush1.bf16.msra.mxu0 %v1337
      %1582 = vmatprep.subr.bf16.mxu0 0
      %1583 = vmatpush1.bf16.msra.mxu0 %v1338
      %1584 = vmatprep.subr.bf16.mxu0 0
      %1585 = vmatpush1.bf16.msra.mxu0 %v1339
      %1586 = vmatprep.subr.bf16.mxu0 0
      %1587 = vmatpush1.bf16.msra.mxu0 %v1340
      %1588 = vmatprep.subr.bf16.mxu0 0
      %1589 = vmatpush1.bf16.msra.mxu0 %v1341
      %1590 = vmatprep.subr.bf16.mxu0 0
      %1591 = vmatpush1.bf16.msra.mxu0 %v1342
      %1592 = vmatprep.subr.bf16.mxu0 0
      %1593 = vmatpush1.bf16.msra.mxu0 %v1343
      %1594 = vmatprep.subr.bf16.mxu0 0
      %1595 = vmatpush1.bf16.msra.mxu0 %v1344
      %1596 = vmatprep.subr.bf16.mxu0 0
      %1597 = vmatpush1.bf16.msra.mxu0 %v1345
      %1598 = vmatprep.subr.bf16.mxu0 0
      %1599 = vmatpush1.bf16.msra.mxu0 %v1346
      %1600 = vmatprep.subr.bf16.mxu0 0
      %1601 = vmatpush1.bf16.msra.mxu0 %v1347
      %1602 = vmatprep.subr.bf16.mxu0 0
      %1603 = vmatpush1.bf16.msra.mxu0 %v1348
      %1604 = vmatprep.subr.bf16.mxu0 0
      %1605 = vmatpush1.bf16.msra.mxu0 %v1349
      %1606 = vmatprep.subr.bf16.mxu0 0
      %1607 = vmatpush1.bf16.msra.mxu0 %v1350
      %1608 = vmatprep.subr.bf16.mxu0 0
      %1609 = vmatpush1.bf16.msra.mxu0 %v1351
      %1610 = vmatprep.mubr.bf16.mxu0 %v949
      %1611 = vmatmul.mubr.bf16.gmra.mrb[0].mxu0 %v948
      %v1612 = vpop.f32.mrb[0].mxu0
      %v1613 = vadd.f32 %v1548, %v1612
      %v1614 = vpop.f32.mrb[0].mxu0
      %v1615 = vpop.f32.mrb[0].mxu0
      %v1616 = vadd.f32 %v1551, %v1615
      %v1617 = vpop.f32.mrb[0].mxu0
      %1618 = vmatprep.mubr.bf16.mxu0 %v958
      %1619 = vmatmul.mubr.bf16.gmra.mrb[0].mxu0 %v957
      %v1620 = vpop.f32.mrb[0].mxu0
      %v1621 = vadd.f32 %v1556, %v1620
      %v1622 = vpop.f32.mrb[0].mxu0
      %v1623 = vpop.f32.mrb[0].mxu0
      %v1624 = vadd.f32 %v1559, %v1623
      %v1625 = vpop.f32.mrb[0].mxu0
      %1626 = vmatprep.mubr.bf16.mxu0 %v967
      %1627 = vmatmul.mubr.bf16.gmra.mrb[0].mxu0 %v966
      %v1628 = vpop.f32.mrb[0].mxu0
      %v1629 = vadd.f32 %v1564, %v1628
      %v1630 = vpop.f32.mrb[0].mxu0
      %v1631 = vpop.f32.mrb[0].mxu0
      %v1632 = vadd.f32 %v1567, %v1631
      %v1633 = vpop.f32.mrb[0].mxu0
      %1634 = vmatprep.mubr.bf16.mxu0 %v976
      %1635 = vmatmul.mubr.bf16.gmra.mrb[0].mxu0 %v975
      %v1636 = vpop.f32.mrb[0].mxu0
      %v1637 = vadd.f32 %v1572, %v1636
      %v1638 = vpop.f32.mrb[0].mxu0
      %v1639 = vpop.f32.mrb[0].mxu0
      %v1640 = vadd.f32 %v1575, %v1639
      %v1641 = vpop.f32.mrb[0].mxu0
      %1642 = vdwg.mxu0
      %1643 = vmatprep.subr.bf16.mxu0 0
      %1644 = vmatpush1.bf16.msra.mxu0 %v1352
      %1645 = vmatprep.subr.bf16.mxu0 0
      %1646 = vmatpush1.bf16.msra.mxu0 %v1353
      %1647 = vmatprep.subr.bf16.mxu0 0
      %1648 = vmatpush1.bf16.msra.mxu0 %v1354
      %1649 = vmatprep.subr.bf16.mxu0 0
      %1650 = vmatpush1.bf16.msra.mxu0 %v1355
      %1651 = vmatprep.subr.bf16.mxu0 0
      %1652 = vmatpush1.bf16.msra.mxu0 %v1356
      %1653 = vmatprep.subr.bf16.mxu0 0
      %1654 = vmatpush1.bf16.msra.mxu0 %v1357
      %1655 = vmatprep.subr.bf16.mxu0 0
      %1656 = vmatpush1.bf16.msra.mxu0 %v1358
      %1657 = vmatprep.subr.bf16.mxu0 0
      %1658 = vmatpush1.bf16.msra.mxu0 %v1359
      %1659 = vmatprep.subr.bf16.mxu0 0
      %1660 = vmatpush1.bf16.msra.mxu0 %v1360
      %1661 = vmatprep.subr.bf16.mxu0 0
      %1662 = vmatpush1.bf16.msra.mxu0 %v1361
      %1663 = vmatprep.subr.bf16.mxu0 0
      %1664 = vmatpush1.bf16.msra.mxu0 %v1362
      %1665 = vmatprep.subr.bf16.mxu0 0
      %1666 = vmatpush1.bf16.msra.mxu0 %v1363
      %1667 = vmatprep.subr.bf16.mxu0 0
      %1668 = vmatpush1.bf16.msra.mxu0 %v1364
      %1669 = vmatprep.subr.bf16.mxu0 0
      %1670 = vmatpush1.bf16.msra.mxu0 %v1365
      %1671 = vmatprep.subr.bf16.mxu0 0
      %1672 = vmatpush1.bf16.msra.mxu0 %v1366
      %1673 = vmatprep.subr.bf16.mxu0 0
      %1674 = vmatpush1.bf16.msra.mxu0 %v1367
      %1675 = vmatprep.mubr.bf16.mxu0 %v951
      %1676 = vmatmul.mubr.bf16.gmra.mrb[0].mxu0 %v950
      %v1677 = vpop.f32.mrb[0].mxu0
      %v1678 = vadd.f32 %v1613, %v1677
      %v1679 = vpop.f32.mrb[0].mxu0
      %v1680 = vpop.f32.mrb[0].mxu0
      %v1681 = vadd.f32 %v1616, %v1680
      %v1682 = vpop.f32.mrb[0].mxu0
      %1683 = vmatprep.mubr.bf16.mxu0 %v960
      %1684 = vmatmul.mubr.bf16.gmra.mrb[0].mxu0 %v959
      %v1685 = vpop.f32.mrb[0].mxu0
      %v1686 = vadd.f32 %v1621, %v1685
      %v1687 = vpop.f32.mrb[0].mxu0
      %v1688 = vpop.f32.mrb[0].mxu0
      %v1689 = vadd.f32 %v1624, %v1688
      %v1690 = vpop.f32.mrb[0].mxu0
      %1691 = vmatprep.mubr.bf16.mxu0 %v969
      %1692 = vmatmul.mubr.bf16.gmra.mrb[0].mxu0 %v968
      %v1693 = vpop.f32.mrb[0].mxu0
      %v1694 = vadd.f32 %v1629, %v1693
      %v1695 = vpop.f32.mrb[0].mxu0
      %v1696 = vpop.f32.mrb[0].mxu0
      %v1697 = vadd.f32 %v1632, %v1696
      %v1698 = vpop.f32.mrb[0].mxu0
      %1699 = vmatprep.mubr.bf16.mxu0 %v978
      %1700 = vmatmul.mubr.bf16.gmra.mrb[0].mxu0 %v977
      %v1701 = vpop.f32.mrb[0].mxu0
      %v1702 = vadd.f32 %v1637, %v1701
      %v1703 = vpop.f32.mrb[0].mxu0
      %v1704 = vpop.f32.mrb[0].mxu0
      %v1705 = vadd.f32 %v1640, %v1704
      %v1706 = vpop.f32.mrb[0].mxu0
      %1707 = vdwg.mxu0
      %1708 = vmatprep.subr.bf16.mxu0 0
      %1709 = vmatpush1.bf16.msra.mxu0 %v1368
      %1710 = vmatprep.subr.bf16.mxu0 0
      %1711 = vmatpush1.bf16.msra.mxu0 %v1369
      %1712 = vmatprep.subr.bf16.mxu0 0
      %1713 = vmatpush1.bf16.msra.mxu0 %v1370
      %1714 = vmatprep.subr.bf16.mxu0 0
      %1715 = vmatpush1.bf16.msra.mxu0 %v1371
      %1716 = vmatprep.subr.bf16.mxu0 0
      %1717 = vmatpush1.bf16.msra.mxu0 %v1372
      %1718 = vmatprep.subr.bf16.mxu0 0
      %1719 = vmatpush1.bf16.msra.mxu0 %v1373
      %1720 = vmatprep.subr.bf16.mxu0 0
      %1721 = vmatpush1.bf16.msra.mxu0 %v1374
      %1722 = vmatprep.subr.bf16.mxu0 0
      %1723 = vmatpush1.bf16.msra.mxu0 %v1375
      %1724 = vmatprep.subr.bf16.mxu0 0
      %1725 = vmatpush1.bf16.msra.mxu0 0
      %1726 = vmatprep.subr.bf16.mxu0 0
      %1727 = vmatpush1.bf16.msra.mxu0 0
      %1728 = vmatprep.subr.bf16.mxu0 0
      %1729 = vmatpush1.bf16.msra.mxu0 0
      %1730 = vmatprep.subr.bf16.mxu0 0
      %1731 = vmatpush1.bf16.msra.mxu0 0
      %1732 = vmatprep.subr.bf16.mxu0 0
      %1733 = vmatpush1.bf16.msra.mxu0 0
      %1734 = vmatprep.subr.bf16.mxu0 0
      %1735 = vmatpush1.bf16.msra.mxu0 0
      %1736 = vmatprep.subr.bf16.mxu0 0
      %1737 = vmatpush1.bf16.msra.mxu0 0
      %1738 = vmatprep.subr.bf16.mxu0 0
      %1739 = vmatpush1.bf16.msra.mxu0 0
      %1740 = vmatprep.mubr.bf16.mxu0 0
      %1741 = vmatmul.mubr.bf16.gmra.mrb[0].mxu0 %v952
      %v1742 = vpop.f32.mrb[0].mxu0
      %v1743 = vadd.f32 %v1678, %v1742
      %v1744 = vpop.f32.mrb[0].mxu0
      %v1745 = vpop.f32.mrb[0].mxu0
      %v1746 = vadd.f32 %v1681, %v1745
      %v1747 = vpop.f32.mrb[0].mxu0
      %1748 = vmatprep.mubr.bf16.mxu0 0
      %1749 = vmatmul.mubr.bf16.gmra.mrb[0].mxu0 %v961
      %v1750 = vpop.f32.mrb[0].mxu0
      %v1751 = vadd.f32 %v1686, %v1750
      %v1752 = vpop.f32.mrb[0].mxu0
      %v1753 = vpop.f32.mrb[0].mxu0
      %v1754 = vadd.f32 %v1689, %v1753
      %v1755 = vpop.f32.mrb[0].mxu0
      %1756 = vmatprep.mubr.bf16.mxu0 0
      %1757 = vmatmul.mubr.bf16.gmra.mrb[0].mxu0 %v970
      %v1758 = vpop.f32.mrb[0].mxu0
      %v1759 = vadd.f32 %v1694, %v1758
      %v1760 = vpop.f32.mrb[0].mxu0
      %v1761 = vpop.f32.mrb[0].mxu0
      %v1762 = vadd.f32 %v1697, %v1761
      %v1763 = vpop.f32.mrb[0].mxu0
      %1764 = vmatprep.mubr.bf16.mxu0 0
      %1765 = vmatmul.mubr.bf16.gmra.mrb[0].mxu0 %v979
      %v1766 = vpop.f32.mrb[0].mxu0
      %v1767 = vadd.f32 %v1702, %v1766
      %v1768 = vpop.f32.mrb[0].mxu0
      %v1769 = vpop.f32.mrb[0].mxu0
      %v1770 = vadd.f32 %v1705, %v1769
      %v1771 = vpop.f32.mrb[0].mxu0
      %1772 = vdwg.mxu0
      %v1773 = vmax.f32 %v1743, 0.0
      %v1774 = vmax.f32 %v1746, 0.0
      %v1775 = vmax.f32 %v1751, 0.0
      %v1776 = vmax.f32 %v1754, 0.0
      %v1777 = vmax.f32 %v1759, 0.0
      %v1778 = vmax.f32 %v1762, 0.0
      %v1779 = vmax.f32 %v1767, 0.0
      %v1780 = vmax.f32 %v1770, 0.0
      %v1781 = vpack.c.bf16 %v1774, %v1773
      %v1782 = vpack.c.bf16 %v1776, %v1775
      %v1783 = vpack.c.bf16 %v1778, %v1777
      %v1784 = vpack.c.bf16 %v1780, %v1779
      %1785 = vst [vmem:[%s346] sm:$0xf] 0
      %1786 = vst [vmem:[%s346 + $0x4] sm:$0x1] 0
      %s1787 = scalar_lea.vmem %s346, 72
      %1788 = vst [vmem:[%s1787] sm:$0xf] 0
      %1789 = vst [vmem:[%s1787 + $0x4] sm:$0x1] 0
      %s1790 = scalar_lea.vmem %s346, 8
      %vm1791 = vcmask 1040384
      %vm1792 = vsmask.f32 256
      %vm1793 = vmand %vm1791, %vm1792
      %v1794 = vld [vmem:[%s1790] sm:$0x1]
      %v1795 = vsel %vm1793, 0, %v1794
      %1796 = vst [vmem:[%s1790] sm:$0x1] %v1795
      %v1797 = vld [vmem:[%s1790 + $0x8] sm:$0x1]
      %v1798 = vsel %vm1793, 0, %v1797
      %1799 = vst [vmem:[%s1790 + $0x8] sm:$0x1] %v1798
      %v1800 = vld [vmem:[%s1790 + $0x10] sm:$0x1]
      %v1801 = vsel %vm1793, 0, %v1800
      %1802 = vst [vmem:[%s1790 + $0x10] sm:$0x1] %v1801
      %v1803 = vld [vmem:[%s1790 + $0x18] sm:$0x1]
      %v1804 = vsel %vm1793, 0, %v1803
      %1805 = vst [vmem:[%s1790 + $0x18] sm:$0x1] %v1804
      %v1806 = vld [vmem:[%s1790 + $0x20] sm:$0x1]
      %v1807 = vsel %vm1793, 0, %v1806
      %1808 = vst [vmem:[%s1790 + $0x20] sm:$0x1] %v1807
      %v1809 = vld [vmem:[%s1790 + $0x28] sm:$0x1]
      %v1810 = vsel %vm1793, 0, %v1809
      %1811 = vst [vmem:[%s1790 + $0x28] sm:$0x1] %v1810
      %v1812 = vld [vmem:[%s1790 + $0x30] sm:$0x1]
      %v1813 = vsel %vm1793, 0, %v1812
      %1814 = vst [vmem:[%s1790 + $0x30] sm:$0x1] %v1813
      %v1815 = vld [vmem:[%s1790 + $0x38] sm:$0x1]
      %v1816 = vsel %vm1793, 0, %v1815
      %1817 = vst [vmem:[%s1790 + $0x38] sm:$0x1] %v1816
      %vm1818 = vsmask.f32 7938
      %vm1819 = vmand %vm1791, %vm1818
      %v1820 = vld [vmem:[%s1790 + $0x4] sm:$0x1]
      %v1821 = vsel %vm1819, 0, %v1820
      %1822 = vst [vmem:[%s1790 + $0x4] sm:$0x1] %v1821
      %v1823 = vld [vmem:[%s1790 + $0xc] sm:$0x1]
      %v1824 = vsel %vm1819, 0, %v1823
      %1825 = vst [vmem:[%s1790 + $0xc] sm:$0x1] %v1824
      %v1826 = vld [vmem:[%s1790 + $0x14] sm:$0x1]
      %v1827 = vsel %vm1819, 0, %v1826
      %1828 = vst [vmem:[%s1790 + $0x14] sm:$0x1] %v1827
      %v1829 = vld [vmem:[%s1790 + $0x1c] sm:$0x1]
      %v1830 = vsel %vm1819, 0, %v1829
      %1831 = vst [vmem:[%s1790 + $0x1c] sm:$0x1] %v1830
      %v1832 = vld [vmem:[%s1790 + $0x24] sm:$0x1]
      %v1833 = vsel %vm1819, 0, %v1832
      %1834 = vst [vmem:[%s1790 + $0x24] sm:$0x1] %v1833
      %v1835 = vld [vmem:[%s1790 + $0x2c] sm:$0x1]
      %v1836 = vsel %vm1819, 0, %v1835
      %1837 = vst [vmem:[%s1790 + $0x2c] sm:$0x1] %v1836
      %v1838 = vld [vmem:[%s1790 + $0x34] sm:$0x1]
      %v1839 = vsel %vm1819, 0, %v1838
      %1840 = vst [vmem:[%s1790 + $0x34] sm:$0x1] %v1839
      %v1841 = vld [vmem:[%s1790 + $0x3c] sm:$0x1]
      %v1842 = vsel %vm1819, 0, %v1841
      %1843 = vst [vmem:[%s1790 + $0x3c] sm:$0x1] %v1842
      %v1848 = vunpack.c.l.b16 %v1781
      %v1849 = vunpack.c.h.b16 %v1781
      %v1850 = vunpack.c.l.b16 %v1782
      %v1851 = vunpack.c.h.b16 %v1782
      %v1852 = vunpack.c.l.b16 %v1783
      %v1853 = vunpack.c.h.b16 %v1783
      %v1854 = vunpack.c.l.b16 %v1784
      %v1855 = vunpack.c.h.b16 %v1784
      %v1856 = vpack.c.b16 %v1848, %v1848
      %v1857 = vpack.c.b16 %v1849, %v1849
      %v1858 = vpack.c.b16 %v1850, %v1850
      %v1859 = vpack.c.b16 %v1851, %v1851
      %v1860 = vpack.c.b16 %v1852, %v1852
      %v1861 = vpack.c.b16 %v1853, %v1853
      %v1862 = vpack.c.b16 %v1854, %v1854
      %v1863 = vpack.c.b16 %v1855, %v1855
      %v1865 = vshrl.u32 %v1856, 16
      %v1867 = vrot.slane %v1865, 7
      %v1868 = vshll.u32 %v1856, 16
      %v1870 = vor.u32 %v1867, %v1868
      %v1871 = vrot.slane %v1867, 4
      %v1873 = vshrl.u32 %v1857, 16
      %v1875 = vrot.slane %v1873, 7
      %v1876 = vshll.u32 %v1857, 16
      %v1878 = vor.u32 %v1875, %v1876
      %v1879 = vrot.slane %v1875, 4
      %v1881 = vshrl.u32 %v1858, 16
      %v1883 = vrot.slane %v1881, 7
      %v1884 = vshll.u32 %v1858, 16
      %v1886 = vor.u32 %v1883, %v1884
      %v1887 = vrot.slane %v1883, 4
      %v1889 = vshrl.u32 %v1859, 16
      %v1891 = vrot.slane %v1889, 7
      %v1892 = vshll.u32 %v1859, 16
      %v1894 = vor.u32 %v1891, %v1892
      %v1895 = vrot.slane %v1891, 4
      %v1897 = vshrl.u32 %v1860, 16
      %v1899 = vrot.slane %v1897, 7
      %v1900 = vshll.u32 %v1860, 16
      %v1902 = vor.u32 %v1899, %v1900
      %v1903 = vrot.slane %v1899, 4
      %v1905 = vshrl.u32 %v1861, 16
      %v1907 = vrot.slane %v1905, 7
      %v1908 = vshll.u32 %v1861, 16
      %v1910 = vor.u32 %v1907, %v1908
      %v1911 = vrot.slane %v1907, 4
      %v1913 = vshrl.u32 %v1862, 16
      %v1915 = vrot.slane %v1913, 7
      %v1916 = vshll.u32 %v1862, 16
      %v1918 = vor.u32 %v1915, %v1916
      %v1919 = vrot.slane %v1915, 4
      %v1921 = vshrl.u32 %v1863, 16
      %v1923 = vrot.slane %v1921, 7
      %v1924 = vshll.u32 %v1863, 16
      %v1926 = vor.u32 %v1923, %v1924
      %v1927 = vrot.slane %v1923, 4
      %vm1944 = vcmask 1043456
      %vm1945 = vmand %vm1944, %vm1818
      %v1946 = vld [vmem:[%s1790] sm:$0xf]
      %v1947 = vsel %vm1945, %v1870, %v1946
      %1948 = vst [vmem:[%s1790] sm:$0xf] %v1947
      %v1949 = vld [vmem:[%s1790 + $0x4] sm:$0x1]
      %v1950 = vsel %vm1793, %v1871, %v1949
      %1951 = vst [vmem:[%s1790 + $0x4] sm:$0x1] %v1950
      %v1952 = vld [vmem:[%s1790 + $0x8] sm:$0xf]
      %v1953 = vsel %vm1945, %v1878, %v1952
      %1954 = vst [vmem:[%s1790 + $0x8] sm:$0xf] %v1953
      %v1955 = vld [vmem:[%s1790 + $0xc] sm:$0x1]
      %v1956 = vsel %vm1793, %v1879, %v1955
      %1957 = vst [vmem:[%s1790 + $0xc] sm:$0x1] %v1956
      %v1958 = vld [vmem:[%s1790 + $0x10] sm:$0xf]
      %v1959 = vsel %vm1945, %v1886, %v1958
      %1960 = vst [vmem:[%s1790 + $0x10] sm:$0xf] %v1959
      %v1961 = vld [vmem:[%s1790 + $0x14] sm:$0x1]
      %v1962 = vsel %vm1793, %v1887, %v1961
      %1963 = vst [vmem:[%s1790 + $0x14] sm:$0x1] %v1962
      %v1964 = vld [vmem:[%s1790 + $0x18] sm:$0xf]
      %v1965 = vsel %vm1945, %v1894, %v1964
      %1966 = vst [vmem:[%s1790 + $0x18] sm:$0xf] %v1965
      %v1967 = vld [vmem:[%s1790 + $0x1c] sm:$0x1]
      %v1968 = vsel %vm1793, %v1895, %v1967
      %1969 = vst [vmem:[%s1790 + $0x1c] sm:$0x1] %v1968
      %v1970 = vld [vmem:[%s1790 + $0x20] sm:$0xf]
      %v1971 = vsel %vm1945, %v1902, %v1970
      %1972 = vst [vmem:[%s1790 + $0x20] sm:$0xf] %v1971
      %v1973 = vld [vmem:[%s1790 + $0x24] sm:$0x1]
      %v1974 = vsel %vm1793, %v1903, %v1973
      %1975 = vst [vmem:[%s1790 + $0x24] sm:$0x1] %v1974
      %v1976 = vld [vmem:[%s1790 + $0x28] sm:$0xf]
      %v1977 = vsel %vm1945, %v1910, %v1976
      %1978 = vst [vmem:[%s1790 + $0x28] sm:$0xf] %v1977
      %v1979 = vld [vmem:[%s1790 + $0x2c] sm:$0x1]
      %v1980 = vsel %vm1793, %v1911, %v1979
      %1981 = vst [vmem:[%s1790 + $0x2c] sm:$0x1] %v1980
      %v1982 = vld [vmem:[%s1790 + $0x30] sm:$0xf]
      %v1983 = vsel %vm1945, %v1918, %v1982
      %1984 = vst [vmem:[%s1790 + $0x30] sm:$0xf] %v1983
      %v1985 = vld [vmem:[%s1790 + $0x34] sm:$0x1]
      %v1986 = vsel %vm1793, %v1919, %v1985
      %1987 = vst [vmem:[%s1790 + $0x34] sm:$0x1] %v1986
      %v1988 = vld [vmem:[%s1790 + $0x38] sm:$0xf]
      %v1989 = vsel %vm1945, %v1926, %v1988
      %1990 = vst [vmem:[%s1790 + $0x38] sm:$0xf] %v1989
      %v1991 = vld [vmem:[%s1790 + $0x3c] sm:$0x1]
      %v1992 = vsel %vm1793, %v1927, %v1991
      %1993 = vst [vmem:[%s1790 + $0x3c] sm:$0x1] %v1992
      %v1994 = vld [vmem:[%s335] sm:$0xf]
      %v1995 = vld [vmem:[%s335 + $0x4] sm:$0xf]
      %v1996 = vld [vmem:[%s335 + $0x8] sm:$0xf]
      %v1997 = vld [vmem:[%s335 + $0xc] sm:$0xf]
      %v1998 = vld [vmem:[%s335 + $0x10] sm:$0xf]
      %v1999 = vld [vmem:[%s335 + $0x14] sm:$0xf]
      %v2000 = vld [vmem:[%s335 + $0x18] sm:$0xf]
      %v2001 = vld [vmem:[%s335 + $0x1c] sm:$0xf]
      %v2002 = vld [vmem:[%s335 + $0x20] sm:$0xf]
      %v2003 = vld [vmem:[%s335 + $0x24] sm:$0xf]
      %v2004 = vld [vmem:[%s335 + $0x28] sm:$0xf]
      %v2005 = vld [vmem:[%s335 + $0x2c] sm:$0xf]
      %v2006 = vld [vmem:[%s335 + $0x30] sm:$0xf]
      %v2007 = vld [vmem:[%s335 + $0x34] sm:$0xf]
      %v2008 = vld [vmem:[%s335 + $0x38] sm:$0xf]
      %v2009 = vld [vmem:[%s335 + $0x3c] sm:$0xf]
      %v2010 = vld [vmem:[%s338] sm:$0x1]
      %v2012 = vlaneseq
      %v2013 = vshrl.u32 %v2012, 7
      %v2014 = vsub.s32 0, %v2013
      %v2015 = vrot.slane %v2010, %v2014
      %v2033 = vunpack.c.l.b16 %v1994
      %v2034 = vunpack.c.l.b16 %v1995
      %v2035 = vunpack.c.l.b16 %v1996
      %v2036 = vunpack.c.l.b16 %v1997
      %v2037 = vunpack.c.l.b16 %v1998
      %v2038 = vunpack.c.l.b16 %v1999
      %v2039 = vunpack.c.l.b16 %v2000
      %v2040 = vunpack.c.l.b16 %v2001
      %v2041 = vunpack.c.l.b16 %v2002
      %v2042 = vunpack.c.l.b16 %v2003
      %v2043 = vunpack.c.l.b16 %v2004
      %v2044 = vunpack.c.l.b16 %v2005
      %v2045 = vunpack.c.l.b16 %v2006
      %v2046 = vunpack.c.l.b16 %v2007
      %v2047 = vunpack.c.l.b16 %v2008
      %v2048 = vunpack.c.l.b16 %v2009
      %v2049 = vpack.c.b16 %v2034, %v2033
      %v2050 = vpack.c.b16 %v2036, %v2035
      %v2051 = vpack.c.b16 %v2038, %v2037
      %v2052 = vpack.c.b16 %v2040, %v2039
      %v2053 = vpack.c.b16 %v2042, %v2041
      %v2054 = vpack.c.b16 %v2044, %v2043
      %v2055 = vpack.c.b16 %v2046, %v2045
      %v2056 = vpack.c.b16 %v2048, %v2047
      %2065 = vmatprep.subr.bf16.mxu0 0
      %2066 = vmatpush1.bf16.msra.mxu0 %v2049
      %2067 = vmatprep.subr.bf16.mxu0 0
      %2068 = vmatpush1.bf16.msra.mxu0 %v2050
      %2069 = vmatprep.subr.bf16.mxu0 0
      %2070 = vmatpush1.bf16.msra.mxu0 %v2051
      %2071 = vmatprep.subr.bf16.mxu0 0
      %2072 = vmatpush1.bf16.msra.mxu0 %v2052
      %2073 = vmatprep.subr.bf16.mxu0 0
      %2074 = vmatpush1.bf16.msra.mxu0 %v2053
      %2075 = vmatprep.subr.bf16.mxu0 0
      %2076 = vmatpush1.bf16.msra.mxu0 %v2054
      %2077 = vmatprep.subr.bf16.mxu0 0
      %2078 = vmatpush1.bf16.msra.mxu0 %v2055
      %2079 = vmatprep.subr.bf16.mxu0 0
      %2080 = vmatpush1.bf16.msra.mxu0 %v2056
      %2081 = vmatprep.subr.bf16.mxu0 0
      %2082 = vmatpush1.bf16.msra.mxu0 0
      %2083 = vmatprep.subr.bf16.mxu0 0
      %2084 = vmatpush1.bf16.msra.mxu0 0
      %2085 = vmatprep.subr.bf16.mxu0 0
      %2086 = vmatpush1.bf16.msra.mxu0 0
      %2087 = vmatprep.subr.bf16.mxu0 0
      %2088 = vmatpush1.bf16.msra.mxu0 0
      %2089 = vmatprep.subr.bf16.mxu0 0
      %2090 = vmatpush1.bf16.msra.mxu0 0
      %2091 = vmatprep.subr.bf16.mxu0 0
      %2092 = vmatpush1.bf16.msra.mxu0 0
      %2093 = vmatprep.subr.bf16.mxu0 0
      %2094 = vmatpush1.bf16.msra.mxu0 0
      %2095 = vmatprep.subr.bf16.mxu0 0
      %2096 = vmatpush1.bf16.msra.mxu0 0
      %2097 = vmatprep.mubr.bf16.mxu0 0
      %2098 = vmatmul.mubr.bf16.gmra.mrb[0].mxu0 %v948
      %v2099 = vpop.f32.mrb[0].mxu0
      %v2100 = vadd.f32 %v2015, %v2099
      %v2101 = vpop.f32.mrb[0].mxu0
      %v2102 = vpop.f32.mrb[0].mxu0
      %v2103 = vadd.f32 %v2015, %v2102
      %v2104 = vpop.f32.mrb[0].mxu0
      %2105 = vmatprep.mubr.bf16.mxu0 0
      %2106 = vmatmul.mubr.bf16.gmra.mrb[0].mxu0 %v957
      %v2107 = vpop.f32.mrb[0].mxu0
      %v2108 = vadd.f32 %v2015, %v2107
      %v2109 = vpop.f32.mrb[0].mxu0
      %v2110 = vpop.f32.mrb[0].mxu0
      %v2111 = vadd.f32 %v2015, %v2110
      %v2112 = vpop.f32.mrb[0].mxu0
      %2113 = vmatprep.mubr.bf16.mxu0 0
      %2114 = vmatmul.mubr.bf16.gmra.mrb[0].mxu0 %v966
      %v2115 = vpop.f32.mrb[0].mxu0
      %v2116 = vadd.f32 %v2015, %v2115
      %v2117 = vpop.f32.mrb[0].mxu0
      %v2118 = vpop.f32.mrb[0].mxu0
      %v2119 = vadd.f32 %v2015, %v2118
      %v2120 = vpop.f32.mrb[0].mxu0
      %2121 = vmatprep.mubr.bf16.mxu0 0
      %2122 = vmatmul.mubr.bf16.gmra.mrb[0].mxu0 %v975
      %v2123 = vpop.f32.mrb[0].mxu0
      %v2124 = vadd.f32 %v2015, %v2123
      %v2125 = vpop.f32.mrb[0].mxu0
      %v2126 = vpop.f32.mrb[0].mxu0
      %v2127 = vadd.f32 %v2015, %v2126
      %v2128 = vpop.f32.mrb[0].mxu0
      %2129 = vdwg.mxu0
      %v2130 = vpack.c.bf16 %v2103, %v2100
      %v2131 = vpack.c.bf16 %v2111, %v2108
      %v2132 = vpack.c.bf16 %v2119, %v2116
      %v2133 = vpack.c.bf16 %v2127, %v2124
      %v2138 = vunpack.c.l.b16 %v2130
      %v2139 = vunpack.c.h.b16 %v2130
      %v2140 = vunpack.c.l.b16 %v2131
      %v2141 = vunpack.c.h.b16 %v2131
      %v2142 = vunpack.c.l.b16 %v2132
      %v2143 = vunpack.c.h.b16 %v2132
      %v2144 = vunpack.c.l.b16 %v2133
      %v2145 = vunpack.c.h.b16 %v2133
      %v2146 = vpack.c.b16 %v2138, %v2138
      %v2147 = vpack.c.b16 %v2139, %v2139
      %v2148 = vpack.c.b16 %v2140, %v2140
      %v2149 = vpack.c.b16 %v2141, %v2141
      %v2150 = vpack.c.b16 %v2142, %v2142
      %v2151 = vpack.c.b16 %v2143, %v2143
      %v2152 = vpack.c.b16 %v2144, %v2144
      %v2153 = vpack.c.b16 %v2145, %v2145
      %2162 = vst [vmem:[%s354] sm:$0xf] %v2146
      %2163 = vst [vmem:[%s354 + $0x4] sm:$0xf] %v2147
      %2164 = vst [vmem:[%s354 + $0x8] sm:$0xf] %v2148
      %2165 = vst [vmem:[%s354 + $0xc] sm:$0xf] %v2149
      %2166 = vst [vmem:[%s354 + $0x10] sm:$0xf] %v2150
      %2167 = vst [vmem:[%s354 + $0x14] sm:$0xf] %v2151
      %2168 = vst [vmem:[%s354 + $0x18] sm:$0xf] %v2152
      %2169 = vst [vmem:[%s354 + $0x1c] sm:$0xf] %v2153
      %p2170 = scmp.lt.s32.totalorder %s23, 1
      %s2171 = scalar_select %p2170, %s23, 1
      %p2172 = scmp.lt.s32.totalorder %s22, 0
      %s2173 = scalar_select %p2172, %s22, 0
      %s2174 = smul.addr %s2171, 20
      %s2175 = sadd.s32 %s2173, %s2174
      %s2176 = smul.addr %s2175, 4
      %s2177 = scalar_lea.vmem %s5, %s2176
      %p2178 = scmp.lt.s32.totalorder %s23, 1
      %s2179 = scalar_select %p2178, %s23, 1
      %p2180 = scmp.lt.s32.totalorder %s22, 0
      %s2181 = scalar_select %p2180, %s22, 0
      %s2182 = smul.addr %s2179, 8
      %s2183 = sadd.s32 %s2181, %s2182
      %s2184 = smul.addr %s2183, 4
      %s2185 = scalar_lea.vmem %s6, %s2184
      // Predicated region
      $region41: #{basic_block_forward.2} parent=39 // pred_check
        %p2186 = pneg %p180
      $region42: #{basic_block_forward.2} parent=39 // pred_check_branch
        %2188 = sbr.rel (%p2186) target = $region44
      $region43: #{basic_block_forward.2} parent=39 // pred_region
        _
      $region44: #{basic_block_forward.2} parent=39 // pred_fallthru
        _
      // Predicated region
      $region45: #{basic_block_forward.2} parent=39 // pred_check
        %p2189 = pneg %p208
      $region46: #{basic_block_forward.2} parent=39 // pred_check_branch
        %2191 = sbr.rel (%p2189) target = $region48
      $region47: #{basic_block_forward.2} parent=39 // pred_region
        _
      $region48: #{basic_block_forward.2} parent=39 // pred_fallthru
        _
    $region40: #{basic_block_forward.2} parent=5 // pred_fallthru
      _
    %p2192 = scmp.le.s32.totalorder 2, %s13
    // Predicated region
    $region49: #{basic_block_forward.2} parent=5 // pred_check
      %p2193 = pneg %p2192
    $region50: #{basic_block_forward.2} parent=5 // pred_check_branch
      %2195 = sbr.rel (%p2193) target = $region52
    $region51: #{basic_block_forward.2} parent=5 // pred_region
      %s2196 = ssub.s32 %s13, 2
      // Predicated region
      $region53: #{basic_block_forward.2} parent=51 // pred_check
        %p2197 = pneg %p186
      $region54: #{basic_block_forward.2} parent=51 // pred_check_branch
        %2199 = sbr.rel (%p2197) target = $region56
      $region55: #{basic_block_forward.2} parent=51 // pred_region
        %p2200 = scmp.lt.s32.totalorder %s25, 1
        %s2201 = scalar_select %p2200, %s25, 1
        %p2202 = scmp.lt.s32.totalorder %s24, 0
        %s2203 = scalar_select %p2202, %s24, 0
        %s2204 = smul.addr %s2201, 20
        %s2205 = sadd.s32 %s2203, %s2204
        %s2206 = smul.addr %s2205, 4
        %s2207 = scalar_lea.vmem %s5, %s2206
      $region56: #{basic_block_forward.2} parent=51 // pred_fallthru
        _
      // Predicated region
      $region57: #{basic_block_forward.2} parent=51 // pred_check
        %p2208 = pneg %p214
      $region58: #{basic_block_forward.2} parent=51 // pred_check_branch
        %2210 = sbr.rel (%p2208) target = $region60
      $region59: #{basic_block_forward.2} parent=51 // pred_region
        %p2211 = scmp.lt.s32.totalorder %s25, 1
        %s2212 = scalar_select %p2211, %s25, 1
        %p2213 = scmp.lt.s32.totalorder %s24, 0
        %s2214 = scalar_select %p2213, %s24, 0
        %s2215 = smul.addr %s2212, 8
        %s2216 = sadd.s32 %s2214, %s2215
        %s2217 = smul.addr %s2216, 4
        %s2218 = scalar_lea.vmem %s6, %s2217
      $region60: #{basic_block_forward.2} parent=51 // pred_fallthru
        _
    $region52: #{basic_block_forward.2} parent=5 // pred_fallthru
      _
  $region6: #{basic_block_forward.2} parent=0 // loop_footer
    %s17 = sadd.s32 1, %s13
  $region7: #{basic_block_forward.2} parent=0 // loop_footer_branch
    %12 = sbr.rel target = $region3
  $region8: #{basic_block_forward.2} parent=0 // loop_exit
    _

</llo_original>
